<compile_context>
chip_gen: v7x
topology: tpu7x:2x2x1
jax: 0.10.0
libtpu: 0.0.40
codegen_flags: <defaults>
</compile_context>

<pallas_src>
import functools
import math

import jax
import jax.numpy as jnp
from jax.experimental import pallas as pl
from jax.experimental.pallas import tpu as pltpu


def _round_up(x, m):
    return ((x + m - 1) // m) * m


# ----------------------------- Pallas kernels ------------------------------ #

def _conv3x3_kernel(x_ref, w_ref, b_ref, *out_refs, tap_starts, m_out,
                    want_linear, want_relu):
    """Im2col-free 3x3 'same' conv for one image.

    x_ref : (m_rows, Cin)  flattened halo-padded image (row-major over the
            padded (H+6, W+2) grid); true Cin in the lane dim.
    w_ref : (9, Cin, Cout) per-tap weights (VMEM resident across the grid).
    b_ref : (1, Cout)      bias.
    out   : (m_out, Cout)  padded-grid output; up to two refs (linear, relu).

    Each 3x3 tap is a constant row-shift of the flattened padded image, so
    the conv is 9 accumulated shifted matmuls -- no patches matrix ever
    touches HBM.  bias + ReLU ride in the epilogue of the same MXU pass.
    """
    acc = jnp.dot(x_ref[pl.ds(tap_starts[0], m_out), :], w_ref[0],
                  preferred_element_type=jnp.float32)
    for t in range(1, len(tap_starts)):
        acc = acc + jnp.dot(x_ref[pl.ds(tap_starts[t], m_out), :], w_ref[t],
                            preferred_element_type=jnp.float32)
    acc = acc + b_ref[...]
    idx = 0
    if want_linear:
        out_refs[idx][...] = acc.astype(out_refs[idx].dtype)
        idx += 1
    if want_relu:
        out_refs[idx][...] = jnp.maximum(acc, 0.0).astype(out_refs[idx].dtype)


def _relu_kernel(x_ref, o_ref):
    o_ref[...] = jnp.maximum(x_ref[...], 0.0)


# ----------------------------- JAX wrappers -------------------------------- #

def relu_pallas(x):
    """Standalone tiled ReLU (fallback only -- conv+ReLU pairs are fused in
    the conv epilogue and never reach this path).  The tensor is viewed as
    (rows, C) with the existing channel-last axis as the lane dim, so there
    is no flatten/pad relayout round-trip."""
    shape = x.shape
    C = shape[-1]
    rows = math.prod(shape[:-1])
    x2 = x.reshape(rows, C)
    tr = min(2048, _round_up(rows, 8))
    R = _round_up(rows, tr)
    if R != rows:
        x2 = jnp.pad(x2, ((0, R - rows), (0, 0)))
    out = pl.pallas_call(
        _relu_kernel,
        out_shape=jax.ShapeDtypeStruct((R, C), x2.dtype),
        grid=(R // tr,),
        in_specs=[pl.BlockSpec((tr, C), lambda i: (i, 0))],
        out_specs=pl.BlockSpec((tr, C), lambda i: (i, 0)),
        compiler_params=pltpu.CompilerParams(dimension_semantics=("parallel",)),
    )(x2)
    return out[:rows].reshape(shape)


# ----------------------------- "Module" shims ------------------------------ #

class Conv2dModule:
    """3x3 'same' conv, stride 1.  PyTorch OIHW weights are permuted to
    per-tap (9, Cin, Cout) once at construction; activations are NHWC.

    The kernel streams one halo-padded image per grid step (grid over N,
    "parallel" so both v7x TensorCores get work) and performs the im2col
    implicitly via 9 shifted matmuls in VMEM, so HBM sees only the
    (H+6)*(W+2)*Cin input rows and the exact-Cout output."""

    def __init__(self, weight, bias, *, use_bf16=False):
        Cout, Cin, kh, kw = weight.shape
        assert (kh, kw) == (3, 3), "only 3x3 'same' stride-1 convs implemented"
        self.Cin, self.Cout = Cin, Cout
        # bf16 inputs halve the dominant DMA bytes and use the native bf16 MXU
        # on v6e/v7x, but exceed this script's 1e-4 checks -> off by default.
        self.use_bf16 = use_bf16
        w_dt = jnp.bfloat16 if use_bf16 else jnp.float32
        # OIHW -> (kh, kw, Cin, Cout) -> (9, Cin, Cout): tap-major order
        # matching the kernel's (di, dj) loop.
        self.w_taps = jnp.asarray(weight).transpose(2, 3, 1, 0).reshape(
            9, Cin, Cout).astype(w_dt)
        self.bias = jnp.asarray(bias).reshape(1, Cout).astype(jnp.float32)

    def __call__(self, x_nhwc, *, fuse_relu=False, want_linear=True):
        N, H, W, C = x_nhwc.shape
        assert C == self.Cin
        Wp = W + 2                      # width of the zero-padded grid
        m_out = (H + 2) * Wp            # padded-grid rows the kernel emits
        m_rows = (H + 6) * Wp           # input rows incl. flat halo (3-row H pad)

        # Single pad: 3 halo rows top/bottom (covers the +/-(W+3) flat tap
        # shifts), 1 SAME-pad column left/right; then a free contiguous
        # reshape to the flat (rows, Cin) form the kernel consumes.
        xp = jnp.pad(x_nhwc, ((0, 0), (3, 3), (1, 1), (0, 0)))
        xf = xp.reshape(N, m_rows, C)
        if self.use_bf16:
            xf = xf.astype(jnp.bfloat16)

        # Flat start row of tap (di, dj): emitted padded grid starts at flat
        # row 2*Wp of the input; tap offset is (di-1)*Wp + (dj-1).
        tap_starts = tuple(2 * Wp + (di - 1) * Wp + (dj - 1)
                           for di in range(3) for dj in range(3))

        want_relu = fuse_relu
        n_out = int(want_linear) + int(want_relu)
        assert n_out >= 1

        kernel = functools.partial(
            _conv3x3_kernel, tap_starts=tap_starts, m_out=m_out,
            want_linear=want_linear, want_relu=want_relu)

        out_shape = tuple(
            jax.ShapeDtypeStruct((N, m_out, self.Cout), jnp.float32)
            for _ in range(n_out))
        out_specs = tuple(
            pl.BlockSpec((None, m_out, self.Cout), lambda n: (n, 0, 0))
            for _ in range(n_out))

        elt = 2 if self.use_bf16 else 4
        cost = pl.CostEstimate(
            flops=2 * N * m_out * 9 * self.Cin * self.Cout,
            transcendentals=0,
            bytes_accessed=(elt * (N * m_rows * self.Cin
                                   + 9 * self.Cin * self.Cout)
                            + 4 * self.Cout
                            + 4 * n_out * N * m_out * self.Cout),
        )

        res = pl.pallas_call(
            kernel,
            out_shape=out_shape,
            grid=(N,),
            in_specs=[
                # one halo-padded image per step (streamed, double-buffered)
                pl.BlockSpec((None, m_rows, self.Cin), lambda n: (n, 0, 0)),
                # per-tap weights + bias stay resident across the grid
                pl.BlockSpec((9, self.Cin, self.Cout), lambda n: (0, 0, 0)),
                pl.BlockSpec((1, self.Cout), lambda n: (0, 0)),
            ],
            out_specs=out_specs,
            compiler_params=pltpu.CompilerParams(
                dimension_semantics=("parallel",)),
            cost_estimate=cost,
        )(xf, self.w_taps, self.bias)

        if not isinstance(res, (tuple, list)):
            res = (res,)

        def crop(o):
            # padded-grid rows -> (N, H, W, Cout); drop the SAME-pad ring.
            return o.reshape(N, H + 2, Wp, self.Cout)[:, 1:-1, 1:-1, :]

        outs = [crop(o) for o in res]
        if fuse_relu:
            y_lin = outs[0] if want_linear else None
            return y_lin, outs[-1]
        return outs[0]


class ReLUModule:
    def __call__(self, x):
        return relu_pallas(x)


class FeatureExtractor:
    """Mirrors the PyTorch FeatureExtractor forward: apply the submodule's
    named children in order, collect activations whose name is in
    `extracted_layers`, and return them plus the final output.

    Internally it runs channels-last and fuses conv+relu pairs into a single
    pallas_call (emitting the pre-ReLU activation as a second kernel output
    only when that layer name is actually extracted), which preserves the
    original per-layer outputs exactly."""

    def __init__(self, submodule, extracted_layers):
        self.submodule = submodule                # ordered dict name -> module
        self.extracted_layers = extracted_layers  # (reference code forgot this)

    def forward(self, x_nchw):
        x = jnp.transpose(x_nchw, (0, 2, 3, 1))   # NCHW -> NHWC once at entry
        items = list(self.submodule.items())
        outputs = []
        i = 0
        while i < len(items):
            name, module = items[i]
            nxt_name, nxt_mod = (items[i + 1] if i + 1 < len(items)
                                 else (None, None))
            if isinstance(module, Conv2dModule) and isinstance(nxt_mod, ReLUModule):
                want_linear = name in self.extracted_layers
                y_lin, y_relu = module(x, fuse_relu=True, want_linear=want_linear)
                if want_linear:
                    outputs.append(y_lin)
                if nxt_name in self.extracted_layers:
                    outputs.append(y_relu)
                x = y_relu
                i += 2
            else:
                x = module(x)
                if name in self.extracted_layers:
                    outputs.append(x)
                i += 1
        outputs = outputs + [x]
        # NHWC -> NCHW only at the return boundary (matches PyTorch layout).
        return [jnp.transpose(o, (0, 3, 1, 2)) for o in outputs]


# --------------------------------- main ------------------------------------ #

def _ref_conv(x, w, b):
    y = jax.lax.conv_general_dilated(
        x, w, window_strides=(1, 1), padding="SAME",
        dimension_numbers=("NCHW", "OIHW", "NCHW"))
    return y + b[None, :, None, None]


if __name__ == "__main__":
    key = jax.random.PRNGKey(0)
    k_x, k_w1, k_b1, k_w2, k_b2 = jax.random.split(key, 5)

    N, Cin, H, W = 2, 4, 16, 16
    C1, C2 = 8, 16

    x = jax.random.normal(k_x, (N, Cin, H, W), jnp.float32)
    w1 = 0.1 * jax.random.normal(k_w1, (C1, Cin, 3, 3), jnp.float32)
    b1 = 0.1 * jax.random.normal(k_b1, (C1,), jnp.float32)
    w2 = 0.1 * jax.random.normal(k_w2, (C2, C1, 3, 3), jnp.float32)
    b2 = 0.1 * jax.random.normal(k_b2, (C2,), jnp.float32)

    submodule = {
        "conv1": Conv2dModule(w1, b1),
        "relu1": ReLUModule(),
        "conv2": Conv2dModule(w2, b2),
        "relu2": ReLUModule(),
    }
    extractor = FeatureExtractor(submodule, extracted_layers=["conv1", "relu1"])

    outs = extractor.forward(x)
    outs = jax.block_until_ready(outs)

    # Cross-check against a plain-JAX reference forward pass.
    r = _ref_conv(x, w1, b1)
    ref_conv1 = r
    r = jnp.maximum(r, 0.0)
    ref_relu1 = r
    r = _ref_conv(r, w2, b2)
    ref_final = jnp.maximum(r, 0.0)

    assert len(outs) == 3
    assert outs[0].shape == (N, C1, H, W)
    assert outs[1].shape == (N, C1, H, W)
    assert outs[2].shape == (N, C2, H, W)
    assert jnp.allclose(outs[0], ref_conv1, atol=1e-4, rtol=1e-4)
    assert jnp.allclose(outs[1], ref_relu1, atol=1e-4, rtol=1e-4)
    assert jnp.allclose(outs[2], ref_final, atol=1e-4, rtol=1e-4)

    print("KERNEL_OK")
</pallas_src>

<mosaic_0001>
module attributes {stable_mosaic.version = 11 : i64} {
  func.func @_conv3x3_kernel(%arg0: i32, %arg1: memref<1x396x4xf32, #tpu.memory_space<vmem>>, %arg2: memref<9x4x8xf32, #tpu.memory_space<vmem>>, %arg3: memref<1x8xf32, #tpu.memory_space<vmem>>, %arg4: memref<1x324x8xf32, #tpu.memory_space<vmem>>, %arg5: memref<1x324x8xf32, #tpu.memory_space<vmem>>) attributes {dimension_semantics = [#tpu.dimension_semantics<parallel>], iteration_bounds = array<i64: 2>, scalar_prefetch = 0 : i64, scratch_operands = 0 : i64, tpu.core_type = #tpu.core_type<tc>, window_params = [{transform_indices = @transform_0, window_bounds = array<i64: 1, 396, 4>}, {pipeline_mode = #tpu.pipeline_mode<synchronous>, transform_indices = @transform_1, window_bounds = array<i64: 9, 4, 8>}, {pipeline_mode = #tpu.pipeline_mode<synchronous>, transform_indices = @transform_2, window_bounds = array<i64: 1, 8>}, {transform_indices = @transform_3, window_bounds = array<i64: 1, 324, 8>}, {transform_indices = @transform_4, window_bounds = array<i64: 1, 324, 8>}]} {
    %c0 = arith.constant 0 : index
    %c17 = arith.constant 17 : index
    %c0_0 = arith.constant 0 : index
    %0 = vector.load %arg1[%c0, %c17, %c0_0] : memref<1x396x4xf32, #tpu.memory_space<vmem>>, vector<1x324x4xf32>
    %1 = vector.shape_cast %0 : vector<1x324x4xf32> to vector<324x4xf32>
    %c0_1 = arith.constant 0 : index
    %c0_2 = arith.constant 0 : index
    %c0_3 = arith.constant 0 : index
    %2 = vector.load %arg2[%c0_1, %c0_2, %c0_3] : memref<9x4x8xf32, #tpu.memory_space<vmem>>, vector<1x4x8xf32>
    %3 = vector.shape_cast %2 : vector<1x4x8xf32> to vector<4x8xf32>
    %cst = arith.constant dense<0.000000e+00> : vector<324x8xf32>
    %4 = tpu.matmul %1, %3, %cst {dimension_numbers = #tpu.dot_dimension_numbers<[1], [0], [0], [1], [0, 0, 1, 1], [], []>} : vector<324x4xf32>, vector<4x8xf32>, vector<324x8xf32> -> vector<324x8xf32>
    %c0_4 = arith.constant 0 : index
    %c18 = arith.constant 18 : index
    %c0_5 = arith.constant 0 : index
    %5 = vector.load %arg1[%c0_4, %c18, %c0_5] : memref<1x396x4xf32, #tpu.memory_space<vmem>>, vector<1x324x4xf32>
    %6 = vector.shape_cast %5 : vector<1x324x4xf32> to vector<324x4xf32>
    %c1 = arith.constant 1 : index
    %c0_6 = arith.constant 0 : index
    %c0_7 = arith.constant 0 : index
    %7 = vector.load %arg2[%c1, %c0_6, %c0_7] : memref<9x4x8xf32, #tpu.memory_space<vmem>>, vector<1x4x8xf32>
    %8 = vector.shape_cast %7 : vector<1x4x8xf32> to vector<4x8xf32>
    %cst_8 = arith.constant dense<0.000000e+00> : vector<324x8xf32>
    %9 = tpu.matmul %6, %8, %cst_8 {dimension_numbers = #tpu.dot_dimension_numbers<[1], [0], [0], [1], [0, 0, 1, 1], [], []>} : vector<324x4xf32>, vector<4x8xf32>, vector<324x8xf32> -> vector<324x8xf32>
    %10 = arith.addf %4, %9 : vector<324x8xf32>
    %c0_9 = arith.constant 0 : index
    %c19 = arith.constant 19 : index
    %c0_10 = arith.constant 0 : index
    %11 = vector.load %arg1[%c0_9, %c19, %c0_10] : memref<1x396x4xf32, #tpu.memory_space<vmem>>, vector<1x324x4xf32>
    %12 = vector.shape_cast %11 : vector<1x324x4xf32> to vector<324x4xf32>
    %c2 = arith.constant 2 : index
    %c0_11 = arith.constant 0 : index
    %c0_12 = arith.constant 0 : index
    %13 = vector.load %arg2[%c2, %c0_11, %c0_12] : memref<9x4x8xf32, #tpu.memory_space<vmem>>, vector<1x4x8xf32>
    %14 = vector.shape_cast %13 : vector<1x4x8xf32> to vector<4x8xf32>
    %cst_13 = arith.constant dense<0.000000e+00> : vector<324x8xf32>
    %15 = tpu.matmul %12, %14, %cst_13 {dimension_numbers = #tpu.dot_dimension_numbers<[1], [0], [0], [1], [0, 0, 1, 1], [], []>} : vector<324x4xf32>, vector<4x8xf32>, vector<324x8xf32> -> vector<324x8xf32>
    %16 = arith.addf %10, %15 : vector<324x8xf32>
    %c0_14 = arith.constant 0 : index
    %c35 = arith.constant 35 : index
    %c0_15 = arith.constant 0 : index
    %17 = vector.load %arg1[%c0_14, %c35, %c0_15] : memref<1x396x4xf32, #tpu.memory_space<vmem>>, vector<1x324x4xf32>
    %18 = vector.shape_cast %17 : vector<1x324x4xf32> to vector<324x4xf32>
    %c3 = arith.constant 3 : index
    %c0_16 = arith.constant 0 : index
    %c0_17 = arith.constant 0 : index
    %19 = vector.load %arg2[%c3, %c0_16, %c0_17] : memref<9x4x8xf32, #tpu.memory_space<vmem>>, vector<1x4x8xf32>
    %20 = vector.shape_cast %19 : vector<1x4x8xf32> to vector<4x8xf32>
    %cst_18 = arith.constant dense<0.000000e+00> : vector<324x8xf32>
    %21 = tpu.matmul %18, %20, %cst_18 {dimension_numbers = #tpu.dot_dimension_numbers<[1], [0], [0], [1], [0, 0, 1, 1], [], []>} : vector<324x4xf32>, vector<4x8xf32>, vector<324x8xf32> -> vector<324x8xf32>
    %22 = arith.addf %16, %21 : vector<324x8xf32>
    %c0_19 = arith.constant 0 : index
    %c36 = arith.constant 36 : index
    %c0_20 = arith.constant 0 : index
    %23 = vector.load %arg1[%c0_19, %c36, %c0_20] : memref<1x396x4xf32, #tpu.memory_space<vmem>>, vector<1x324x4xf32>
    %24 = vector.shape_cast %23 : vector<1x324x4xf32> to vector<324x4xf32>
    %c4 = arith.constant 4 : index
    %c0_21 = arith.constant 0 : index
    %c0_22 = arith.constant 0 : index
    %25 = vector.load %arg2[%c4, %c0_21, %c0_22] : memref<9x4x8xf32, #tpu.memory_space<vmem>>, vector<1x4x8xf32>
    %26 = vector.shape_cast %25 : vector<1x4x8xf32> to vector<4x8xf32>
    %cst_23 = arith.constant dense<0.000000e+00> : vector<324x8xf32>
    %27 = tpu.matmul %24, %26, %cst_23 {dimension_numbers = #tpu.dot_dimension_numbers<[1], [0], [0], [1], [0, 0, 1, 1], [], []>} : vector<324x4xf32>, vector<4x8xf32>, vector<324x8xf32> -> vector<324x8xf32>
    %28 = arith.addf %22, %27 : vector<324x8xf32>
    %c0_24 = arith.constant 0 : index
    %c37 = arith.constant 37 : index
    %c0_25 = arith.constant 0 : index
    %29 = vector.load %arg1[%c0_24, %c37, %c0_25] : memref<1x396x4xf32, #tpu.memory_space<vmem>>, vector<1x324x4xf32>
    %30 = vector.shape_cast %29 : vector<1x324x4xf32> to vector<324x4xf32>
    %c5 = arith.constant 5 : index
    %c0_26 = arith.constant 0 : index
    %c0_27 = arith.constant 0 : index
    %31 = vector.load %arg2[%c5, %c0_26, %c0_27] : memref<9x4x8xf32, #tpu.memory_space<vmem>>, vector<1x4x8xf32>
    %32 = vector.shape_cast %31 : vector<1x4x8xf32> to vector<4x8xf32>
    %cst_28 = arith.constant dense<0.000000e+00> : vector<324x8xf32>
    %33 = tpu.matmul %30, %32, %cst_28 {dimension_numbers = #tpu.dot_dimension_numbers<[1], [0], [0], [1], [0, 0, 1, 1], [], []>} : vector<324x4xf32>, vector<4x8xf32>, vector<324x8xf32> -> vector<324x8xf32>
    %34 = arith.addf %28, %33 : vector<324x8xf32>
    %c0_29 = arith.constant 0 : index
    %c53 = arith.constant 53 : index
    %c0_30 = arith.constant 0 : index
    %35 = vector.load %arg1[%c0_29, %c53, %c0_30] : memref<1x396x4xf32, #tpu.memory_space<vmem>>, vector<1x324x4xf32>
    %36 = vector.shape_cast %35 : vector<1x324x4xf32> to vector<324x4xf32>
    %c6 = arith.constant 6 : index
    %c0_31 = arith.constant 0 : index
    %c0_32 = arith.constant 0 : index
    %37 = vector.load %arg2[%c6, %c0_31, %c0_32] : memref<9x4x8xf32, #tpu.memory_space<vmem>>, vector<1x4x8xf32>
    %38 = vector.shape_cast %37 : vector<1x4x8xf32> to vector<4x8xf32>
    %cst_33 = arith.constant dense<0.000000e+00> : vector<324x8xf32>
    %39 = tpu.matmul %36, %38, %cst_33 {dimension_numbers = #tpu.dot_dimension_numbers<[1], [0], [0], [1], [0, 0, 1, 1], [], []>} : vector<324x4xf32>, vector<4x8xf32>, vector<324x8xf32> -> vector<324x8xf32>
    %40 = arith.addf %34, %39 : vector<324x8xf32>
    %c0_34 = arith.constant 0 : index
    %c54 = arith.constant 54 : index
    %c0_35 = arith.constant 0 : index
    %41 = vector.load %arg1[%c0_34, %c54, %c0_35] : memref<1x396x4xf32, #tpu.memory_space<vmem>>, vector<1x324x4xf32>
    %42 = vector.shape_cast %41 : vector<1x324x4xf32> to vector<324x4xf32>
    %c7 = arith.constant 7 : index
    %c0_36 = arith.constant 0 : index
    %c0_37 = arith.constant 0 : index
    %43 = vector.load %arg2[%c7, %c0_36, %c0_37] : memref<9x4x8xf32, #tpu.memory_space<vmem>>, vector<1x4x8xf32>
    %44 = vector.shape_cast %43 : vector<1x4x8xf32> to vector<4x8xf32>
    %cst_38 = arith.constant dense<0.000000e+00> : vector<324x8xf32>
    %45 = tpu.matmul %42, %44, %cst_38 {dimension_numbers = #tpu.dot_dimension_numbers<[1], [0], [0], [1], [0, 0, 1, 1], [], []>} : vector<324x4xf32>, vector<4x8xf32>, vector<324x8xf32> -> vector<324x8xf32>
    %46 = arith.addf %40, %45 : vector<324x8xf32>
    %c0_39 = arith.constant 0 : index
    %c55 = arith.constant 55 : index
    %c0_40 = arith.constant 0 : index
    %47 = vector.load %arg1[%c0_39, %c55, %c0_40] : memref<1x396x4xf32, #tpu.memory_space<vmem>>, vector<1x324x4xf32>
    %48 = vector.shape_cast %47 : vector<1x324x4xf32> to vector<324x4xf32>
    %c8 = arith.constant 8 : index
    %c0_41 = arith.constant 0 : index
    %c0_42 = arith.constant 0 : index
    %49 = vector.load %arg2[%c8, %c0_41, %c0_42] : memref<9x4x8xf32, #tpu.memory_space<vmem>>, vector<1x4x8xf32>
    %50 = vector.shape_cast %49 : vector<1x4x8xf32> to vector<4x8xf32>
    %cst_43 = arith.constant dense<0.000000e+00> : vector<324x8xf32>
    %51 = tpu.matmul %48, %50, %cst_43 {dimension_numbers = #tpu.dot_dimension_numbers<[1], [0], [0], [1], [0, 0, 1, 1], [], []>} : vector<324x4xf32>, vector<4x8xf32>, vector<324x8xf32> -> vector<324x8xf32>
    %52 = arith.addf %46, %51 : vector<324x8xf32>
    %c0_44 = arith.constant 0 : index
    %c0_45 = arith.constant 0 : index
    %53 = vector.load %arg3[%c0_44, %c0_45] : memref<1x8xf32, #tpu.memory_space<vmem>>, vector<1x8xf32>
    %54 = vector.broadcast %53 : vector<1x8xf32> to vector<324x8xf32>
    %55 = arith.addf %52, %54 : vector<324x8xf32>
    %c0_46 = arith.constant 0 : index
    %c0_47 = arith.constant 0 : index
    %c0_48 = arith.constant 0 : index
    %56 = vector.load %arg4[%c0_46, %c0_47, %c0_48] : memref<1x324x8xf32, #tpu.memory_space<vmem>>, vector<1x324x8xf32>
    %57 = vector.shape_cast %56 : vector<1x324x8xf32> to vector<324x8xf32>
    %58 = vector.shape_cast %55 : vector<324x8xf32> to vector<1x324x8xf32>
    tpu.vector_store %arg4[%c0_46, %c0_47, %c0_48], %58 {strides = array<i32>} : memref<1x324x8xf32, #tpu.memory_space<vmem>>, vector<1x324x8xf32>,
    %cst_49 = arith.constant 0.000000e+00 : f32
    %59 = vector.broadcast %cst_49 : f32 to vector<324x8xf32>
    %60 = arith.maximumf %55, %59 : vector<324x8xf32>
    %c0_50 = arith.constant 0 : index
    %c0_51 = arith.constant 0 : index
    %c0_52 = arith.constant 0 : index
    %61 = vector.load %arg5[%c0_50, %c0_51, %c0_52] : memref<1x324x8xf32, #tpu.memory_space<vmem>>, vector<1x324x8xf32>
    %62 = vector.shape_cast %61 : vector<1x324x8xf32> to vector<324x8xf32>
    %63 = vector.shape_cast %60 : vector<324x8xf32> to vector<1x324x8xf32>
    tpu.vector_store %arg5[%c0_50, %c0_51, %c0_52], %63 {strides = array<i32>} : memref<1x324x8xf32, #tpu.memory_space<vmem>>, vector<1x324x8xf32>,
    return
  }
  func.func @transform_0(%arg0: i32) -> (i32, i32, i32) {
    %c0_i32 = arith.constant 0 : i32
    %c0_i32_0 = arith.constant 0 : i32
    %c0_i32_1 = arith.constant 0 : i32
    return %arg0, %c0_i32, %c0_i32_0 : i32, i32, i32
  }
  func.func @transform_1(%arg0: i32) -> (i32, i32, i32) {
    %c0_i32 = arith.constant 0 : i32
    %c0_i32_0 = arith.constant 0 : i32
    %c0_i32_1 = arith.constant 0 : i32
    %c0_i32_2 = arith.constant 0 : i32
    return %c0_i32, %c0_i32_0, %c0_i32_1 : i32, i32, i32
  }
  func.func @transform_2(%arg0: i32) -> (i32, i32) {
    %c0_i32 = arith.constant 0 : i32
    %c0_i32_0 = arith.constant 0 : i32
    %c0_i32_1 = arith.constant 0 : i32
    return %c0_i32, %c0_i32_0 : i32, i32
  }
  func.func @transform_3(%arg0: i32) -> (i32, i32, i32) {
    %c0_i32 = arith.constant 0 : i32
    %c0_i32_0 = arith.constant 0 : i32
    %c0_i32_1 = arith.constant 0 : i32
    return %arg0, %c0_i32, %c0_i32_0 : i32, i32, i32
  }
  func.func @transform_4(%arg0: i32) -> (i32, i32, i32) {
    %c0_i32 = arith.constant 0 : i32
    %c0_i32_0 = arith.constant 0 : i32
    %c0_i32_1 = arith.constant 0 : i32
    return %arg0, %c0_i32, %c0_i32_0 : i32, i32, i32
  }
}

</mosaic_0001>

<llo_original>
// kernel: tpu_custom_call.1
$region0: #{tpu_custom_call.1}
  #allocation0 [shape = 'u32[]', space=smem, size = 0x4, offset = 0x4, fixed_abs, tag = 'smem constant byte address 0x4 - core index']
  #allocation1 [shape = 'u32[144,128]{1,0:T(1,128)}', space=vmem, size = 0x12000, scoped, tag = 'internal scratch']
  %s0 = inlined_call_operand.vmem [shape: f32[2,396,4], index: 0, kind: input, shape index: {}]
  %s1 = inlined_call_operand.vmem [shape: f32[9,4,8], index: 1, kind: input, shape index: {}]
  %s2 = inlined_call_operand.vmem [shape: f32[1,8], index: 2, kind: input, shape index: {}]
  %s3 = inlined_call_operand.vmem [shape: f32[2,324,8], index: 3, kind: output, shape index: {0}]
  %s4 = inlined_call_operand.vmem [shape: f32[2,324,8], index: 4, kind: output, shape index: {1}]
  %5 = xla_tuple %s3, %s4
  %s6 = sld [smem:[#allocation0]]
  $region53: #{tpu_custom_call.1} parent=0
    _
  %s8 = ssub.s32 1, %s6
  %s9 = scalar_select 0, %s8, %s6
  loop: start=0, step=1, limit=4
  $region2: #{tpu_custom_call.1} parent=0 // loop_pre_header
    _
  $region3: #{tpu_custom_call.1} parent=0 // loop_header
    %s11 = sphi 0, %s15
    %p12 = scmp.ge.s32.totalorder %s11, 4
    %s21 = sphi 0, %s23
    %s24 = sphi 0, %s21
    %s25 = sphi 0, %s24
    %s41 = sphi 0, %s25
    %s45 = sphi 0, %s45
    %s47 = sphi 0, %s45
    %s48 = sphi 0, %s47
    %s62 = sphi 0, %s48
    %s66 = sphi 0, %s66
    %s68 = sphi 0, %s66
    %s69 = sphi 0, %s68
    %s83 = sphi 0, %s69
    %s89 = sphi 0, %s91
    %s92 = sphi 0, %s89
    %s93 = sphi 0, %s92
    %s109 = sphi 0, %s93
    %s115 = sphi 0, %s117
    %s118 = sphi 0, %s115
    %s119 = sphi 0, %s118
    %s135 = sphi 0, %s119
  $region4: #{tpu_custom_call.1} parent=0 // loop_header_branch
    %14 = sbr.rel (%p12) target = $region8
  $region5: #{tpu_custom_call.1} parent=0 // loop_body
    %s16 = ssub.s32 %s11, 1
    %s17 = ssub.s32 %s11, 2
    %s18 = sadd.s32 %s11, 1
    %s19 = ssub.s32 %s11, %s18
    %p20 = scmp.eq.s32.totalorder %s19, 0
    %s22 = sadd.s32 %s21, 1
    %s23 = scalar_select %p20, %s21, %s22
    %p26 = pneg %p20
    %p27 = scmp.eq.s32.totalorder %s11, 1
    %p28 = por %p26, %p27
    %p29 = scmp.ne.s32.totalorder %s21, %s24
    %p30 = scmp.eq.s32.totalorder %s11, 0
    %p31 = por %p29, %p30
    %p32 = scmp.ne.s32.totalorder %s21, %s24
    %p33 = scmp.eq.s32.totalorder %s16, 1
    %p34 = por %p32, %p33
    %p35 = scmp.ne.s32.totalorder %s24, %s25
    %p36 = scmp.eq.s32.totalorder %s16, 0
    %p37 = por %p35, %p36
    %p38 = scmp.ne.s32.totalorder %s24, %s25
    %p39 = scmp.eq.s32.totalorder %s17, 1
    %p40 = por %p38, %p39
    %p42 = scmp.ne.s32.totalorder %s25, %s41
    %p43 = scmp.eq.s32.totalorder %s17, 0
    %p44 = por %p42, %p43
    %s46 = sadd.s32 %s45, 1
    %p49 = scmp.eq.s32.totalorder %s11, 1
    %p50 = scmp.ne.s32.totalorder %s45, %s47
    %p51 = scmp.eq.s32.totalorder %s11, 0
    %p52 = por %p50, %p51
    %p53 = scmp.ne.s32.totalorder %s45, %s47
    %p54 = scmp.eq.s32.totalorder %s16, 1
    %p55 = por %p53, %p54
    %p56 = scmp.ne.s32.totalorder %s47, %s48
    %p57 = scmp.eq.s32.totalorder %s16, 0
    %p58 = por %p56, %p57
    %p59 = scmp.ne.s32.totalorder %s47, %s48
    %p60 = scmp.eq.s32.totalorder %s17, 1
    %p61 = por %p59, %p60
    %p63 = scmp.ne.s32.totalorder %s48, %s62
    %p64 = scmp.eq.s32.totalorder %s17, 0
    %p65 = por %p63, %p64
    %s67 = sadd.s32 %s66, 1
    %p70 = scmp.eq.s32.totalorder %s11, 1
    %p71 = scmp.ne.s32.totalorder %s66, %s68
    %p72 = scmp.eq.s32.totalorder %s11, 0
    %p73 = por %p71, %p72
    %p74 = scmp.ne.s32.totalorder %s66, %s68
    %p75 = scmp.eq.s32.totalorder %s16, 1
    %p76 = por %p74, %p75
    %p77 = scmp.ne.s32.totalorder %s68, %s69
    %p78 = scmp.eq.s32.totalorder %s16, 0
    %p79 = por %p77, %p78
    %p80 = scmp.ne.s32.totalorder %s68, %s69
    %p81 = scmp.eq.s32.totalorder %s17, 1
    %p82 = por %p80, %p81
    %p84 = scmp.ne.s32.totalorder %s69, %s83
    %p85 = scmp.eq.s32.totalorder %s17, 0
    %p86 = por %p84, %p85
    %s87 = ssub.s32 %s11, %s18
    %p88 = scmp.eq.s32.totalorder %s87, 0
    %s90 = sadd.s32 %s89, 1
    %s91 = scalar_select %p88, %s89, %s90
    %p94 = pneg %p88
    %p95 = scmp.eq.s32.totalorder %s11, 1
    %p96 = por %p94, %p95
    %p97 = scmp.ne.s32.totalorder %s89, %s92
    %p98 = scmp.eq.s32.totalorder %s11, 0
    %p99 = por %p97, %p98
    %p100 = scmp.ne.s32.totalorder %s89, %s92
    %p101 = scmp.eq.s32.totalorder %s16, 1
    %p102 = por %p100, %p101
    %p103 = scmp.ne.s32.totalorder %s92, %s93
    %p104 = scmp.eq.s32.totalorder %s16, 0
    %p105 = por %p103, %p104
    %p106 = scmp.ne.s32.totalorder %s92, %s93
    %p107 = scmp.eq.s32.totalorder %s17, 1
    %p108 = por %p106, %p107
    %p110 = scmp.ne.s32.totalorder %s93, %s109
    %p111 = scmp.eq.s32.totalorder %s17, 0
    %p112 = por %p110, %p111
    %s113 = ssub.s32 %s11, %s18
    %p114 = scmp.eq.s32.totalorder %s113, 0
    %s116 = sadd.s32 %s115, 1
    %s117 = scalar_select %p114, %s115, %s116
    %p120 = pneg %p114
    %p121 = scmp.eq.s32.totalorder %s11, 1
    %p122 = por %p120, %p121
    %p123 = scmp.ne.s32.totalorder %s115, %s118
    %p124 = scmp.eq.s32.totalorder %s11, 0
    %p125 = por %p123, %p124
    %p126 = scmp.ne.s32.totalorder %s115, %s118
    %p127 = scmp.eq.s32.totalorder %s16, 1
    %p128 = por %p126, %p127
    %p129 = scmp.ne.s32.totalorder %s118, %s119
    %p130 = scmp.eq.s32.totalorder %s16, 0
    %p131 = por %p129, %p130
    %p132 = scmp.ne.s32.totalorder %s118, %s119
    %p133 = scmp.eq.s32.totalorder %s17, 1
    %p134 = por %p132, %p133
    %p136 = scmp.ne.s32.totalorder %s119, %s135
    %p137 = scmp.eq.s32.totalorder %s17, 0
    %p138 = por %p136, %p137
    %p139 = scmp.le.s32.totalorder 1, %s11
    %p140 = scmp.lt.s32.totalorder %s11, 3
    %p141 = pnand %p139, %p140
    %p142 = pneg %p141
    // Predicated region
    $region9: #{tpu_custom_call.1} parent=5 // pred_check
      _
    $region10: #{tpu_custom_call.1} parent=5 // pred_check_branch
      %144 = sbr.rel (%p141) target = $region12
    $region11: #{tpu_custom_call.1} parent=5 // pred_region
      %s145 = ssub.s32 %s11, 1
      // Predicated region
      $region13: #{tpu_custom_call.1} parent=11 // pred_check
        %p146 = pneg %p58
      $region14: #{tpu_custom_call.1} parent=11 // pred_check_branch
        %148 = sbr.rel (%p146) target = $region16
      $region15: #{tpu_custom_call.1} parent=11 // pred_region
        _
      $region16: #{tpu_custom_call.1} parent=11 // pred_fallthru
        _
      // Predicated region
      $region17: #{tpu_custom_call.1} parent=11 // pred_check
        %p149 = pneg %p79
      $region18: #{tpu_custom_call.1} parent=11 // pred_check_branch
        %151 = sbr.rel (%p149) target = $region20
      $region19: #{tpu_custom_call.1} parent=11 // pred_region
        _
      $region20: #{tpu_custom_call.1} parent=11 // pred_fallthru
        _
    $region12: #{tpu_custom_call.1} parent=5 // pred_fallthru
      _
    %p152 = scmp.lt.s32.totalorder %s11, 2
    // Predicated region
    $region21: #{tpu_custom_call.1} parent=5 // pred_check
      %p153 = pneg %p152
    $region22: #{tpu_custom_call.1} parent=5 // pred_check_branch
      %155 = sbr.rel (%p153) target = $region24
    $region23: #{tpu_custom_call.1} parent=5 // pred_region
      // Predicated region
      $region25: #{tpu_custom_call.1} parent=23 // pred_check
        %p156 = pneg %p31
      $region26: #{tpu_custom_call.1} parent=23 // pred_check_branch
        %158 = sbr.rel (%p156) target = $region28
      $region27: #{tpu_custom_call.1} parent=23 // pred_region
        %p159 = scmp.lt.s32.totalorder %s11, 1
        %s160 = scalar_select %p159, %s11, 1
        %s161 = smul.addr %s160, 50
        %s162 = smul.addr %s161, 8
        %s163 = scalar_lea.vmem %s0, %s162
      $region28: #{tpu_custom_call.1} parent=23 // pred_fallthru
        _
    $region24: #{tpu_custom_call.1} parent=5 // pred_fallthru
      _
    %p164 = scmp.le.s32.totalorder 1, %s11
    %p165 = scmp.lt.s32.totalorder %s11, 3
    %p166 = pnand %p164, %p165
    %p167 = pneg %p166
    // Predicated region
    $region29: #{tpu_custom_call.1} parent=5 // pred_check
      _
    $region30: #{tpu_custom_call.1} parent=5 // pred_check_branch
      %169 = sbr.rel (%p166) target = $region32
    $region31: #{tpu_custom_call.1} parent=5 // pred_region
      %s170 = ssub.s32 %s11, 1
      %p171 = scmp.lt.s32.totalorder %s16, 1
      %s172 = scalar_select %p171, %s16, 1
      %s173 = smul.addr %s172, 50
      %s174 = smul.addr %s173, 8
      %s175 = scalar_lea.vmem %s0, %s174
      %p176 = pneg %p37
      %p177 = pneg %p34
      %p178 = pneg %p58
      %p179 = pneg %p55
      %p180 = pneg %p79
      %p181 = pneg %p76
      %p182 = pneg %p105
      %p183 = pneg %p102
      %p184 = scmp.lt.s32.totalorder %s16, 1
      %s185 = scalar_select %p184, %s16, 1
      %s186 = smul.addr %s185, 41
      %s187 = smul.addr %s186, 8
      %s188 = scalar_lea.vmem %s3, %s187
      %p189 = pneg %p131
      %p190 = pneg %p128
      %p191 = scmp.lt.s32.totalorder %s16, 1
      %s192 = scalar_select %p191, %s16, 1
      %s193 = smul.addr %s192, 41
      %s194 = smul.addr %s193, 8
      %s195 = scalar_lea.vmem %s4, %s194
      %p196 = scmp.lt.s32.totalorder %s16, 1
      %s197 = scalar_select %p196, %s16, 1
      %s198 = smul.addr %s197, 50
      %s199 = smul.addr %s198, 8
      %s200 = scalar_lea.vmem %s0, %s199
      %p201 = scmp.lt.s32.totalorder %s16, 1
      %s202 = scalar_select %p201, %s16, 1
      %s203 = smul.addr %s202, 41
      %s204 = smul.addr %s203, 8
      %s205 = scalar_lea.vmem %s3, %s204
      %p206 = scmp.lt.s32.totalorder %s16, 1
      %s207 = scalar_select %p206, %s16, 1
      %s208 = smul.addr %s207, 41
      %s209 = smul.addr %s208, 8
      %s210 = scalar_lea.vmem %s4, %s209
      %v211 = vld [vmem:[%s200 + $0x11] sm:$0xff]
      %v212 = vld [vmem:[%s200 + $0x19] sm:$0xff]
      %v213 = vld [vmem:[%s200 + $0x21] sm:$0xff]
      %v214 = vld [vmem:[%s200 + $0x29] sm:$0xff]
      %v215 = vld [vmem:[%s200 + $0x31] sm:$0xff]
      %v216 = vld [vmem:[%s200 + $0x39] sm:$0xff]
      %v217 = vld [vmem:[%s200 + $0x41] sm:$0xff]
      %v218 = vld [vmem:[%s200 + $0x49] sm:$0xff]
      %v219 = vld [vmem:[%s200 + $0x51] sm:$0xff]
      %v220 = vld [vmem:[%s200 + $0x59] sm:$0xff]
      %v221 = vld [vmem:[%s200 + $0x61] sm:$0xff]
      %v222 = vld [vmem:[%s200 + $0x69] sm:$0xff]
      %v223 = vld [vmem:[%s200 + $0x71] sm:$0xff]
      %v224 = vld [vmem:[%s200 + $0x79] sm:$0xff]
      %v225 = vld [vmem:[%s200 + $0x81] sm:$0xff]
      %v226 = vld [vmem:[%s200 + $0x89] sm:$0xff]
      %v227 = vld [vmem:[%s200 + $0x91] sm:$0xff]
      %v228 = vld [vmem:[%s200 + $0x99] sm:$0xff]
      %v229 = vld [vmem:[%s200 + $0xa1] sm:$0xff]
      %v230 = vld [vmem:[%s200 + $0xa9] sm:$0xff]
      %v231 = vld [vmem:[%s200 + $0xb1] sm:$0xff]
      %v232 = vld [vmem:[%s200 + $0xb9] sm:$0xff]
      %v233 = vld [vmem:[%s200 + $0xc1] sm:$0xff]
      %v234 = vld [vmem:[%s200 + $0xc9] sm:$0xff]
      %v235 = vld [vmem:[%s200 + $0xd1] sm:$0xff]
      %v236 = vld [vmem:[%s200 + $0xd9] sm:$0xff]
      %v237 = vld [vmem:[%s200 + $0xe1] sm:$0xff]
      %v238 = vld [vmem:[%s200 + $0xe9] sm:$0xff]
      %v239 = vld [vmem:[%s200 + $0xf1] sm:$0xff]
      %v240 = vld [vmem:[%s200 + $0xf9] sm:$0xff]
      %v241 = vld [vmem:[%s200 + $0x101] sm:$0xff]
      %v242 = vld [vmem:[%s200 + $0x109] sm:$0xff]
      %v243 = vld [vmem:[%s200 + $0x111] sm:$0xff]
      %v244 = vld [vmem:[%s200 + $0x119] sm:$0xff]
      %v245 = vld [vmem:[%s200 + $0x121] sm:$0xff]
      %v246 = vld [vmem:[%s200 + $0x129] sm:$0xff]
      %v247 = vld [vmem:[%s200 + $0x131] sm:$0xff]
      %v248 = vld [vmem:[%s200 + $0x139] sm:$0xff]
      %v249 = vld [vmem:[%s200 + $0x141] sm:$0xff]
      %v250 = vld [vmem:[%s200 + $0x149] sm:$0xff]
      %v251 = vld [vmem:[%s200 + $0x151] sm:$0xf]
      %v252 = vld [vmem:[%s1] sm:$0xf]
      %v253 = vld [vmem:[%s200 + $0x12] sm:$0xff]
      %v254 = vld [vmem:[%s200 + $0x1a] sm:$0xff]
      %v255 = vld [vmem:[%s200 + $0x22] sm:$0xff]
      %v256 = vld [vmem:[%s200 + $0x2a] sm:$0xff]
      %v257 = vld [vmem:[%s200 + $0x32] sm:$0xff]
      %v258 = vld [vmem:[%s200 + $0x3a] sm:$0xff]
      %v259 = vld [vmem:[%s200 + $0x42] sm:$0xff]
      %v260 = vld [vmem:[%s200 + $0x4a] sm:$0xff]
      %v261 = vld [vmem:[%s200 + $0x52] sm:$0xff]
      %v262 = vld [vmem:[%s200 + $0x5a] sm:$0xff]
      %v263 = vld [vmem:[%s200 + $0x62] sm:$0xff]
      %v264 = vld [vmem:[%s200 + $0x6a] sm:$0xff]
      %v265 = vld [vmem:[%s200 + $0x72] sm:$0xff]
      %v266 = vld [vmem:[%s200 + $0x7a] sm:$0xff]
      %v267 = vld [vmem:[%s200 + $0x82] sm:$0xff]
      %v268 = vld [vmem:[%s200 + $0x8a] sm:$0xff]
      %v269 = vld [vmem:[%s200 + $0x92] sm:$0xff]
      %v270 = vld [vmem:[%s200 + $0x9a] sm:$0xff]
      %v271 = vld [vmem:[%s200 + $0xa2] sm:$0xff]
      %v272 = vld [vmem:[%s200 + $0xaa] sm:$0xff]
      %v273 = vld [vmem:[%s200 + $0xb2] sm:$0xff]
      %v274 = vld [vmem:[%s200 + $0xba] sm:$0xff]
      %v275 = vld [vmem:[%s200 + $0xc2] sm:$0xff]
      %v276 = vld [vmem:[%s200 + $0xca] sm:$0xff]
      %v277 = vld [vmem:[%s200 + $0xd2] sm:$0xff]
      %v278 = vld [vmem:[%s200 + $0xda] sm:$0xff]
      %v279 = vld [vmem:[%s200 + $0xe2] sm:$0xff]
      %v280 = vld [vmem:[%s200 + $0xea] sm:$0xff]
      %v281 = vld [vmem:[%s200 + $0xf2] sm:$0xff]
      %v282 = vld [vmem:[%s200 + $0xfa] sm:$0xff]
      %v283 = vld [vmem:[%s200 + $0x102] sm:$0xff]
      %v284 = vld [vmem:[%s200 + $0x10a] sm:$0xff]
      %v285 = vld [vmem:[%s200 + $0x112] sm:$0xff]
      %v286 = vld [vmem:[%s200 + $0x11a] sm:$0xff]
      %v287 = vld [vmem:[%s200 + $0x122] sm:$0xff]
      %v288 = vld [vmem:[%s200 + $0x12a] sm:$0xff]
      %v289 = vld [vmem:[%s200 + $0x132] sm:$0xff]
      %v290 = vld [vmem:[%s200 + $0x13a] sm:$0xff]
      %v291 = vld [vmem:[%s200 + $0x142] sm:$0xff]
      %v292 = vld [vmem:[%s200 + $0x14a] sm:$0xff]
      %v293 = vld [vmem:[%s200 + $0x152] sm:$0xf]
      %s294 = scalar_lea.vmem %s1, 4
      %v295 = vld [vmem:[%s294] sm:$0xf]
      %vm296 = vcmask 31744
      %v298 = vsel %vm296, %v253, 0
      %v301 = vsel %vm296, %v254, 0
      %v304 = vsel %vm296, %v255, 0
      %v307 = vsel %vm296, %v256, 0
      %v310 = vsel %vm296, %v257, 0
      %v313 = vsel %vm296, %v258, 0
      %v316 = vsel %vm296, %v259, 0
      %v319 = vsel %vm296, %v260, 0
      %v322 = vsel %vm296, %v261, 0
      %v325 = vsel %vm296, %v262, 0
      %v328 = vsel %vm296, %v263, 0
      %v331 = vsel %vm296, %v264, 0
      %v334 = vsel %vm296, %v265, 0
      %v337 = vsel %vm296, %v266, 0
      %v340 = vsel %vm296, %v267, 0
      %v343 = vsel %vm296, %v268, 0
      %v346 = vsel %vm296, %v269, 0
      %v349 = vsel %vm296, %v270, 0
      %v352 = vsel %vm296, %v271, 0
      %v355 = vsel %vm296, %v272, 0
      %v358 = vsel %vm296, %v273, 0
      %v361 = vsel %vm296, %v274, 0
      %v364 = vsel %vm296, %v275, 0
      %v367 = vsel %vm296, %v276, 0
      %v370 = vsel %vm296, %v277, 0
      %v373 = vsel %vm296, %v278, 0
      %v376 = vsel %vm296, %v279, 0
      %v379 = vsel %vm296, %v280, 0
      %v382 = vsel %vm296, %v281, 0
      %v385 = vsel %vm296, %v282, 0
      %v388 = vsel %vm296, %v283, 0
      %v391 = vsel %vm296, %v284, 0
      %v394 = vsel %vm296, %v285, 0
      %v397 = vsel %vm296, %v286, 0
      %v400 = vsel %vm296, %v287, 0
      %v403 = vsel %vm296, %v288, 0
      %v406 = vsel %vm296, %v289, 0
      %v409 = vsel %vm296, %v290, 0
      %v412 = vsel %vm296, %v291, 0
      %v415 = vsel %vm296, %v292, 0
      %v418 = vsel %vm296, %v293, 0
      %vm420 = vcmask 1043456
      %v422 = vsel %vm420, %v295, 0
      %424 = vmatprep.subr.mxu0 0.0
      %425 = vmatpush1.msra.mxu0 %v422
      %426 = vmatprep.subr.mxu0 0.0
      %427 = vmatpush1.msra.mxu0 0.0
      %428 = vmatprep.subr.mxu0 0.0
      %429 = vmatpush1.msra.mxu0 0.0
      %430 = vmatprep.subr.mxu0 0.0
      %431 = vmatpush1.msra.mxu0 0.0
      %432 = vmatprep.subr.mxu0 0.0
      %433 = vmatpush1.msra.mxu0 0.0
      %434 = vmatprep.subr.mxu0 0.0
      %435 = vmatpush1.msra.mxu0 0.0
      %436 = vmatprep.subr.mxu0 0.0
      %437 = vmatpush1.msra.mxu0 0.0
      %438 = vmatprep.subr.mxu0 0.0
      %439 = vmatpush1.msra.mxu0 0.0
      %440 = vmatprep.subr.mxu0 0.0
      %441 = vmatpush1.msra.mxu0 0.0
      %442 = vmatprep.subr.mxu0 0.0
      %443 = vmatpush1.msra.mxu0 0.0
      %444 = vmatprep.subr.mxu0 0.0
      %445 = vmatpush1.msra.mxu0 0.0
      %446 = vmatprep.subr.mxu0 0.0
      %447 = vmatpush1.msra.mxu0 0.0
      %448 = vmatprep.subr.mxu0 0.0
      %449 = vmatpush1.msra.mxu0 0.0
      %450 = vmatprep.subr.mxu0 0.0
      %451 = vmatpush1.msra.mxu0 0.0
      %452 = vmatprep.subr.mxu0 0.0
      %453 = vmatpush1.msra.mxu0 0.0
      %454 = vmatprep.subr.mxu0 0.0
      %455 = vmatpush1.msra.mxu0 0.0
      %456 = vmatprep.subr.mxu0 0.0
      %457 = vmatpush1.msra.mxu0 0.0
      %458 = vmatprep.subr.mxu0 0.0
      %459 = vmatpush1.msra.mxu0 0.0
      %460 = vmatprep.subr.mxu0 0.0
      %461 = vmatpush1.msra.mxu0 0.0
      %462 = vmatprep.subr.mxu0 0.0
      %463 = vmatpush1.msra.mxu0 0.0
      %464 = vmatprep.subr.mxu0 0.0
      %465 = vmatpush1.msra.mxu0 0.0
      %466 = vmatprep.subr.mxu0 0.0
      %467 = vmatpush1.msra.mxu0 0.0
      %468 = vmatprep.subr.mxu0 0.0
      %469 = vmatpush1.msra.mxu0 0.0
      %470 = vmatprep.subr.mxu0 0.0
      %471 = vmatpush1.msra.mxu0 0.0
      %472 = vmatprep.subr.mxu0 0.0
      %473 = vmatpush1.msra.mxu0 0.0
      %474 = vmatprep.subr.mxu0 0.0
      %475 = vmatpush1.msra.mxu0 0.0
      %476 = vmatprep.subr.mxu0 0.0
      %477 = vmatpush1.msra.mxu0 0.0
      %478 = vmatprep.subr.mxu0 0.0
      %479 = vmatpush1.msra.mxu0 0.0
      %480 = vmatprep.subr.mxu0 0.0
      %481 = vmatpush1.msra.mxu0 0.0
      %482 = vmatprep.subr.mxu0 0.0
      %483 = vmatpush1.msra.mxu0 0.0
      %484 = vmatprep.subr.mxu0 0.0
      %485 = vmatpush1.msra.mxu0 0.0
      %486 = vmatprep.subr.mxu0 0.0
      %487 = vmatpush1.msra.mxu0 0.0
      %488 = vmatprep.mubr.f32.mxu0 0.0
      %489 = vmatmul.mubr.f32.gmra.mrb[0].mxu0 %v298
      %v490 = vpop.f32.mrb[0].mxu0
      %v491 = vadd.f32 0.0, %v490
      %v492 = vpop.f32.mrb[0].mxu0
      %493 = vmatprep.mubr.f32.mxu0 0.0
      %494 = vmatmul.mubr.f32.gmra.mrb[0].mxu0 %v301
      %v495 = vpop.f32.mrb[0].mxu0
      %v496 = vadd.f32 0.0, %v495
      %v497 = vpop.f32.mrb[0].mxu0
      %498 = vmatprep.mubr.f32.mxu0 0.0
      %499 = vmatmul.mubr.f32.gmra.mrb[0].mxu0 %v304
      %v500 = vpop.f32.mrb[0].mxu0
      %v501 = vadd.f32 0.0, %v500
      %v502 = vpop.f32.mrb[0].mxu0
      %503 = vmatprep.mubr.f32.mxu0 0.0
      %504 = vmatmul.mubr.f32.gmra.mrb[0].mxu0 %v307
      %v505 = vpop.f32.mrb[0].mxu0
      %v506 = vadd.f32 0.0, %v505
      %v507 = vpop.f32.mrb[0].mxu0
      %508 = vmatprep.mubr.f32.mxu0 0.0
      %509 = vmatmul.mubr.f32.gmra.mrb[0].mxu0 %v310
      %v510 = vpop.f32.mrb[0].mxu0
      %v511 = vadd.f32 0.0, %v510
      %v512 = vpop.f32.mrb[0].mxu0
      %513 = vmatprep.mubr.f32.mxu0 0.0
      %514 = vmatmul.mubr.f32.gmra.mrb[0].mxu0 %v313
      %v515 = vpop.f32.mrb[0].mxu0
      %v516 = vadd.f32 0.0, %v515
      %v517 = vpop.f32.mrb[0].mxu0
      %518 = vmatprep.mubr.f32.mxu0 0.0
      %519 = vmatmul.mubr.f32.gmra.mrb[0].mxu0 %v316
      %v520 = vpop.f32.mrb[0].mxu0
      %v521 = vadd.f32 0.0, %v520
      %v522 = vpop.f32.mrb[0].mxu0
      %523 = vmatprep.mubr.f32.mxu0 0.0
      %524 = vmatmul.mubr.f32.gmra.mrb[0].mxu0 %v319
      %v525 = vpop.f32.mrb[0].mxu0
      %v526 = vadd.f32 0.0, %v525
      %v527 = vpop.f32.mrb[0].mxu0
      %528 = vmatprep.mubr.f32.mxu0 0.0
      %529 = vmatmul.mubr.f32.gmra.mrb[0].mxu0 %v322
      %v530 = vpop.f32.mrb[0].mxu0
      %v531 = vadd.f32 0.0, %v530
      %v532 = vpop.f32.mrb[0].mxu0
      %533 = vmatprep.mubr.f32.mxu0 0.0
      %534 = vmatmul.mubr.f32.gmra.mrb[0].mxu0 %v325
      %v535 = vpop.f32.mrb[0].mxu0
      %v536 = vadd.f32 0.0, %v535
      %v537 = vpop.f32.mrb[0].mxu0
      %538 = vmatprep.mubr.f32.mxu0 0.0
      %539 = vmatmul.mubr.f32.gmra.mrb[0].mxu0 %v328
      %v540 = vpop.f32.mrb[0].mxu0
      %v541 = vadd.f32 0.0, %v540
      %v542 = vpop.f32.mrb[0].mxu0
      %543 = vmatprep.mubr.f32.mxu0 0.0
      %544 = vmatmul.mubr.f32.gmra.mrb[0].mxu0 %v331
      %v545 = vpop.f32.mrb[0].mxu0
      %v546 = vadd.f32 0.0, %v545
      %v547 = vpop.f32.mrb[0].mxu0
      %548 = vmatprep.mubr.f32.mxu0 0.0
      %549 = vmatmul.mubr.f32.gmra.mrb[0].mxu0 %v334
      %v550 = vpop.f32.mrb[0].mxu0
      %v551 = vadd.f32 0.0, %v550
      %v552 = vpop.f32.mrb[0].mxu0
      %553 = vmatprep.mubr.f32.mxu0 0.0
      %554 = vmatmul.mubr.f32.gmra.mrb[0].mxu0 %v337
      %v555 = vpop.f32.mrb[0].mxu0
      %v556 = vadd.f32 0.0, %v555
      %v557 = vpop.f32.mrb[0].mxu0
      %558 = vmatprep.mubr.f32.mxu0 0.0
      %559 = vmatmul.mubr.f32.gmra.mrb[0].mxu0 %v340
      %v560 = vpop.f32.mrb[0].mxu0
      %v561 = vadd.f32 0.0, %v560
      %v562 = vpop.f32.mrb[0].mxu0
      %563 = vmatprep.mubr.f32.mxu0 0.0
      %564 = vmatmul.mubr.f32.gmra.mrb[0].mxu0 %v343
      %v565 = vpop.f32.mrb[0].mxu0
      %v566 = vadd.f32 0.0, %v565
      %v567 = vpop.f32.mrb[0].mxu0
      %568 = vmatprep.mubr.f32.mxu0 0.0
      %569 = vmatmul.mubr.f32.gmra.mrb[0].mxu0 %v346
      %v570 = vpop.f32.mrb[0].mxu0
      %v571 = vadd.f32 0.0, %v570
      %v572 = vpop.f32.mrb[0].mxu0
      %573 = vmatprep.mubr.f32.mxu0 0.0
      %574 = vmatmul.mubr.f32.gmra.mrb[0].mxu0 %v349
      %v575 = vpop.f32.mrb[0].mxu0
      %v576 = vadd.f32 0.0, %v575
      %v577 = vpop.f32.mrb[0].mxu0
      %578 = vmatprep.mubr.f32.mxu0 0.0
      %579 = vmatmul.mubr.f32.gmra.mrb[0].mxu0 %v352
      %v580 = vpop.f32.mrb[0].mxu0
      %v581 = vadd.f32 0.0, %v580
      %v582 = vpop.f32.mrb[0].mxu0
      %583 = vmatprep.mubr.f32.mxu0 0.0
      %584 = vmatmul.mubr.f32.gmra.mrb[0].mxu0 %v355
      %v585 = vpop.f32.mrb[0].mxu0
      %v586 = vadd.f32 0.0, %v585
      %v587 = vpop.f32.mrb[0].mxu0
      %588 = vmatprep.mubr.f32.mxu0 0.0
      %589 = vmatmul.mubr.f32.gmra.mrb[0].mxu0 %v358
      %v590 = vpop.f32.mrb[0].mxu0
      %v591 = vadd.f32 0.0, %v590
      %v592 = vpop.f32.mrb[0].mxu0
      %593 = vmatprep.mubr.f32.mxu0 0.0
      %594 = vmatmul.mubr.f32.gmra.mrb[0].mxu0 %v361
      %v595 = vpop.f32.mrb[0].mxu0
      %v596 = vadd.f32 0.0, %v595
      %v597 = vpop.f32.mrb[0].mxu0
      %598 = vmatprep.mubr.f32.mxu0 0.0
      %599 = vmatmul.mubr.f32.gmra.mrb[0].mxu0 %v364
      %v600 = vpop.f32.mrb[0].mxu0
      %v601 = vadd.f32 0.0, %v600
      %v602 = vpop.f32.mrb[0].mxu0
      %603 = vmatprep.mubr.f32.mxu0 0.0
      %604 = vmatmul.mubr.f32.gmra.mrb[0].mxu0 %v367
      %v605 = vpop.f32.mrb[0].mxu0
      %v606 = vadd.f32 0.0, %v605
      %v607 = vpop.f32.mrb[0].mxu0
      %608 = vmatprep.mubr.f32.mxu0 0.0
      %609 = vmatmul.mubr.f32.gmra.mrb[0].mxu0 %v370
      %v610 = vpop.f32.mrb[0].mxu0
      %v611 = vadd.f32 0.0, %v610
      %v612 = vpop.f32.mrb[0].mxu0
      %613 = vmatprep.mubr.f32.mxu0 0.0
      %614 = vmatmul.mubr.f32.gmra.mrb[0].mxu0 %v373
      %v615 = vpop.f32.mrb[0].mxu0
      %v616 = vadd.f32 0.0, %v615
      %v617 = vpop.f32.mrb[0].mxu0
      %618 = vmatprep.mubr.f32.mxu0 0.0
      %619 = vmatmul.mubr.f32.gmra.mrb[0].mxu0 %v376
      %v620 = vpop.f32.mrb[0].mxu0
      %v621 = vadd.f32 0.0, %v620
      %v622 = vpop.f32.mrb[0].mxu0
      %623 = vmatprep.mubr.f32.mxu0 0.0
      %624 = vmatmul.mubr.f32.gmra.mrb[0].mxu0 %v379
      %v625 = vpop.f32.mrb[0].mxu0
      %v626 = vadd.f32 0.0, %v625
      %v627 = vpop.f32.mrb[0].mxu0
      %628 = vmatprep.mubr.f32.mxu0 0.0
      %629 = vmatmul.mubr.f32.gmra.mrb[0].mxu0 %v382
      %v630 = vpop.f32.mrb[0].mxu0
      %v631 = vadd.f32 0.0, %v630
      %v632 = vpop.f32.mrb[0].mxu0
      %633 = vmatprep.mubr.f32.mxu0 0.0
      %634 = vmatmul.mubr.f32.gmra.mrb[0].mxu0 %v385
      %v635 = vpop.f32.mrb[0].mxu0
      %v636 = vadd.f32 0.0, %v635
      %v637 = vpop.f32.mrb[0].mxu0
      %638 = vmatprep.mubr.f32.mxu0 0.0
      %639 = vmatmul.mubr.f32.gmra.mrb[0].mxu0 %v388
      %v640 = vpop.f32.mrb[0].mxu0
      %v641 = vadd.f32 0.0, %v640
      %v642 = vpop.f32.mrb[0].mxu0
      %643 = vmatprep.mubr.f32.mxu0 0.0
      %644 = vmatmul.mubr.f32.gmra.mrb[0].mxu0 %v391
      %v645 = vpop.f32.mrb[0].mxu0
      %v646 = vadd.f32 0.0, %v645
      %v647 = vpop.f32.mrb[0].mxu0
      %648 = vmatprep.mubr.f32.mxu0 0.0
      %649 = vmatmul.mubr.f32.gmra.mrb[0].mxu0 %v394
      %v650 = vpop.f32.mrb[0].mxu0
      %v651 = vadd.f32 0.0, %v650
      %v652 = vpop.f32.mrb[0].mxu0
      %653 = vmatprep.mubr.f32.mxu0 0.0
      %654 = vmatmul.mubr.f32.gmra.mrb[0].mxu0 %v397
      %v655 = vpop.f32.mrb[0].mxu0
      %v656 = vadd.f32 0.0, %v655
      %v657 = vpop.f32.mrb[0].mxu0
      %658 = vmatprep.mubr.f32.mxu0 0.0
      %659 = vmatmul.mubr.f32.gmra.mrb[0].mxu0 %v400
      %v660 = vpop.f32.mrb[0].mxu0
      %v661 = vadd.f32 0.0, %v660
      %v662 = vpop.f32.mrb[0].mxu0
      %663 = vmatprep.mubr.f32.mxu0 0.0
      %664 = vmatmul.mubr.f32.gmra.mrb[0].mxu0 %v403
      %v665 = vpop.f32.mrb[0].mxu0
      %v666 = vadd.f32 0.0, %v665
      %v667 = vpop.f32.mrb[0].mxu0
      %668 = vmatprep.mubr.f32.mxu0 0.0
      %669 = vmatmul.mubr.f32.gmra.mrb[0].mxu0 %v406
      %v670 = vpop.f32.mrb[0].mxu0
      %v671 = vadd.f32 0.0, %v670
      %v672 = vpop.f32.mrb[0].mxu0
      %673 = vmatprep.mubr.f32.mxu0 0.0
      %674 = vmatmul.mubr.f32.gmra.mrb[0].mxu0 %v409
      %v675 = vpop.f32.mrb[0].mxu0
      %v676 = vadd.f32 0.0, %v675
      %v677 = vpop.f32.mrb[0].mxu0
      %678 = vmatprep.mubr.f32.mxu0 0.0
      %679 = vmatmul.mubr.f32.gmra.mrb[0].mxu0 %v412
      %v680 = vpop.f32.mrb[0].mxu0
      %v681 = vadd.f32 0.0, %v680
      %v682 = vpop.f32.mrb[0].mxu0
      %683 = vmatprep.mubr.f32.mxu0 0.0
      %684 = vmatmul.mubr.f32.gmra.mrb[0].mxu0 %v415
      %v685 = vpop.f32.mrb[0].mxu0
      %v686 = vadd.f32 0.0, %v685
      %v687 = vpop.f32.mrb[0].mxu0
      %688 = vmatprep.mubr.f32.mxu0 0.0
      %689 = vmatmul.mubr.f32.gmra.mrb[0].mxu0 %v418
      %v690 = vpop.f32.mrb[0].mxu0
      %v691 = vadd.f32 0.0, %v690
      %v692 = vpop.f32.mrb[0].mxu0
      %693 = vdwg.mxu0
      %v695 = vsel %vm296, %v211, 0
      %v698 = vsel %vm296, %v212, 0
      %v701 = vsel %vm296, %v213, 0
      %v704 = vsel %vm296, %v214, 0
      %v707 = vsel %vm296, %v215, 0
      %v710 = vsel %vm296, %v216, 0
      %v713 = vsel %vm296, %v217, 0
      %v716 = vsel %vm296, %v218, 0
      %v719 = vsel %vm296, %v219, 0
      %v722 = vsel %vm296, %v220, 0
      %v725 = vsel %vm296, %v221, 0
      %v728 = vsel %vm296, %v222, 0
      %v731 = vsel %vm296, %v223, 0
      %v734 = vsel %vm296, %v224, 0
      %v737 = vsel %vm296, %v225, 0
      %v740 = vsel %vm296, %v226, 0
      %v743 = vsel %vm296, %v227, 0
      %v746 = vsel %vm296, %v228, 0
      %v749 = vsel %vm296, %v229, 0
      %v752 = vsel %vm296, %v230, 0
      %v755 = vsel %vm296, %v231, 0
      %v758 = vsel %vm296, %v232, 0
      %v761 = vsel %vm296, %v233, 0
      %v764 = vsel %vm296, %v234, 0
      %v767 = vsel %vm296, %v235, 0
      %v770 = vsel %vm296, %v236, 0
      %v773 = vsel %vm296, %v237, 0
      %v776 = vsel %vm296, %v238, 0
      %v779 = vsel %vm296, %v239, 0
      %v782 = vsel %vm296, %v240, 0
      %v785 = vsel %vm296, %v241, 0
      %v788 = vsel %vm296, %v242, 0
      %v791 = vsel %vm296, %v243, 0
      %v794 = vsel %vm296, %v244, 0
      %v797 = vsel %vm296, %v245, 0
      %v800 = vsel %vm296, %v246, 0
      %v803 = vsel %vm296, %v247, 0
      %v806 = vsel %vm296, %v248, 0
      %v809 = vsel %vm296, %v249, 0
      %v812 = vsel %vm296, %v250, 0
      %v815 = vsel %vm296, %v251, 0
      %v818 = vsel %vm420, %v252, 0
      %820 = vmatprep.subr.mxu0 0.0
      %821 = vmatpush1.msra.mxu0 %v818
      %822 = vmatprep.subr.mxu0 0.0
      %823 = vmatpush1.msra.mxu0 0.0
      %824 = vmatprep.subr.mxu0 0.0
      %825 = vmatpush1.msra.mxu0 0.0
      %826 = vmatprep.subr.mxu0 0.0
      %827 = vmatpush1.msra.mxu0 0.0
      %828 = vmatprep.subr.mxu0 0.0
      %829 = vmatpush1.msra.mxu0 0.0
      %830 = vmatprep.subr.mxu0 0.0
      %831 = vmatpush1.msra.mxu0 0.0
      %832 = vmatprep.subr.mxu0 0.0
      %833 = vmatpush1.msra.mxu0 0.0
      %834 = vmatprep.subr.mxu0 0.0
      %835 = vmatpush1.msra.mxu0 0.0
      %836 = vmatprep.subr.mxu0 0.0
      %837 = vmatpush1.msra.mxu0 0.0
      %838 = vmatprep.subr.mxu0 0.0
      %839 = vmatpush1.msra.mxu0 0.0
      %840 = vmatprep.subr.mxu0 0.0
      %841 = vmatpush1.msra.mxu0 0.0
      %842 = vmatprep.subr.mxu0 0.0
      %843 = vmatpush1.msra.mxu0 0.0
      %844 = vmatprep.subr.mxu0 0.0
      %845 = vmatpush1.msra.mxu0 0.0
      %846 = vmatprep.subr.mxu0 0.0
      %847 = vmatpush1.msra.mxu0 0.0
      %848 = vmatprep.subr.mxu0 0.0
      %849 = vmatpush1.msra.mxu0 0.0
      %850 = vmatprep.subr.mxu0 0.0
      %851 = vmatpush1.msra.mxu0 0.0
      %852 = vmatprep.subr.mxu0 0.0
      %853 = vmatpush1.msra.mxu0 0.0
      %854 = vmatprep.subr.mxu0 0.0
      %855 = vmatpush1.msra.mxu0 0.0
      %856 = vmatprep.subr.mxu0 0.0
      %857 = vmatpush1.msra.mxu0 0.0
      %858 = vmatprep.subr.mxu0 0.0
      %859 = vmatpush1.msra.mxu0 0.0
      %860 = vmatprep.subr.mxu0 0.0
      %861 = vmatpush1.msra.mxu0 0.0
      %862 = vmatprep.subr.mxu0 0.0
      %863 = vmatpush1.msra.mxu0 0.0
      %864 = vmatprep.subr.mxu0 0.0
      %865 = vmatpush1.msra.mxu0 0.0
      %866 = vmatprep.subr.mxu0 0.0
      %867 = vmatpush1.msra.mxu0 0.0
      %868 = vmatprep.subr.mxu0 0.0
      %869 = vmatpush1.msra.mxu0 0.0
      %870 = vmatprep.subr.mxu0 0.0
      %871 = vmatpush1.msra.mxu0 0.0
      %872 = vmatprep.subr.mxu0 0.0
      %873 = vmatpush1.msra.mxu0 0.0
      %874 = vmatprep.subr.mxu0 0.0
      %875 = vmatpush1.msra.mxu0 0.0
      %876 = vmatprep.subr.mxu0 0.0
      %877 = vmatpush1.msra.mxu0 0.0
      %878 = vmatprep.subr.mxu0 0.0
      %879 = vmatpush1.msra.mxu0 0.0
      %880 = vmatprep.subr.mxu0 0.0
      %881 = vmatpush1.msra.mxu0 0.0
      %882 = vmatprep.subr.mxu0 0.0
      %883 = vmatpush1.msra.mxu0 0.0
      %884 = vmatprep.mubr.f32.mxu0 0.0
      %885 = vmatmul.mubr.f32.gmra.mrb[0].mxu0 %v695
      %v886 = vpop.f32.mrb[0].mxu0
      %v887 = vadd.f32 %v491, %v886
      %v888 = vpop.f32.mrb[0].mxu0
      %889 = vmatprep.mubr.f32.mxu0 0.0
      %890 = vmatmul.mubr.f32.gmra.mrb[0].mxu0 %v698
      %v891 = vpop.f32.mrb[0].mxu0
      %v892 = vadd.f32 %v496, %v891
      %v893 = vpop.f32.mrb[0].mxu0
      %894 = vmatprep.mubr.f32.mxu0 0.0
      %895 = vmatmul.mubr.f32.gmra.mrb[0].mxu0 %v701
      %v896 = vpop.f32.mrb[0].mxu0
      %v897 = vadd.f32 %v501, %v896
      %v898 = vpop.f32.mrb[0].mxu0
      %899 = vmatprep.mubr.f32.mxu0 0.0
      %900 = vmatmul.mubr.f32.gmra.mrb[0].mxu0 %v704
      %v901 = vpop.f32.mrb[0].mxu0
      %v902 = vadd.f32 %v506, %v901
      %v903 = vpop.f32.mrb[0].mxu0
      %904 = vmatprep.mubr.f32.mxu0 0.0
      %905 = vmatmul.mubr.f32.gmra.mrb[0].mxu0 %v707
      %v906 = vpop.f32.mrb[0].mxu0
      %v907 = vadd.f32 %v511, %v906
      %v908 = vpop.f32.mrb[0].mxu0
      %909 = vmatprep.mubr.f32.mxu0 0.0
      %910 = vmatmul.mubr.f32.gmra.mrb[0].mxu0 %v710
      %v911 = vpop.f32.mrb[0].mxu0
      %v912 = vadd.f32 %v516, %v911
      %v913 = vpop.f32.mrb[0].mxu0
      %914 = vmatprep.mubr.f32.mxu0 0.0
      %915 = vmatmul.mubr.f32.gmra.mrb[0].mxu0 %v713
      %v916 = vpop.f32.mrb[0].mxu0
      %v917 = vadd.f32 %v521, %v916
      %v918 = vpop.f32.mrb[0].mxu0
      %919 = vmatprep.mubr.f32.mxu0 0.0
      %920 = vmatmul.mubr.f32.gmra.mrb[0].mxu0 %v716
      %v921 = vpop.f32.mrb[0].mxu0
      %v922 = vadd.f32 %v526, %v921
      %v923 = vpop.f32.mrb[0].mxu0
      %924 = vmatprep.mubr.f32.mxu0 0.0
      %925 = vmatmul.mubr.f32.gmra.mrb[0].mxu0 %v719
      %v926 = vpop.f32.mrb[0].mxu0
      %v927 = vadd.f32 %v531, %v926
      %v928 = vpop.f32.mrb[0].mxu0
      %929 = vmatprep.mubr.f32.mxu0 0.0
      %930 = vmatmul.mubr.f32.gmra.mrb[0].mxu0 %v722
      %v931 = vpop.f32.mrb[0].mxu0
      %v932 = vadd.f32 %v536, %v931
      %v933 = vpop.f32.mrb[0].mxu0
      %934 = vmatprep.mubr.f32.mxu0 0.0
      %935 = vmatmul.mubr.f32.gmra.mrb[0].mxu0 %v725
      %v936 = vpop.f32.mrb[0].mxu0
      %v937 = vadd.f32 %v541, %v936
      %v938 = vpop.f32.mrb[0].mxu0
      %939 = vmatprep.mubr.f32.mxu0 0.0
      %940 = vmatmul.mubr.f32.gmra.mrb[0].mxu0 %v728
      %v941 = vpop.f32.mrb[0].mxu0
      %v942 = vadd.f32 %v546, %v941
      %v943 = vpop.f32.mrb[0].mxu0
      %944 = vmatprep.mubr.f32.mxu0 0.0
      %945 = vmatmul.mubr.f32.gmra.mrb[0].mxu0 %v731
      %v946 = vpop.f32.mrb[0].mxu0
      %v947 = vadd.f32 %v551, %v946
      %v948 = vpop.f32.mrb[0].mxu0
      %949 = vmatprep.mubr.f32.mxu0 0.0
      %950 = vmatmul.mubr.f32.gmra.mrb[0].mxu0 %v734
      %v951 = vpop.f32.mrb[0].mxu0
      %v952 = vadd.f32 %v556, %v951
      %v953 = vpop.f32.mrb[0].mxu0
      %954 = vmatprep.mubr.f32.mxu0 0.0
      %955 = vmatmul.mubr.f32.gmra.mrb[0].mxu0 %v737
      %v956 = vpop.f32.mrb[0].mxu0
      %v957 = vadd.f32 %v561, %v956
      %v958 = vpop.f32.mrb[0].mxu0
      %959 = vmatprep.mubr.f32.mxu0 0.0
      %960 = vmatmul.mubr.f32.gmra.mrb[0].mxu0 %v740
      %v961 = vpop.f32.mrb[0].mxu0
      %v962 = vadd.f32 %v566, %v961
      %v963 = vpop.f32.mrb[0].mxu0
      %964 = vmatprep.mubr.f32.mxu0 0.0
      %965 = vmatmul.mubr.f32.gmra.mrb[0].mxu0 %v743
      %v966 = vpop.f32.mrb[0].mxu0
      %v967 = vadd.f32 %v571, %v966
      %v968 = vpop.f32.mrb[0].mxu0
      %969 = vmatprep.mubr.f32.mxu0 0.0
      %970 = vmatmul.mubr.f32.gmra.mrb[0].mxu0 %v746
      %v971 = vpop.f32.mrb[0].mxu0
      %v972 = vadd.f32 %v576, %v971
      %v973 = vpop.f32.mrb[0].mxu0
      %974 = vmatprep.mubr.f32.mxu0 0.0
      %975 = vmatmul.mubr.f32.gmra.mrb[0].mxu0 %v749
      %v976 = vpop.f32.mrb[0].mxu0
      %v977 = vadd.f32 %v581, %v976
      %v978 = vpop.f32.mrb[0].mxu0
      %979 = vmatprep.mubr.f32.mxu0 0.0
      %980 = vmatmul.mubr.f32.gmra.mrb[0].mxu0 %v752
      %v981 = vpop.f32.mrb[0].mxu0
      %v982 = vadd.f32 %v586, %v981
      %v983 = vpop.f32.mrb[0].mxu0
      %984 = vmatprep.mubr.f32.mxu0 0.0
      %985 = vmatmul.mubr.f32.gmra.mrb[0].mxu0 %v755
      %v986 = vpop.f32.mrb[0].mxu0
      %v987 = vadd.f32 %v591, %v986
      %v988 = vpop.f32.mrb[0].mxu0
      %989 = vmatprep.mubr.f32.mxu0 0.0
      %990 = vmatmul.mubr.f32.gmra.mrb[0].mxu0 %v758
      %v991 = vpop.f32.mrb[0].mxu0
      %v992 = vadd.f32 %v596, %v991
      %v993 = vpop.f32.mrb[0].mxu0
      %994 = vmatprep.mubr.f32.mxu0 0.0
      %995 = vmatmul.mubr.f32.gmra.mrb[0].mxu0 %v761
      %v996 = vpop.f32.mrb[0].mxu0
      %v997 = vadd.f32 %v601, %v996
      %v998 = vpop.f32.mrb[0].mxu0
      %999 = vmatprep.mubr.f32.mxu0 0.0
      %1000 = vmatmul.mubr.f32.gmra.mrb[0].mxu0 %v764
      %v1001 = vpop.f32.mrb[0].mxu0
      %v1002 = vadd.f32 %v606, %v1001
      %v1003 = vpop.f32.mrb[0].mxu0
      %1004 = vmatprep.mubr.f32.mxu0 0.0
      %1005 = vmatmul.mubr.f32.gmra.mrb[0].mxu0 %v767
      %v1006 = vpop.f32.mrb[0].mxu0
      %v1007 = vadd.f32 %v611, %v1006
      %v1008 = vpop.f32.mrb[0].mxu0
      %1009 = vmatprep.mubr.f32.mxu0 0.0
      %1010 = vmatmul.mubr.f32.gmra.mrb[0].mxu0 %v770
      %v1011 = vpop.f32.mrb[0].mxu0
      %v1012 = vadd.f32 %v616, %v1011
      %v1013 = vpop.f32.mrb[0].mxu0
      %1014 = vmatprep.mubr.f32.mxu0 0.0
      %1015 = vmatmul.mubr.f32.gmra.mrb[0].mxu0 %v773
      %v1016 = vpop.f32.mrb[0].mxu0
      %v1017 = vadd.f32 %v621, %v1016
      %v1018 = vpop.f32.mrb[0].mxu0
      %1019 = vmatprep.mubr.f32.mxu0 0.0
      %1020 = vmatmul.mubr.f32.gmra.mrb[0].mxu0 %v776
      %v1021 = vpop.f32.mrb[0].mxu0
      %v1022 = vadd.f32 %v626, %v1021
      %v1023 = vpop.f32.mrb[0].mxu0
      %1024 = vmatprep.mubr.f32.mxu0 0.0
      %1025 = vmatmul.mubr.f32.gmra.mrb[0].mxu0 %v779
      %v1026 = vpop.f32.mrb[0].mxu0
      %v1027 = vadd.f32 %v631, %v1026
      %v1028 = vpop.f32.mrb[0].mxu0
      %1029 = vmatprep.mubr.f32.mxu0 0.0
      %1030 = vmatmul.mubr.f32.gmra.mrb[0].mxu0 %v782
      %v1031 = vpop.f32.mrb[0].mxu0
      %v1032 = vadd.f32 %v636, %v1031
      %v1033 = vpop.f32.mrb[0].mxu0
      %1034 = vmatprep.mubr.f32.mxu0 0.0
      %1035 = vmatmul.mubr.f32.gmra.mrb[0].mxu0 %v785
      %v1036 = vpop.f32.mrb[0].mxu0
      %v1037 = vadd.f32 %v641, %v1036
      %v1038 = vpop.f32.mrb[0].mxu0
      %1039 = vmatprep.mubr.f32.mxu0 0.0
      %1040 = vmatmul.mubr.f32.gmra.mrb[0].mxu0 %v788
      %v1041 = vpop.f32.mrb[0].mxu0
      %v1042 = vadd.f32 %v646, %v1041
      %v1043 = vpop.f32.mrb[0].mxu0
      %1044 = vmatprep.mubr.f32.mxu0 0.0
      %1045 = vmatmul.mubr.f32.gmra.mrb[0].mxu0 %v791
      %v1046 = vpop.f32.mrb[0].mxu0
      %v1047 = vadd.f32 %v651, %v1046
      %v1048 = vpop.f32.mrb[0].mxu0
      %1049 = vmatprep.mubr.f32.mxu0 0.0
      %1050 = vmatmul.mubr.f32.gmra.mrb[0].mxu0 %v794
      %v1051 = vpop.f32.mrb[0].mxu0
      %v1052 = vadd.f32 %v656, %v1051
      %v1053 = vpop.f32.mrb[0].mxu0
      %1054 = vmatprep.mubr.f32.mxu0 0.0
      %1055 = vmatmul.mubr.f32.gmra.mrb[0].mxu0 %v797
      %v1056 = vpop.f32.mrb[0].mxu0
      %v1057 = vadd.f32 %v661, %v1056
      %v1058 = vpop.f32.mrb[0].mxu0
      %1059 = vmatprep.mubr.f32.mxu0 0.0
      %1060 = vmatmul.mubr.f32.gmra.mrb[0].mxu0 %v800
      %v1061 = vpop.f32.mrb[0].mxu0
      %v1062 = vadd.f32 %v666, %v1061
      %v1063 = vpop.f32.mrb[0].mxu0
      %1064 = vmatprep.mubr.f32.mxu0 0.0
      %1065 = vmatmul.mubr.f32.gmra.mrb[0].mxu0 %v803
      %v1066 = vpop.f32.mrb[0].mxu0
      %v1067 = vadd.f32 %v671, %v1066
      %v1068 = vpop.f32.mrb[0].mxu0
      %1069 = vmatprep.mubr.f32.mxu0 0.0
      %1070 = vmatmul.mubr.f32.gmra.mrb[0].mxu0 %v806
      %v1071 = vpop.f32.mrb[0].mxu0
      %v1072 = vadd.f32 %v676, %v1071
      %v1073 = vpop.f32.mrb[0].mxu0
      %1074 = vmatprep.mubr.f32.mxu0 0.0
      %1075 = vmatmul.mubr.f32.gmra.mrb[0].mxu0 %v809
      %v1076 = vpop.f32.mrb[0].mxu0
      %v1077 = vadd.f32 %v681, %v1076
      %v1078 = vpop.f32.mrb[0].mxu0
      %1079 = vmatprep.mubr.f32.mxu0 0.0
      %1080 = vmatmul.mubr.f32.gmra.mrb[0].mxu0 %v812
      %v1081 = vpop.f32.mrb[0].mxu0
      %v1082 = vadd.f32 %v686, %v1081
      %v1083 = vpop.f32.mrb[0].mxu0
      %1084 = vmatprep.mubr.f32.mxu0 0.0
      %1085 = vmatmul.mubr.f32.gmra.mrb[0].mxu0 %v815
      %v1086 = vpop.f32.mrb[0].mxu0
      %v1087 = vadd.f32 %v691, %v1086
      %v1088 = vpop.f32.mrb[0].mxu0
      %1089 = vdwg.mxu0
      %v1090 = vld [vmem:[%s200 + $0x13] sm:$0xff]
      %v1091 = vld [vmem:[%s200 + $0x1b] sm:$0xff]
      %v1092 = vld [vmem:[%s200 + $0x23] sm:$0xff]
      %v1093 = vld [vmem:[%s200 + $0x2b] sm:$0xff]
      %v1094 = vld [vmem:[%s200 + $0x33] sm:$0xff]
      %v1095 = vld [vmem:[%s200 + $0x3b] sm:$0xff]
      %v1096 = vld [vmem:[%s200 + $0x43] sm:$0xff]
      %v1097 = vld [vmem:[%s200 + $0x4b] sm:$0xff]
      %v1098 = vld [vmem:[%s200 + $0x53] sm:$0xff]
      %v1099 = vld [vmem:[%s200 + $0x5b] sm:$0xff]
      %v1100 = vld [vmem:[%s200 + $0x63] sm:$0xff]
      %v1101 = vld [vmem:[%s200 + $0x6b] sm:$0xff]
      %v1102 = vld [vmem:[%s200 + $0x73] sm:$0xff]
      %v1103 = vld [vmem:[%s200 + $0x7b] sm:$0xff]
      %v1104 = vld [vmem:[%s200 + $0x83] sm:$0xff]
      %v1105 = vld [vmem:[%s200 + $0x8b] sm:$0xff]
      %v1106 = vld [vmem:[%s200 + $0x93] sm:$0xff]
      %v1107 = vld [vmem:[%s200 + $0x9b] sm:$0xff]
      %v1108 = vld [vmem:[%s200 + $0xa3] sm:$0xff]
      %v1109 = vld [vmem:[%s200 + $0xab] sm:$0xff]
      %v1110 = vld [vmem:[%s200 + $0xb3] sm:$0xff]
      %v1111 = vld [vmem:[%s200 + $0xbb] sm:$0xff]
      %v1112 = vld [vmem:[%s200 + $0xc3] sm:$0xff]
      %v1113 = vld [vmem:[%s200 + $0xcb] sm:$0xff]
      %v1114 = vld [vmem:[%s200 + $0xd3] sm:$0xff]
      %v1115 = vld [vmem:[%s200 + $0xdb] sm:$0xff]
      %v1116 = vld [vmem:[%s200 + $0xe3] sm:$0xff]
      %v1117 = vld [vmem:[%s200 + $0xeb] sm:$0xff]
      %v1118 = vld [vmem:[%s200 + $0xf3] sm:$0xff]
      %v1119 = vld [vmem:[%s200 + $0xfb] sm:$0xff]
      %v1120 = vld [vmem:[%s200 + $0x103] sm:$0xff]
      %v1121 = vld [vmem:[%s200 + $0x10b] sm:$0xff]
      %v1122 = vld [vmem:[%s200 + $0x113] sm:$0xff]
      %v1123 = vld [vmem:[%s200 + $0x11b] sm:$0xff]
      %v1124 = vld [vmem:[%s200 + $0x123] sm:$0xff]
      %v1125 = vld [vmem:[%s200 + $0x12b] sm:$0xff]
      %v1126 = vld [vmem:[%s200 + $0x133] sm:$0xff]
      %v1127 = vld [vmem:[%s200 + $0x13b] sm:$0xff]
      %v1128 = vld [vmem:[%s200 + $0x143] sm:$0xff]
      %v1129 = vld [vmem:[%s200 + $0x14b] sm:$0xff]
      %v1130 = vld [vmem:[%s200 + $0x153] sm:$0xf]
      %s1131 = scalar_lea.vmem %s1, 8
      %v1132 = vld [vmem:[%s1131] sm:$0xf]
      %v1134 = vsel %vm296, %v1090, 0
      %v1137 = vsel %vm296, %v1091, 0
      %v1140 = vsel %vm296, %v1092, 0
      %v1143 = vsel %vm296, %v1093, 0
      %v1146 = vsel %vm296, %v1094, 0
      %v1149 = vsel %vm296, %v1095, 0
      %v1152 = vsel %vm296, %v1096, 0
      %v1155 = vsel %vm296, %v1097, 0
      %v1158 = vsel %vm296, %v1098, 0
      %v1161 = vsel %vm296, %v1099, 0
      %v1164 = vsel %vm296, %v1100, 0
      %v1167 = vsel %vm296, %v1101, 0
      %v1170 = vsel %vm296, %v1102, 0
      %v1173 = vsel %vm296, %v1103, 0
      %v1176 = vsel %vm296, %v1104, 0
      %v1179 = vsel %vm296, %v1105, 0
      %v1182 = vsel %vm296, %v1106, 0
      %v1185 = vsel %vm296, %v1107, 0
      %v1188 = vsel %vm296, %v1108, 0
      %v1191 = vsel %vm296, %v1109, 0
      %v1194 = vsel %vm296, %v1110, 0
      %v1197 = vsel %vm296, %v1111, 0
      %v1200 = vsel %vm296, %v1112, 0
      %v1203 = vsel %vm296, %v1113, 0
      %v1206 = vsel %vm296, %v1114, 0
      %v1209 = vsel %vm296, %v1115, 0
      %v1212 = vsel %vm296, %v1116, 0
      %v1215 = vsel %vm296, %v1117, 0
      %v1218 = vsel %vm296, %v1118, 0
      %v1221 = vsel %vm296, %v1119, 0
      %v1224 = vsel %vm296, %v1120, 0
      %v1227 = vsel %vm296, %v1121, 0
      %v1230 = vsel %vm296, %v1122, 0
      %v1233 = vsel %vm296, %v1123, 0
      %v1236 = vsel %vm296, %v1124, 0
      %v1239 = vsel %vm296, %v1125, 0
      %v1242 = vsel %vm296, %v1126, 0
      %v1245 = vsel %vm296, %v1127, 0
      %v1248 = vsel %vm296, %v1128, 0
      %v1251 = vsel %vm296, %v1129, 0
      %v1254 = vsel %vm296, %v1130, 0
      %v1257 = vsel %vm420, %v1132, 0
      %1259 = vmatprep.subr.mxu0 0.0
      %1260 = vmatpush1.msra.mxu0 %v1257
      %1261 = vmatprep.subr.mxu0 0.0
      %1262 = vmatpush1.msra.mxu0 0.0
      %1263 = vmatprep.subr.mxu0 0.0
      %1264 = vmatpush1.msra.mxu0 0.0
      %1265 = vmatprep.subr.mxu0 0.0
      %1266 = vmatpush1.msra.mxu0 0.0
      %1267 = vmatprep.subr.mxu0 0.0
      %1268 = vmatpush1.msra.mxu0 0.0
      %1269 = vmatprep.subr.mxu0 0.0
      %1270 = vmatpush1.msra.mxu0 0.0
      %1271 = vmatprep.subr.mxu0 0.0
      %1272 = vmatpush1.msra.mxu0 0.0
      %1273 = vmatprep.subr.mxu0 0.0
      %1274 = vmatpush1.msra.mxu0 0.0
      %1275 = vmatprep.subr.mxu0 0.0
      %1276 = vmatpush1.msra.mxu0 0.0
      %1277 = vmatprep.subr.mxu0 0.0
      %1278 = vmatpush1.msra.mxu0 0.0
      %1279 = vmatprep.subr.mxu0 0.0
      %1280 = vmatpush1.msra.mxu0 0.0
      %1281 = vmatprep.subr.mxu0 0.0
      %1282 = vmatpush1.msra.mxu0 0.0
      %1283 = vmatprep.subr.mxu0 0.0
      %1284 = vmatpush1.msra.mxu0 0.0
      %1285 = vmatprep.subr.mxu0 0.0
      %1286 = vmatpush1.msra.mxu0 0.0
      %1287 = vmatprep.subr.mxu0 0.0
      %1288 = vmatpush1.msra.mxu0 0.0
      %1289 = vmatprep.subr.mxu0 0.0
      %1290 = vmatpush1.msra.mxu0 0.0
      %1291 = vmatprep.subr.mxu0 0.0
      %1292 = vmatpush1.msra.mxu0 0.0
      %1293 = vmatprep.subr.mxu0 0.0
      %1294 = vmatpush1.msra.mxu0 0.0
      %1295 = vmatprep.subr.mxu0 0.0
      %1296 = vmatpush1.msra.mxu0 0.0
      %1297 = vmatprep.subr.mxu0 0.0
      %1298 = vmatpush1.msra.mxu0 0.0
      %1299 = vmatprep.subr.mxu0 0.0
      %1300 = vmatpush1.msra.mxu0 0.0
      %1301 = vmatprep.subr.mxu0 0.0
      %1302 = vmatpush1.msra.mxu0 0.0
      %1303 = vmatprep.subr.mxu0 0.0
      %1304 = vmatpush1.msra.mxu0 0.0
      %1305 = vmatprep.subr.mxu0 0.0
      %1306 = vmatpush1.msra.mxu0 0.0
      %1307 = vmatprep.subr.mxu0 0.0
      %1308 = vmatpush1.msra.mxu0 0.0
      %1309 = vmatprep.subr.mxu0 0.0
      %1310 = vmatpush1.msra.mxu0 0.0
      %1311 = vmatprep.subr.mxu0 0.0
      %1312 = vmatpush1.msra.mxu0 0.0
      %1313 = vmatprep.subr.mxu0 0.0
      %1314 = vmatpush1.msra.mxu0 0.0
      %1315 = vmatprep.subr.mxu0 0.0
      %1316 = vmatpush1.msra.mxu0 0.0
      %1317 = vmatprep.subr.mxu0 0.0
      %1318 = vmatpush1.msra.mxu0 0.0
      %1319 = vmatprep.subr.mxu0 0.0
      %1320 = vmatpush1.msra.mxu0 0.0
      %1321 = vmatprep.subr.mxu0 0.0
      %1322 = vmatpush1.msra.mxu0 0.0
      %1323 = vmatprep.mubr.f32.mxu0 0.0
      %1324 = vmatmul.mubr.f32.gmra.mrb[0].mxu0 %v1134
      %v1325 = vpop.f32.mrb[0].mxu0
      %v1326 = vadd.f32 0.0, %v1325
      %v1327 = vpop.f32.mrb[0].mxu0
      %1328 = vmatprep.mubr.f32.mxu0 0.0
      %1329 = vmatmul.mubr.f32.gmra.mrb[0].mxu0 %v1137
      %v1330 = vpop.f32.mrb[0].mxu0
      %v1331 = vadd.f32 0.0, %v1330
      %v1332 = vpop.f32.mrb[0].mxu0
      %1333 = vmatprep.mubr.f32.mxu0 0.0
      %1334 = vmatmul.mubr.f32.gmra.mrb[0].mxu0 %v1140
      %v1335 = vpop.f32.mrb[0].mxu0
      %v1336 = vadd.f32 0.0, %v1335
      %v1337 = vpop.f32.mrb[0].mxu0
      %1338 = vmatprep.mubr.f32.mxu0 0.0
      %1339 = vmatmul.mubr.f32.gmra.mrb[0].mxu0 %v1143
      %v1340 = vpop.f32.mrb[0].mxu0
      %v1341 = vadd.f32 0.0, %v1340
      %v1342 = vpop.f32.mrb[0].mxu0
      %1343 = vmatprep.mubr.f32.mxu0 0.0
      %1344 = vmatmul.mubr.f32.gmra.mrb[0].mxu0 %v1146
      %v1345 = vpop.f32.mrb[0].mxu0
      %v1346 = vadd.f32 0.0, %v1345
      %v1347 = vpop.f32.mrb[0].mxu0
      %1348 = vmatprep.mubr.f32.mxu0 0.0
      %1349 = vmatmul.mubr.f32.gmra.mrb[0].mxu0 %v1149
      %v1350 = vpop.f32.mrb[0].mxu0
      %v1351 = vadd.f32 0.0, %v1350
      %v1352 = vpop.f32.mrb[0].mxu0
      %1353 = vmatprep.mubr.f32.mxu0 0.0
      %1354 = vmatmul.mubr.f32.gmra.mrb[0].mxu0 %v1152
      %v1355 = vpop.f32.mrb[0].mxu0
      %v1356 = vadd.f32 0.0, %v1355
      %v1357 = vpop.f32.mrb[0].mxu0
      %1358 = vmatprep.mubr.f32.mxu0 0.0
      %1359 = vmatmul.mubr.f32.gmra.mrb[0].mxu0 %v1155
      %v1360 = vpop.f32.mrb[0].mxu0
      %v1361 = vadd.f32 0.0, %v1360
      %v1362 = vpop.f32.mrb[0].mxu0
      %1363 = vmatprep.mubr.f32.mxu0 0.0
      %1364 = vmatmul.mubr.f32.gmra.mrb[0].mxu0 %v1158
      %v1365 = vpop.f32.mrb[0].mxu0
      %v1366 = vadd.f32 0.0, %v1365
      %v1367 = vpop.f32.mrb[0].mxu0
      %1368 = vmatprep.mubr.f32.mxu0 0.0
      %1369 = vmatmul.mubr.f32.gmra.mrb[0].mxu0 %v1161
      %v1370 = vpop.f32.mrb[0].mxu0
      %v1371 = vadd.f32 0.0, %v1370
      %v1372 = vpop.f32.mrb[0].mxu0
      %1373 = vmatprep.mubr.f32.mxu0 0.0
      %1374 = vmatmul.mubr.f32.gmra.mrb[0].mxu0 %v1164
      %v1375 = vpop.f32.mrb[0].mxu0
      %v1376 = vadd.f32 0.0, %v1375
      %v1377 = vpop.f32.mrb[0].mxu0
      %1378 = vmatprep.mubr.f32.mxu0 0.0
      %1379 = vmatmul.mubr.f32.gmra.mrb[0].mxu0 %v1167
      %v1380 = vpop.f32.mrb[0].mxu0
      %v1381 = vadd.f32 0.0, %v1380
      %v1382 = vpop.f32.mrb[0].mxu0
      %1383 = vmatprep.mubr.f32.mxu0 0.0
      %1384 = vmatmul.mubr.f32.gmra.mrb[0].mxu0 %v1170
      %v1385 = vpop.f32.mrb[0].mxu0
      %v1386 = vadd.f32 0.0, %v1385
      %v1387 = vpop.f32.mrb[0].mxu0
      %1388 = vmatprep.mubr.f32.mxu0 0.0
      %1389 = vmatmul.mubr.f32.gmra.mrb[0].mxu0 %v1173
      %v1390 = vpop.f32.mrb[0].mxu0
      %v1391 = vadd.f32 0.0, %v1390
      %v1392 = vpop.f32.mrb[0].mxu0
      %1393 = vmatprep.mubr.f32.mxu0 0.0
      %1394 = vmatmul.mubr.f32.gmra.mrb[0].mxu0 %v1176
      %v1395 = vpop.f32.mrb[0].mxu0
      %v1396 = vadd.f32 0.0, %v1395
      %v1397 = vpop.f32.mrb[0].mxu0
      %1398 = vmatprep.mubr.f32.mxu0 0.0
      %1399 = vmatmul.mubr.f32.gmra.mrb[0].mxu0 %v1179
      %v1400 = vpop.f32.mrb[0].mxu0
      %v1401 = vadd.f32 0.0, %v1400
      %v1402 = vpop.f32.mrb[0].mxu0
      %1403 = vmatprep.mubr.f32.mxu0 0.0
      %1404 = vmatmul.mubr.f32.gmra.mrb[0].mxu0 %v1182
      %v1405 = vpop.f32.mrb[0].mxu0
      %v1406 = vadd.f32 0.0, %v1405
      %v1407 = vpop.f32.mrb[0].mxu0
      %1408 = vmatprep.mubr.f32.mxu0 0.0
      %1409 = vmatmul.mubr.f32.gmra.mrb[0].mxu0 %v1185
      %v1410 = vpop.f32.mrb[0].mxu0
      %v1411 = vadd.f32 0.0, %v1410
      %v1412 = vpop.f32.mrb[0].mxu0
      %1413 = vmatprep.mubr.f32.mxu0 0.0
      %1414 = vmatmul.mubr.f32.gmra.mrb[0].mxu0 %v1188
      %v1415 = vpop.f32.mrb[0].mxu0
      %v1416 = vadd.f32 0.0, %v1415
      %v1417 = vpop.f32.mrb[0].mxu0
      %1418 = vmatprep.mubr.f32.mxu0 0.0
      %1419 = vmatmul.mubr.f32.gmra.mrb[0].mxu0 %v1191
      %v1420 = vpop.f32.mrb[0].mxu0
      %v1421 = vadd.f32 0.0, %v1420
      %v1422 = vpop.f32.mrb[0].mxu0
      %1423 = vmatprep.mubr.f32.mxu0 0.0
      %1424 = vmatmul.mubr.f32.gmra.mrb[0].mxu0 %v1194
      %v1425 = vpop.f32.mrb[0].mxu0
      %v1426 = vadd.f32 0.0, %v1425
      %v1427 = vpop.f32.mrb[0].mxu0
      %1428 = vmatprep.mubr.f32.mxu0 0.0
      %1429 = vmatmul.mubr.f32.gmra.mrb[0].mxu0 %v1197
      %v1430 = vpop.f32.mrb[0].mxu0
      %v1431 = vadd.f32 0.0, %v1430
      %v1432 = vpop.f32.mrb[0].mxu0
      %1433 = vmatprep.mubr.f32.mxu0 0.0
      %1434 = vmatmul.mubr.f32.gmra.mrb[0].mxu0 %v1200
      %v1435 = vpop.f32.mrb[0].mxu0
      %v1436 = vadd.f32 0.0, %v1435
      %v1437 = vpop.f32.mrb[0].mxu0
      %1438 = vmatprep.mubr.f32.mxu0 0.0
      %1439 = vmatmul.mubr.f32.gmra.mrb[0].mxu0 %v1203
      %v1440 = vpop.f32.mrb[0].mxu0
      %v1441 = vadd.f32 0.0, %v1440
      %v1442 = vpop.f32.mrb[0].mxu0
      %1443 = vmatprep.mubr.f32.mxu0 0.0
      %1444 = vmatmul.mubr.f32.gmra.mrb[0].mxu0 %v1206
      %v1445 = vpop.f32.mrb[0].mxu0
      %v1446 = vadd.f32 0.0, %v1445
      %v1447 = vpop.f32.mrb[0].mxu0
      %1448 = vmatprep.mubr.f32.mxu0 0.0
      %1449 = vmatmul.mubr.f32.gmra.mrb[0].mxu0 %v1209
      %v1450 = vpop.f32.mrb[0].mxu0
      %v1451 = vadd.f32 0.0, %v1450
      %v1452 = vpop.f32.mrb[0].mxu0
      %1453 = vmatprep.mubr.f32.mxu0 0.0
      %1454 = vmatmul.mubr.f32.gmra.mrb[0].mxu0 %v1212
      %v1455 = vpop.f32.mrb[0].mxu0
      %v1456 = vadd.f32 0.0, %v1455
      %v1457 = vpop.f32.mrb[0].mxu0
      %1458 = vmatprep.mubr.f32.mxu0 0.0
      %1459 = vmatmul.mubr.f32.gmra.mrb[0].mxu0 %v1215
      %v1460 = vpop.f32.mrb[0].mxu0
      %v1461 = vadd.f32 0.0, %v1460
      %v1462 = vpop.f32.mrb[0].mxu0
      %1463 = vmatprep.mubr.f32.mxu0 0.0
      %1464 = vmatmul.mubr.f32.gmra.mrb[0].mxu0 %v1218
      %v1465 = vpop.f32.mrb[0].mxu0
      %v1466 = vadd.f32 0.0, %v1465
      %v1467 = vpop.f32.mrb[0].mxu0
      %1468 = vmatprep.mubr.f32.mxu0 0.0
      %1469 = vmatmul.mubr.f32.gmra.mrb[0].mxu0 %v1221
      %v1470 = vpop.f32.mrb[0].mxu0
      %v1471 = vadd.f32 0.0, %v1470
      %v1472 = vpop.f32.mrb[0].mxu0
      %1473 = vmatprep.mubr.f32.mxu0 0.0
      %1474 = vmatmul.mubr.f32.gmra.mrb[0].mxu0 %v1224
      %v1475 = vpop.f32.mrb[0].mxu0
      %v1476 = vadd.f32 0.0, %v1475
      %v1477 = vpop.f32.mrb[0].mxu0
      %1478 = vmatprep.mubr.f32.mxu0 0.0
      %1479 = vmatmul.mubr.f32.gmra.mrb[0].mxu0 %v1227
      %v1480 = vpop.f32.mrb[0].mxu0
      %v1481 = vadd.f32 0.0, %v1480
      %v1482 = vpop.f32.mrb[0].mxu0
      %1483 = vmatprep.mubr.f32.mxu0 0.0
      %1484 = vmatmul.mubr.f32.gmra.mrb[0].mxu0 %v1230
      %v1485 = vpop.f32.mrb[0].mxu0
      %v1486 = vadd.f32 0.0, %v1485
      %v1487 = vpop.f32.mrb[0].mxu0
      %1488 = vmatprep.mubr.f32.mxu0 0.0
      %1489 = vmatmul.mubr.f32.gmra.mrb[0].mxu0 %v1233
      %v1490 = vpop.f32.mrb[0].mxu0
      %v1491 = vadd.f32 0.0, %v1490
      %v1492 = vpop.f32.mrb[0].mxu0
      %1493 = vmatprep.mubr.f32.mxu0 0.0
      %1494 = vmatmul.mubr.f32.gmra.mrb[0].mxu0 %v1236
      %v1495 = vpop.f32.mrb[0].mxu0
      %v1496 = vadd.f32 0.0, %v1495
      %v1497 = vpop.f32.mrb[0].mxu0
      %1498 = vmatprep.mubr.f32.mxu0 0.0
      %1499 = vmatmul.mubr.f32.gmra.mrb[0].mxu0 %v1239
      %v1500 = vpop.f32.mrb[0].mxu0
      %v1501 = vadd.f32 0.0, %v1500
      %v1502 = vpop.f32.mrb[0].mxu0
      %1503 = vmatprep.mubr.f32.mxu0 0.0
      %1504 = vmatmul.mubr.f32.gmra.mrb[0].mxu0 %v1242
      %v1505 = vpop.f32.mrb[0].mxu0
      %v1506 = vadd.f32 0.0, %v1505
      %v1507 = vpop.f32.mrb[0].mxu0
      %1508 = vmatprep.mubr.f32.mxu0 0.0
      %1509 = vmatmul.mubr.f32.gmra.mrb[0].mxu0 %v1245
      %v1510 = vpop.f32.mrb[0].mxu0
      %v1511 = vadd.f32 0.0, %v1510
      %v1512 = vpop.f32.mrb[0].mxu0
      %1513 = vmatprep.mubr.f32.mxu0 0.0
      %1514 = vmatmul.mubr.f32.gmra.mrb[0].mxu0 %v1248
      %v1515 = vpop.f32.mrb[0].mxu0
      %v1516 = vadd.f32 0.0, %v1515
      %v1517 = vpop.f32.mrb[0].mxu0
      %1518 = vmatprep.mubr.f32.mxu0 0.0
      %1519 = vmatmul.mubr.f32.gmra.mrb[0].mxu0 %v1251
      %v1520 = vpop.f32.mrb[0].mxu0
      %v1521 = vadd.f32 0.0, %v1520
      %v1522 = vpop.f32.mrb[0].mxu0
      %1523 = vmatprep.mubr.f32.mxu0 0.0
      %1524 = vmatmul.mubr.f32.gmra.mrb[0].mxu0 %v1254
      %v1525 = vpop.f32.mrb[0].mxu0
      %v1526 = vadd.f32 0.0, %v1525
      %v1527 = vpop.f32.mrb[0].mxu0
      %1528 = vdwg.mxu0
      %v1529 = vadd.f32 %v887, %v1326
      %v1530 = vadd.f32 %v892, %v1331
      %v1531 = vadd.f32 %v897, %v1336
      %v1532 = vadd.f32 %v902, %v1341
      %v1533 = vadd.f32 %v907, %v1346
      %v1534 = vadd.f32 %v912, %v1351
      %v1535 = vadd.f32 %v917, %v1356
      %v1536 = vadd.f32 %v922, %v1361
      %v1537 = vadd.f32 %v927, %v1366
      %v1538 = vadd.f32 %v932, %v1371
      %v1539 = vadd.f32 %v937, %v1376
      %v1540 = vadd.f32 %v942, %v1381
      %v1541 = vadd.f32 %v947, %v1386
      %v1542 = vadd.f32 %v952, %v1391
      %v1543 = vadd.f32 %v957, %v1396
      %v1544 = vadd.f32 %v962, %v1401
      %v1545 = vadd.f32 %v967, %v1406
      %v1546 = vadd.f32 %v972, %v1411
      %v1547 = vadd.f32 %v977, %v1416
      %v1548 = vadd.f32 %v982, %v1421
      %v1549 = vadd.f32 %v987, %v1426
      %v1550 = vadd.f32 %v992, %v1431
      %v1551 = vadd.f32 %v997, %v1436
      %v1552 = vadd.f32 %v1002, %v1441
      %v1553 = vadd.f32 %v1007, %v1446
      %v1554 = vadd.f32 %v1012, %v1451
      %v1555 = vadd.f32 %v1017, %v1456
      %v1556 = vadd.f32 %v1022, %v1461
      %v1557 = vadd.f32 %v1027, %v1466
      %v1558 = vadd.f32 %v1032, %v1471
      %v1559 = vadd.f32 %v1037, %v1476
      %v1560 = vadd.f32 %v1042, %v1481
      %v1561 = vadd.f32 %v1047, %v1486
      %v1562 = vadd.f32 %v1052, %v1491
      %v1563 = vadd.f32 %v1057, %v1496
      %v1564 = vadd.f32 %v1062, %v1501
      %v1565 = vadd.f32 %v1067, %v1506
      %v1566 = vadd.f32 %v1072, %v1511
      %v1567 = vadd.f32 %v1077, %v1516
      %v1568 = vadd.f32 %v1082, %v1521
      %v1569 = vadd.f32 %v1087, %v1526
      %v1570 = vld [vmem:[%s200 + $0x23] sm:$0xff]
      %v1571 = vld [vmem:[%s200 + $0x2b] sm:$0xff]
      %v1572 = vld [vmem:[%s200 + $0x33] sm:$0xff]
      %v1573 = vld [vmem:[%s200 + $0x3b] sm:$0xff]
      %v1574 = vld [vmem:[%s200 + $0x43] sm:$0xff]
      %v1575 = vld [vmem:[%s200 + $0x4b] sm:$0xff]
      %v1576 = vld [vmem:[%s200 + $0x53] sm:$0xff]
      %v1577 = vld [vmem:[%s200 + $0x5b] sm:$0xff]
      %v1578 = vld [vmem:[%s200 + $0x63] sm:$0xff]
      %v1579 = vld [vmem:[%s200 + $0x6b] sm:$0xff]
      %v1580 = vld [vmem:[%s200 + $0x73] sm:$0xff]
      %v1581 = vld [vmem:[%s200 + $0x7b] sm:$0xff]
      %v1582 = vld [vmem:[%s200 + $0x83] sm:$0xff]
      %v1583 = vld [vmem:[%s200 + $0x8b] sm:$0xff]
      %v1584 = vld [vmem:[%s200 + $0x93] sm:$0xff]
      %v1585 = vld [vmem:[%s200 + $0x9b] sm:$0xff]
      %v1586 = vld [vmem:[%s200 + $0xa3] sm:$0xff]
      %v1587 = vld [vmem:[%s200 + $0xab] sm:$0xff]
      %v1588 = vld [vmem:[%s200 + $0xb3] sm:$0xff]
      %v1589 = vld [vmem:[%s200 + $0xbb] sm:$0xff]
      %v1590 = vld [vmem:[%s200 + $0xc3] sm:$0xff]
      %v1591 = vld [vmem:[%s200 + $0xcb] sm:$0xff]
      %v1592 = vld [vmem:[%s200 + $0xd3] sm:$0xff]
      %v1593 = vld [vmem:[%s200 + $0xdb] sm:$0xff]
      %v1594 = vld [vmem:[%s200 + $0xe3] sm:$0xff]
      %v1595 = vld [vmem:[%s200 + $0xeb] sm:$0xff]
      %v1596 = vld [vmem:[%s200 + $0xf3] sm:$0xff]
      %v1597 = vld [vmem:[%s200 + $0xfb] sm:$0xff]
      %v1598 = vld [vmem:[%s200 + $0x103] sm:$0xff]
      %v1599 = vld [vmem:[%s200 + $0x10b] sm:$0xff]
      %v1600 = vld [vmem:[%s200 + $0x113] sm:$0xff]
      %v1601 = vld [vmem:[%s200 + $0x11b] sm:$0xff]
      %v1602 = vld [vmem:[%s200 + $0x123] sm:$0xff]
      %v1603 = vld [vmem:[%s200 + $0x12b] sm:$0xff]
      %v1604 = vld [vmem:[%s200 + $0x133] sm:$0xff]
      %v1605 = vld [vmem:[%s200 + $0x13b] sm:$0xff]
      %v1606 = vld [vmem:[%s200 + $0x143] sm:$0xff]
      %v1607 = vld [vmem:[%s200 + $0x14b] sm:$0xff]
      %v1608 = vld [vmem:[%s200 + $0x153] sm:$0xff]
      %v1609 = vld [vmem:[%s200 + $0x15b] sm:$0xff]
      %v1610 = vld [vmem:[%s200 + $0x163] sm:$0xf]
      %s1611 = scalar_lea.vmem %s1, 12
      %v1612 = vld [vmem:[%s1611] sm:$0xf]
      %v1614 = vsel %vm296, %v1570, 0
      %v1617 = vsel %vm296, %v1571, 0
      %v1620 = vsel %vm296, %v1572, 0
      %v1623 = vsel %vm296, %v1573, 0
      %v1626 = vsel %vm296, %v1574, 0
      %v1629 = vsel %vm296, %v1575, 0
      %v1632 = vsel %vm296, %v1576, 0
      %v1635 = vsel %vm296, %v1577, 0
      %v1638 = vsel %vm296, %v1578, 0
      %v1641 = vsel %vm296, %v1579, 0
      %v1644 = vsel %vm296, %v1580, 0
      %v1647 = vsel %vm296, %v1581, 0
      %v1650 = vsel %vm296, %v1582, 0
      %v1653 = vsel %vm296, %v1583, 0
      %v1656 = vsel %vm296, %v1584, 0
      %v1659 = vsel %vm296, %v1585, 0
      %v1662 = vsel %vm296, %v1586, 0
      %v1665 = vsel %vm296, %v1587, 0
      %v1668 = vsel %vm296, %v1588, 0
      %v1671 = vsel %vm296, %v1589, 0
      %v1674 = vsel %vm296, %v1590, 0
      %v1677 = vsel %vm296, %v1591, 0
      %v1680 = vsel %vm296, %v1592, 0
      %v1683 = vsel %vm296, %v1593, 0
      %v1686 = vsel %vm296, %v1594, 0
      %v1689 = vsel %vm296, %v1595, 0
      %v1692 = vsel %vm296, %v1596, 0
      %v1695 = vsel %vm296, %v1597, 0
      %v1698 = vsel %vm296, %v1598, 0
      %v1701 = vsel %vm296, %v1599, 0
      %v1704 = vsel %vm296, %v1600, 0
      %v1707 = vsel %vm296, %v1601, 0
      %v1710 = vsel %vm296, %v1602, 0
      %v1713 = vsel %vm296, %v1603, 0
      %v1716 = vsel %vm296, %v1604, 0
      %v1719 = vsel %vm296, %v1605, 0
      %v1722 = vsel %vm296, %v1606, 0
      %v1725 = vsel %vm296, %v1607, 0
      %v1728 = vsel %vm296, %v1608, 0
      %v1731 = vsel %vm296, %v1609, 0
      %v1734 = vsel %vm296, %v1610, 0
      %v1737 = vsel %vm420, %v1612, 0
      %1739 = vmatprep.subr.mxu0 0.0
      %1740 = vmatpush1.msra.mxu0 %v1737
      %1741 = vmatprep.subr.mxu0 0.0
      %1742 = vmatpush1.msra.mxu0 0.0
      %1743 = vmatprep.subr.mxu0 0.0
      %1744 = vmatpush1.msra.mxu0 0.0
      %1745 = vmatprep.subr.mxu0 0.0
      %1746 = vmatpush1.msra.mxu0 0.0
      %1747 = vmatprep.subr.mxu0 0.0
      %1748 = vmatpush1.msra.mxu0 0.0
      %1749 = vmatprep.subr.mxu0 0.0
      %1750 = vmatpush1.msra.mxu0 0.0
      %1751 = vmatprep.subr.mxu0 0.0
      %1752 = vmatpush1.msra.mxu0 0.0
      %1753 = vmatprep.subr.mxu0 0.0
      %1754 = vmatpush1.msra.mxu0 0.0
      %1755 = vmatprep.subr.mxu0 0.0
      %1756 = vmatpush1.msra.mxu0 0.0
      %1757 = vmatprep.subr.mxu0 0.0
      %1758 = vmatpush1.msra.mxu0 0.0
      %1759 = vmatprep.subr.mxu0 0.0
      %1760 = vmatpush1.msra.mxu0 0.0
      %1761 = vmatprep.subr.mxu0 0.0
      %1762 = vmatpush1.msra.mxu0 0.0
      %1763 = vmatprep.subr.mxu0 0.0
      %1764 = vmatpush1.msra.mxu0 0.0
      %1765 = vmatprep.subr.mxu0 0.0
      %1766 = vmatpush1.msra.mxu0 0.0
      %1767 = vmatprep.subr.mxu0 0.0
      %1768 = vmatpush1.msra.mxu0 0.0
      %1769 = vmatprep.subr.mxu0 0.0
      %1770 = vmatpush1.msra.mxu0 0.0
      %1771 = vmatprep.subr.mxu0 0.0
      %1772 = vmatpush1.msra.mxu0 0.0
      %1773 = vmatprep.subr.mxu0 0.0
      %1774 = vmatpush1.msra.mxu0 0.0
      %1775 = vmatprep.subr.mxu0 0.0
      %1776 = vmatpush1.msra.mxu0 0.0
      %1777 = vmatprep.subr.mxu0 0.0
      %1778 = vmatpush1.msra.mxu0 0.0
      %1779 = vmatprep.subr.mxu0 0.0
      %1780 = vmatpush1.msra.mxu0 0.0
      %1781 = vmatprep.subr.mxu0 0.0
      %1782 = vmatpush1.msra.mxu0 0.0
      %1783 = vmatprep.subr.mxu0 0.0
      %1784 = vmatpush1.msra.mxu0 0.0
      %1785 = vmatprep.subr.mxu0 0.0
      %1786 = vmatpush1.msra.mxu0 0.0
      %1787 = vmatprep.subr.mxu0 0.0
      %1788 = vmatpush1.msra.mxu0 0.0
      %1789 = vmatprep.subr.mxu0 0.0
      %1790 = vmatpush1.msra.mxu0 0.0
      %1791 = vmatprep.subr.mxu0 0.0
      %1792 = vmatpush1.msra.mxu0 0.0
      %1793 = vmatprep.subr.mxu0 0.0
      %1794 = vmatpush1.msra.mxu0 0.0
      %1795 = vmatprep.subr.mxu0 0.0
      %1796 = vmatpush1.msra.mxu0 0.0
      %1797 = vmatprep.subr.mxu0 0.0
      %1798 = vmatpush1.msra.mxu0 0.0
      %1799 = vmatprep.subr.mxu0 0.0
      %1800 = vmatpush1.msra.mxu0 0.0
      %1801 = vmatprep.subr.mxu0 0.0
      %1802 = vmatpush1.msra.mxu0 0.0
      %1803 = vmatprep.mubr.f32.mxu0 0.0
      %1804 = vmatmul.mubr.f32.gmra.mrb[0].mxu0 %v1614
      %v1805 = vpop.f32.mrb[0].mxu0
      %v1806 = vadd.f32 0.0, %v1805
      %v1807 = vpop.f32.mrb[0].mxu0
      %1808 = vmatprep.mubr.f32.mxu0 0.0
      %1809 = vmatmul.mubr.f32.gmra.mrb[0].mxu0 %v1617
      %v1810 = vpop.f32.mrb[0].mxu0
      %v1811 = vadd.f32 0.0, %v1810
      %v1812 = vpop.f32.mrb[0].mxu0
      %1813 = vmatprep.mubr.f32.mxu0 0.0
      %1814 = vmatmul.mubr.f32.gmra.mrb[0].mxu0 %v1620
      %v1815 = vpop.f32.mrb[0].mxu0
      %v1816 = vadd.f32 0.0, %v1815
      %v1817 = vpop.f32.mrb[0].mxu0
      %1818 = vmatprep.mubr.f32.mxu0 0.0
      %1819 = vmatmul.mubr.f32.gmra.mrb[0].mxu0 %v1623
      %v1820 = vpop.f32.mrb[0].mxu0
      %v1821 = vadd.f32 0.0, %v1820
      %v1822 = vpop.f32.mrb[0].mxu0
      %1823 = vmatprep.mubr.f32.mxu0 0.0
      %1824 = vmatmul.mubr.f32.gmra.mrb[0].mxu0 %v1626
      %v1825 = vpop.f32.mrb[0].mxu0
      %v1826 = vadd.f32 0.0, %v1825
      %v1827 = vpop.f32.mrb[0].mxu0
      %1828 = vmatprep.mubr.f32.mxu0 0.0
      %1829 = vmatmul.mubr.f32.gmra.mrb[0].mxu0 %v1629
      %v1830 = vpop.f32.mrb[0].mxu0
      %v1831 = vadd.f32 0.0, %v1830
      %v1832 = vpop.f32.mrb[0].mxu0
      %1833 = vmatprep.mubr.f32.mxu0 0.0
      %1834 = vmatmul.mubr.f32.gmra.mrb[0].mxu0 %v1632
      %v1835 = vpop.f32.mrb[0].mxu0
      %v1836 = vadd.f32 0.0, %v1835
      %v1837 = vpop.f32.mrb[0].mxu0
      %1838 = vmatprep.mubr.f32.mxu0 0.0
      %1839 = vmatmul.mubr.f32.gmra.mrb[0].mxu0 %v1635
      %v1840 = vpop.f32.mrb[0].mxu0
      %v1841 = vadd.f32 0.0, %v1840
      %v1842 = vpop.f32.mrb[0].mxu0
      %1843 = vmatprep.mubr.f32.mxu0 0.0
      %1844 = vmatmul.mubr.f32.gmra.mrb[0].mxu0 %v1638
      %v1845 = vpop.f32.mrb[0].mxu0
      %v1846 = vadd.f32 0.0, %v1845
      %v1847 = vpop.f32.mrb[0].mxu0
      %1848 = vmatprep.mubr.f32.mxu0 0.0
      %1849 = vmatmul.mubr.f32.gmra.mrb[0].mxu0 %v1641
      %v1850 = vpop.f32.mrb[0].mxu0
      %v1851 = vadd.f32 0.0, %v1850
      %v1852 = vpop.f32.mrb[0].mxu0
      %1853 = vmatprep.mubr.f32.mxu0 0.0
      %1854 = vmatmul.mubr.f32.gmra.mrb[0].mxu0 %v1644
      %v1855 = vpop.f32.mrb[0].mxu0
      %v1856 = vadd.f32 0.0, %v1855
      %v1857 = vpop.f32.mrb[0].mxu0
      %1858 = vmatprep.mubr.f32.mxu0 0.0
      %1859 = vmatmul.mubr.f32.gmra.mrb[0].mxu0 %v1647
      %v1860 = vpop.f32.mrb[0].mxu0
      %v1861 = vadd.f32 0.0, %v1860
      %v1862 = vpop.f32.mrb[0].mxu0
      %1863 = vmatprep.mubr.f32.mxu0 0.0
      %1864 = vmatmul.mubr.f32.gmra.mrb[0].mxu0 %v1650
      %v1865 = vpop.f32.mrb[0].mxu0
      %v1866 = vadd.f32 0.0, %v1865
      %v1867 = vpop.f32.mrb[0].mxu0
      %1868 = vmatprep.mubr.f32.mxu0 0.0
      %1869 = vmatmul.mubr.f32.gmra.mrb[0].mxu0 %v1653
      %v1870 = vpop.f32.mrb[0].mxu0
      %v1871 = vadd.f32 0.0, %v1870
      %v1872 = vpop.f32.mrb[0].mxu0
      %1873 = vmatprep.mubr.f32.mxu0 0.0
      %1874 = vmatmul.mubr.f32.gmra.mrb[0].mxu0 %v1656
      %v1875 = vpop.f32.mrb[0].mxu0
      %v1876 = vadd.f32 0.0, %v1875
      %v1877 = vpop.f32.mrb[0].mxu0
      %1878 = vmatprep.mubr.f32.mxu0 0.0
      %1879 = vmatmul.mubr.f32.gmra.mrb[0].mxu0 %v1659
      %v1880 = vpop.f32.mrb[0].mxu0
      %v1881 = vadd.f32 0.0, %v1880
      %v1882 = vpop.f32.mrb[0].mxu0
      %1883 = vmatprep.mubr.f32.mxu0 0.0
      %1884 = vmatmul.mubr.f32.gmra.mrb[0].mxu0 %v1662
      %v1885 = vpop.f32.mrb[0].mxu0
      %v1886 = vadd.f32 0.0, %v1885
      %v1887 = vpop.f32.mrb[0].mxu0
      %1888 = vmatprep.mubr.f32.mxu0 0.0
      %1889 = vmatmul.mubr.f32.gmra.mrb[0].mxu0 %v1665
      %v1890 = vpop.f32.mrb[0].mxu0
      %v1891 = vadd.f32 0.0, %v1890
      %v1892 = vpop.f32.mrb[0].mxu0
      %1893 = vmatprep.mubr.f32.mxu0 0.0
      %1894 = vmatmul.mubr.f32.gmra.mrb[0].mxu0 %v1668
      %v1895 = vpop.f32.mrb[0].mxu0
      %v1896 = vadd.f32 0.0, %v1895
      %v1897 = vpop.f32.mrb[0].mxu0
      %1898 = vmatprep.mubr.f32.mxu0 0.0
      %1899 = vmatmul.mubr.f32.gmra.mrb[0].mxu0 %v1671
      %v1900 = vpop.f32.mrb[0].mxu0
      %v1901 = vadd.f32 0.0, %v1900
      %v1902 = vpop.f32.mrb[0].mxu0
      %1903 = vmatprep.mubr.f32.mxu0 0.0
      %1904 = vmatmul.mubr.f32.gmra.mrb[0].mxu0 %v1674
      %v1905 = vpop.f32.mrb[0].mxu0
      %v1906 = vadd.f32 0.0, %v1905
      %v1907 = vpop.f32.mrb[0].mxu0
      %1908 = vmatprep.mubr.f32.mxu0 0.0
      %1909 = vmatmul.mubr.f32.gmra.mrb[0].mxu0 %v1677
      %v1910 = vpop.f32.mrb[0].mxu0
      %v1911 = vadd.f32 0.0, %v1910
      %v1912 = vpop.f32.mrb[0].mxu0
      %1913 = vmatprep.mubr.f32.mxu0 0.0
      %1914 = vmatmul.mubr.f32.gmra.mrb[0].mxu0 %v1680
      %v1915 = vpop.f32.mrb[0].mxu0
      %v1916 = vadd.f32 0.0, %v1915
      %v1917 = vpop.f32.mrb[0].mxu0
      %1918 = vmatprep.mubr.f32.mxu0 0.0
      %1919 = vmatmul.mubr.f32.gmra.mrb[0].mxu0 %v1683
      %v1920 = vpop.f32.mrb[0].mxu0
      %v1921 = vadd.f32 0.0, %v1920
      %v1922 = vpop.f32.mrb[0].mxu0
      %1923 = vmatprep.mubr.f32.mxu0 0.0
      %1924 = vmatmul.mubr.f32.gmra.mrb[0].mxu0 %v1686
      %v1925 = vpop.f32.mrb[0].mxu0
      %v1926 = vadd.f32 0.0, %v1925
      %v1927 = vpop.f32.mrb[0].mxu0
      %1928 = vmatprep.mubr.f32.mxu0 0.0
      %1929 = vmatmul.mubr.f32.gmra.mrb[0].mxu0 %v1689
      %v1930 = vpop.f32.mrb[0].mxu0
      %v1931 = vadd.f32 0.0, %v1930
      %v1932 = vpop.f32.mrb[0].mxu0
      %1933 = vmatprep.mubr.f32.mxu0 0.0
      %1934 = vmatmul.mubr.f32.gmra.mrb[0].mxu0 %v1692
      %v1935 = vpop.f32.mrb[0].mxu0
      %v1936 = vadd.f32 0.0, %v1935
      %v1937 = vpop.f32.mrb[0].mxu0
      %1938 = vmatprep.mubr.f32.mxu0 0.0
      %1939 = vmatmul.mubr.f32.gmra.mrb[0].mxu0 %v1695
      %v1940 = vpop.f32.mrb[0].mxu0
      %v1941 = vadd.f32 0.0, %v1940
      %v1942 = vpop.f32.mrb[0].mxu0
      %1943 = vmatprep.mubr.f32.mxu0 0.0
      %1944 = vmatmul.mubr.f32.gmra.mrb[0].mxu0 %v1698
      %v1945 = vpop.f32.mrb[0].mxu0
      %v1946 = vadd.f32 0.0, %v1945
      %v1947 = vpop.f32.mrb[0].mxu0
      %1948 = vmatprep.mubr.f32.mxu0 0.0
      %1949 = vmatmul.mubr.f32.gmra.mrb[0].mxu0 %v1701
      %v1950 = vpop.f32.mrb[0].mxu0
      %v1951 = vadd.f32 0.0, %v1950
      %v1952 = vpop.f32.mrb[0].mxu0
      %1953 = vmatprep.mubr.f32.mxu0 0.0
      %1954 = vmatmul.mubr.f32.gmra.mrb[0].mxu0 %v1704
      %v1955 = vpop.f32.mrb[0].mxu0
      %v1956 = vadd.f32 0.0, %v1955
      %v1957 = vpop.f32.mrb[0].mxu0
      %1958 = vmatprep.mubr.f32.mxu0 0.0
      %1959 = vmatmul.mubr.f32.gmra.mrb[0].mxu0 %v1707
      %v1960 = vpop.f32.mrb[0].mxu0
      %v1961 = vadd.f32 0.0, %v1960
      %v1962 = vpop.f32.mrb[0].mxu0
      %1963 = vmatprep.mubr.f32.mxu0 0.0
      %1964 = vmatmul.mubr.f32.gmra.mrb[0].mxu0 %v1710
      %v1965 = vpop.f32.mrb[0].mxu0
      %v1966 = vadd.f32 0.0, %v1965
      %v1967 = vpop.f32.mrb[0].mxu0
      %1968 = vmatprep.mubr.f32.mxu0 0.0
      %1969 = vmatmul.mubr.f32.gmra.mrb[0].mxu0 %v1713
      %v1970 = vpop.f32.mrb[0].mxu0
      %v1971 = vadd.f32 0.0, %v1970
      %v1972 = vpop.f32.mrb[0].mxu0
      %1973 = vmatprep.mubr.f32.mxu0 0.0
      %1974 = vmatmul.mubr.f32.gmra.mrb[0].mxu0 %v1716
      %v1975 = vpop.f32.mrb[0].mxu0
      %v1976 = vadd.f32 0.0, %v1975
      %v1977 = vpop.f32.mrb[0].mxu0
      %1978 = vmatprep.mubr.f32.mxu0 0.0
      %1979 = vmatmul.mubr.f32.gmra.mrb[0].mxu0 %v1719
      %v1980 = vpop.f32.mrb[0].mxu0
      %v1981 = vadd.f32 0.0, %v1980
      %v1982 = vpop.f32.mrb[0].mxu0
      %1983 = vmatprep.mubr.f32.mxu0 0.0
      %1984 = vmatmul.mubr.f32.gmra.mrb[0].mxu0 %v1722
      %v1985 = vpop.f32.mrb[0].mxu0
      %v1986 = vadd.f32 0.0, %v1985
      %v1987 = vpop.f32.mrb[0].mxu0
      %1988 = vmatprep.mubr.f32.mxu0 0.0
      %1989 = vmatmul.mubr.f32.gmra.mrb[0].mxu0 %v1725
      %v1990 = vpop.f32.mrb[0].mxu0
      %v1991 = vadd.f32 0.0, %v1990
      %v1992 = vpop.f32.mrb[0].mxu0
      %1993 = vmatprep.mubr.f32.mxu0 0.0
      %1994 = vmatmul.mubr.f32.gmra.mrb[0].mxu0 %v1728
      %v1995 = vpop.f32.mrb[0].mxu0
      %v1996 = vadd.f32 0.0, %v1995
      %v1997 = vpop.f32.mrb[0].mxu0
      %1998 = vmatprep.mubr.f32.mxu0 0.0
      %1999 = vmatmul.mubr.f32.gmra.mrb[0].mxu0 %v1731
      %v2000 = vpop.f32.mrb[0].mxu0
      %v2001 = vadd.f32 0.0, %v2000
      %v2002 = vpop.f32.mrb[0].mxu0
      %2003 = vmatprep.mubr.f32.mxu0 0.0
      %2004 = vmatmul.mubr.f32.gmra.mrb[0].mxu0 %v1734
      %v2005 = vpop.f32.mrb[0].mxu0
      %v2006 = vadd.f32 0.0, %v2005
      %v2007 = vpop.f32.mrb[0].mxu0
      %2008 = vdwg.mxu0
      %v2009 = vadd.f32 %v1529, %v1806
      %v2010 = vadd.f32 %v1530, %v1811
      %v2011 = vadd.f32 %v1531, %v1816
      %v2012 = vadd.f32 %v1532, %v1821
      %v2013 = vadd.f32 %v1533, %v1826
      %v2014 = vadd.f32 %v1534, %v1831
      %v2015 = vadd.f32 %v1535, %v1836
      %v2016 = vadd.f32 %v1536, %v1841
      %v2017 = vadd.f32 %v1537, %v1846
      %v2018 = vadd.f32 %v1538, %v1851
      %v2019 = vadd.f32 %v1539, %v1856
      %v2020 = vadd.f32 %v1540, %v1861
      %v2021 = vadd.f32 %v1541, %v1866
      %v2022 = vadd.f32 %v1542, %v1871
      %v2023 = vadd.f32 %v1543, %v1876
      %v2024 = vadd.f32 %v1544, %v1881
      %v2025 = vadd.f32 %v1545, %v1886
      %v2026 = vadd.f32 %v1546, %v1891
      %v2027 = vadd.f32 %v1547, %v1896
      %v2028 = vadd.f32 %v1548, %v1901
      %v2029 = vadd.f32 %v1549, %v1906
      %v2030 = vadd.f32 %v1550, %v1911
      %v2031 = vadd.f32 %v1551, %v1916
      %v2032 = vadd.f32 %v1552, %v1921
      %v2033 = vadd.f32 %v1553, %v1926
      %v2034 = vadd.f32 %v1554, %v1931
      %v2035 = vadd.f32 %v1555, %v1936
      %v2036 = vadd.f32 %v1556, %v1941
      %v2037 = vadd.f32 %v1557, %v1946
      %v2038 = vadd.f32 %v1558, %v1951
      %v2039 = vadd.f32 %v1559, %v1956
      %v2040 = vadd.f32 %v1560, %v1961
      %v2041 = vadd.f32 %v1561, %v1966
      %v2042 = vadd.f32 %v1562, %v1971
      %v2043 = vadd.f32 %v1563, %v1976
      %v2044 = vadd.f32 %v1564, %v1981
      %v2045 = vadd.f32 %v1565, %v1986
      %v2046 = vadd.f32 %v1566, %v1991
      %v2047 = vadd.f32 %v1567, %v1996
      %v2048 = vadd.f32 %v1568, %v2001
      %v2049 = vadd.f32 %v1569, %v2006
      %v2050 = vld [vmem:[%s200 + $0x24] sm:$0xff]
      %v2051 = vld [vmem:[%s200 + $0x2c] sm:$0xff]
      %v2052 = vld [vmem:[%s200 + $0x34] sm:$0xff]
      %v2053 = vld [vmem:[%s200 + $0x3c] sm:$0xff]
      %v2054 = vld [vmem:[%s200 + $0x44] sm:$0xff]
      %v2055 = vld [vmem:[%s200 + $0x4c] sm:$0xff]
      %v2056 = vld [vmem:[%s200 + $0x54] sm:$0xff]
      %v2057 = vld [vmem:[%s200 + $0x5c] sm:$0xff]
      %v2058 = vld [vmem:[%s200 + $0x64] sm:$0xff]
      %v2059 = vld [vmem:[%s200 + $0x6c] sm:$0xff]
      %v2060 = vld [vmem:[%s200 + $0x74] sm:$0xff]
      %v2061 = vld [vmem:[%s200 + $0x7c] sm:$0xff]
      %v2062 = vld [vmem:[%s200 + $0x84] sm:$0xff]
      %v2063 = vld [vmem:[%s200 + $0x8c] sm:$0xff]
      %v2064 = vld [vmem:[%s200 + $0x94] sm:$0xff]
      %v2065 = vld [vmem:[%s200 + $0x9c] sm:$0xff]
      %v2066 = vld [vmem:[%s200 + $0xa4] sm:$0xff]
      %v2067 = vld [vmem:[%s200 + $0xac] sm:$0xff]
      %v2068 = vld [vmem:[%s200 + $0xb4] sm:$0xff]
      %v2069 = vld [vmem:[%s200 + $0xbc] sm:$0xff]
      %v2070 = vld [vmem:[%s200 + $0xc4] sm:$0xff]
      %v2071 = vld [vmem:[%s200 + $0xcc] sm:$0xff]
      %v2072 = vld [vmem:[%s200 + $0xd4] sm:$0xff]
      %v2073 = vld [vmem:[%s200 + $0xdc] sm:$0xff]
      %v2074 = vld [vmem:[%s200 + $0xe4] sm:$0xff]
      %v2075 = vld [vmem:[%s200 + $0xec] sm:$0xff]
      %v2076 = vld [vmem:[%s200 + $0xf4] sm:$0xff]
      %v2077 = vld [vmem:[%s200 + $0xfc] sm:$0xff]
      %v2078 = vld [vmem:[%s200 + $0x104] sm:$0xff]
      %v2079 = vld [vmem:[%s200 + $0x10c] sm:$0xff]
      %v2080 = vld [vmem:[%s200 + $0x114] sm:$0xff]
      %v2081 = vld [vmem:[%s200 + $0x11c] sm:$0xff]
      %v2082 = vld [vmem:[%s200 + $0x124] sm:$0xff]
      %v2083 = vld [vmem:[%s200 + $0x12c] sm:$0xff]
      %v2084 = vld [vmem:[%s200 + $0x134] sm:$0xff]
      %v2085 = vld [vmem:[%s200 + $0x13c] sm:$0xff]
      %v2086 = vld [vmem:[%s200 + $0x144] sm:$0xff]
      %v2087 = vld [vmem:[%s200 + $0x14c] sm:$0xff]
      %v2088 = vld [vmem:[%s200 + $0x154] sm:$0xff]
      %v2089 = vld [vmem:[%s200 + $0x15c] sm:$0xff]
      %v2090 = vld [vmem:[%s200 + $0x164] sm:$0xf]
      %s2091 = scalar_lea.vmem %s1, 16
      %v2092 = vld [vmem:[%s2091] sm:$0xf]
      %v2094 = vsel %vm296, %v2050, 0
      %v2097 = vsel %vm296, %v2051, 0
      %v2100 = vsel %vm296, %v2052, 0
      %v2103 = vsel %vm296, %v2053, 0
      %v2106 = vsel %vm296, %v2054, 0
      %v2109 = vsel %vm296, %v2055, 0
      %v2112 = vsel %vm296, %v2056, 0
      %v2115 = vsel %vm296, %v2057, 0
      %v2118 = vsel %vm296, %v2058, 0
      %v2121 = vsel %vm296, %v2059, 0
      %v2124 = vsel %vm296, %v2060, 0
      %v2127 = vsel %vm296, %v2061, 0
      %v2130 = vsel %vm296, %v2062, 0
      %v2133 = vsel %vm296, %v2063, 0
      %v2136 = vsel %vm296, %v2064, 0
      %v2139 = vsel %vm296, %v2065, 0
      %v2142 = vsel %vm296, %v2066, 0
      %v2145 = vsel %vm296, %v2067, 0
      %v2148 = vsel %vm296, %v2068, 0
      %v2151 = vsel %vm296, %v2069, 0
      %v2154 = vsel %vm296, %v2070, 0
      %v2157 = vsel %vm296, %v2071, 0
      %v2160 = vsel %vm296, %v2072, 0
      %v2163 = vsel %vm296, %v2073, 0
      %v2166 = vsel %vm296, %v2074, 0
      %v2169 = vsel %vm296, %v2075, 0
      %v2172 = vsel %vm296, %v2076, 0
      %v2175 = vsel %vm296, %v2077, 0
      %v2178 = vsel %vm296, %v2078, 0
      %v2181 = vsel %vm296, %v2079, 0
      %v2184 = vsel %vm296, %v2080, 0
      %v2187 = vsel %vm296, %v2081, 0
      %v2190 = vsel %vm296, %v2082, 0
      %v2193 = vsel %vm296, %v2083, 0
      %v2196 = vsel %vm296, %v2084, 0
      %v2199 = vsel %vm296, %v2085, 0
      %v2202 = vsel %vm296, %v2086, 0
      %v2205 = vsel %vm296, %v2087, 0
      %v2208 = vsel %vm296, %v2088, 0
      %v2211 = vsel %vm296, %v2089, 0
      %v2214 = vsel %vm296, %v2090, 0
      %v2217 = vsel %vm420, %v2092, 0
      %2219 = vmatprep.subr.mxu0 0.0
      %2220 = vmatpush1.msra.mxu0 %v2217
      %2221 = vmatprep.subr.mxu0 0.0
      %2222 = vmatpush1.msra.mxu0 0.0
      %2223 = vmatprep.subr.mxu0 0.0
      %2224 = vmatpush1.msra.mxu0 0.0
      %2225 = vmatprep.subr.mxu0 0.0
      %2226 = vmatpush1.msra.mxu0 0.0
      %2227 = vmatprep.subr.mxu0 0.0
      %2228 = vmatpush1.msra.mxu0 0.0
      %2229 = vmatprep.subr.mxu0 0.0
      %2230 = vmatpush1.msra.mxu0 0.0
      %2231 = vmatprep.subr.mxu0 0.0
      %2232 = vmatpush1.msra.mxu0 0.0
      %2233 = vmatprep.subr.mxu0 0.0
      %2234 = vmatpush1.msra.mxu0 0.0
      %2235 = vmatprep.subr.mxu0 0.0
      %2236 = vmatpush1.msra.mxu0 0.0
      %2237 = vmatprep.subr.mxu0 0.0
      %2238 = vmatpush1.msra.mxu0 0.0
      %2239 = vmatprep.subr.mxu0 0.0
      %2240 = vmatpush1.msra.mxu0 0.0
      %2241 = vmatprep.subr.mxu0 0.0
      %2242 = vmatpush1.msra.mxu0 0.0
      %2243 = vmatprep.subr.mxu0 0.0
      %2244 = vmatpush1.msra.mxu0 0.0
      %2245 = vmatprep.subr.mxu0 0.0
      %2246 = vmatpush1.msra.mxu0 0.0
      %2247 = vmatprep.subr.mxu0 0.0
      %2248 = vmatpush1.msra.mxu0 0.0
      %2249 = vmatprep.subr.mxu0 0.0
      %2250 = vmatpush1.msra.mxu0 0.0
      %2251 = vmatprep.subr.mxu0 0.0
      %2252 = vmatpush1.msra.mxu0 0.0
      %2253 = vmatprep.subr.mxu0 0.0
      %2254 = vmatpush1.msra.mxu0 0.0
      %2255 = vmatprep.subr.mxu0 0.0
      %2256 = vmatpush1.msra.mxu0 0.0
      %2257 = vmatprep.subr.mxu0 0.0
      %2258 = vmatpush1.msra.mxu0 0.0
      %2259 = vmatprep.subr.mxu0 0.0
      %2260 = vmatpush1.msra.mxu0 0.0
      %2261 = vmatprep.subr.mxu0 0.0
      %2262 = vmatpush1.msra.mxu0 0.0
      %2263 = vmatprep.subr.mxu0 0.0
      %2264 = vmatpush1.msra.mxu0 0.0
      %2265 = vmatprep.subr.mxu0 0.0
      %2266 = vmatpush1.msra.mxu0 0.0
      %2267 = vmatprep.subr.mxu0 0.0
      %2268 = vmatpush1.msra.mxu0 0.0
      %2269 = vmatprep.subr.mxu0 0.0
      %2270 = vmatpush1.msra.mxu0 0.0
      %2271 = vmatprep.subr.mxu0 0.0
      %2272 = vmatpush1.msra.mxu0 0.0
      %2273 = vmatprep.subr.mxu0 0.0
      %2274 = vmatpush1.msra.mxu0 0.0
      %2275 = vmatprep.subr.mxu0 0.0
      %2276 = vmatpush1.msra.mxu0 0.0
      %2277 = vmatprep.subr.mxu0 0.0
      %2278 = vmatpush1.msra.mxu0 0.0
      %2279 = vmatprep.subr.mxu0 0.0
      %2280 = vmatpush1.msra.mxu0 0.0
      %2281 = vmatprep.subr.mxu0 0.0
      %2282 = vmatpush1.msra.mxu0 0.0
      %2283 = vmatprep.mubr.f32.mxu0 0.0
      %2284 = vmatmul.mubr.f32.gmra.mrb[0].mxu0 %v2094
      %v2285 = vpop.f32.mrb[0].mxu0
      %v2286 = vadd.f32 0.0, %v2285
      %v2287 = vpop.f32.mrb[0].mxu0
      %2288 = vmatprep.mubr.f32.mxu0 0.0
      %2289 = vmatmul.mubr.f32.gmra.mrb[0].mxu0 %v2097
      %v2290 = vpop.f32.mrb[0].mxu0
      %v2291 = vadd.f32 0.0, %v2290
      %v2292 = vpop.f32.mrb[0].mxu0
      %2293 = vmatprep.mubr.f32.mxu0 0.0
      %2294 = vmatmul.mubr.f32.gmra.mrb[0].mxu0 %v2100
      %v2295 = vpop.f32.mrb[0].mxu0
      %v2296 = vadd.f32 0.0, %v2295
      %v2297 = vpop.f32.mrb[0].mxu0
      %2298 = vmatprep.mubr.f32.mxu0 0.0
      %2299 = vmatmul.mubr.f32.gmra.mrb[0].mxu0 %v2103
      %v2300 = vpop.f32.mrb[0].mxu0
      %v2301 = vadd.f32 0.0, %v2300
      %v2302 = vpop.f32.mrb[0].mxu0
      %2303 = vmatprep.mubr.f32.mxu0 0.0
      %2304 = vmatmul.mubr.f32.gmra.mrb[0].mxu0 %v2106
      %v2305 = vpop.f32.mrb[0].mxu0
      %v2306 = vadd.f32 0.0, %v2305
      %v2307 = vpop.f32.mrb[0].mxu0
      %2308 = vmatprep.mubr.f32.mxu0 0.0
      %2309 = vmatmul.mubr.f32.gmra.mrb[0].mxu0 %v2109
      %v2310 = vpop.f32.mrb[0].mxu0
      %v2311 = vadd.f32 0.0, %v2310
      %v2312 = vpop.f32.mrb[0].mxu0
      %2313 = vmatprep.mubr.f32.mxu0 0.0
      %2314 = vmatmul.mubr.f32.gmra.mrb[0].mxu0 %v2112
      %v2315 = vpop.f32.mrb[0].mxu0
      %v2316 = vadd.f32 0.0, %v2315
      %v2317 = vpop.f32.mrb[0].mxu0
      %2318 = vmatprep.mubr.f32.mxu0 0.0
      %2319 = vmatmul.mubr.f32.gmra.mrb[0].mxu0 %v2115
      %v2320 = vpop.f32.mrb[0].mxu0
      %v2321 = vadd.f32 0.0, %v2320
      %v2322 = vpop.f32.mrb[0].mxu0
      %2323 = vmatprep.mubr.f32.mxu0 0.0
      %2324 = vmatmul.mubr.f32.gmra.mrb[0].mxu0 %v2118
      %v2325 = vpop.f32.mrb[0].mxu0
      %v2326 = vadd.f32 0.0, %v2325
      %v2327 = vpop.f32.mrb[0].mxu0
      %2328 = vmatprep.mubr.f32.mxu0 0.0
      %2329 = vmatmul.mubr.f32.gmra.mrb[0].mxu0 %v2121
      %v2330 = vpop.f32.mrb[0].mxu0
      %v2331 = vadd.f32 0.0, %v2330
      %v2332 = vpop.f32.mrb[0].mxu0
      %2333 = vmatprep.mubr.f32.mxu0 0.0
      %2334 = vmatmul.mubr.f32.gmra.mrb[0].mxu0 %v2124
      %v2335 = vpop.f32.mrb[0].mxu0
      %v2336 = vadd.f32 0.0, %v2335
      %v2337 = vpop.f32.mrb[0].mxu0
      %2338 = vmatprep.mubr.f32.mxu0 0.0
      %2339 = vmatmul.mubr.f32.gmra.mrb[0].mxu0 %v2127
      %v2340 = vpop.f32.mrb[0].mxu0
      %v2341 = vadd.f32 0.0, %v2340
      %v2342 = vpop.f32.mrb[0].mxu0
      %2343 = vmatprep.mubr.f32.mxu0 0.0
      %2344 = vmatmul.mubr.f32.gmra.mrb[0].mxu0 %v2130
      %v2345 = vpop.f32.mrb[0].mxu0
      %v2346 = vadd.f32 0.0, %v2345
      %v2347 = vpop.f32.mrb[0].mxu0
      %2348 = vmatprep.mubr.f32.mxu0 0.0
      %2349 = vmatmul.mubr.f32.gmra.mrb[0].mxu0 %v2133
      %v2350 = vpop.f32.mrb[0].mxu0
      %v2351 = vadd.f32 0.0, %v2350
      %v2352 = vpop.f32.mrb[0].mxu0
      %2353 = vmatprep.mubr.f32.mxu0 0.0
      %2354 = vmatmul.mubr.f32.gmra.mrb[0].mxu0 %v2136
      %v2355 = vpop.f32.mrb[0].mxu0
      %v2356 = vadd.f32 0.0, %v2355
      %v2357 = vpop.f32.mrb[0].mxu0
      %2358 = vmatprep.mubr.f32.mxu0 0.0
      %2359 = vmatmul.mubr.f32.gmra.mrb[0].mxu0 %v2139
      %v2360 = vpop.f32.mrb[0].mxu0
      %v2361 = vadd.f32 0.0, %v2360
      %v2362 = vpop.f32.mrb[0].mxu0
      %2363 = vmatprep.mubr.f32.mxu0 0.0
      %2364 = vmatmul.mubr.f32.gmra.mrb[0].mxu0 %v2142
      %v2365 = vpop.f32.mrb[0].mxu0
      %v2366 = vadd.f32 0.0, %v2365
      %v2367 = vpop.f32.mrb[0].mxu0
      %2368 = vmatprep.mubr.f32.mxu0 0.0
      %2369 = vmatmul.mubr.f32.gmra.mrb[0].mxu0 %v2145
      %v2370 = vpop.f32.mrb[0].mxu0
      %v2371 = vadd.f32 0.0, %v2370
      %v2372 = vpop.f32.mrb[0].mxu0
      %2373 = vmatprep.mubr.f32.mxu0 0.0
      %2374 = vmatmul.mubr.f32.gmra.mrb[0].mxu0 %v2148
      %v2375 = vpop.f32.mrb[0].mxu0
      %v2376 = vadd.f32 0.0, %v2375
      %v2377 = vpop.f32.mrb[0].mxu0
      %2378 = vmatprep.mubr.f32.mxu0 0.0
      %2379 = vmatmul.mubr.f32.gmra.mrb[0].mxu0 %v2151
      %v2380 = vpop.f32.mrb[0].mxu0
      %v2381 = vadd.f32 0.0, %v2380
      %v2382 = vpop.f32.mrb[0].mxu0
      %2383 = vmatprep.mubr.f32.mxu0 0.0
      %2384 = vmatmul.mubr.f32.gmra.mrb[0].mxu0 %v2154
      %v2385 = vpop.f32.mrb[0].mxu0
      %v2386 = vadd.f32 0.0, %v2385
      %v2387 = vpop.f32.mrb[0].mxu0
      %2388 = vmatprep.mubr.f32.mxu0 0.0
      %2389 = vmatmul.mubr.f32.gmra.mrb[0].mxu0 %v2157
      %v2390 = vpop.f32.mrb[0].mxu0
      %v2391 = vadd.f32 0.0, %v2390
      %v2392 = vpop.f32.mrb[0].mxu0
      %2393 = vmatprep.mubr.f32.mxu0 0.0
      %2394 = vmatmul.mubr.f32.gmra.mrb[0].mxu0 %v2160
      %v2395 = vpop.f32.mrb[0].mxu0
      %v2396 = vadd.f32 0.0, %v2395
      %v2397 = vpop.f32.mrb[0].mxu0
      %2398 = vmatprep.mubr.f32.mxu0 0.0
      %2399 = vmatmul.mubr.f32.gmra.mrb[0].mxu0 %v2163
      %v2400 = vpop.f32.mrb[0].mxu0
      %v2401 = vadd.f32 0.0, %v2400
      %v2402 = vpop.f32.mrb[0].mxu0
      %2403 = vmatprep.mubr.f32.mxu0 0.0
      %2404 = vmatmul.mubr.f32.gmra.mrb[0].mxu0 %v2166
      %v2405 = vpop.f32.mrb[0].mxu0
      %v2406 = vadd.f32 0.0, %v2405
      %v2407 = vpop.f32.mrb[0].mxu0
      %2408 = vmatprep.mubr.f32.mxu0 0.0
      %2409 = vmatmul.mubr.f32.gmra.mrb[0].mxu0 %v2169
      %v2410 = vpop.f32.mrb[0].mxu0
      %v2411 = vadd.f32 0.0, %v2410
      %v2412 = vpop.f32.mrb[0].mxu0
      %2413 = vmatprep.mubr.f32.mxu0 0.0
      %2414 = vmatmul.mubr.f32.gmra.mrb[0].mxu0 %v2172
      %v2415 = vpop.f32.mrb[0].mxu0
      %v2416 = vadd.f32 0.0, %v2415
      %v2417 = vpop.f32.mrb[0].mxu0
      %2418 = vmatprep.mubr.f32.mxu0 0.0
      %2419 = vmatmul.mubr.f32.gmra.mrb[0].mxu0 %v2175
      %v2420 = vpop.f32.mrb[0].mxu0
      %v2421 = vadd.f32 0.0, %v2420
      %v2422 = vpop.f32.mrb[0].mxu0
      %2423 = vmatprep.mubr.f32.mxu0 0.0
      %2424 = vmatmul.mubr.f32.gmra.mrb[0].mxu0 %v2178
      %v2425 = vpop.f32.mrb[0].mxu0
      %v2426 = vadd.f32 0.0, %v2425
      %v2427 = vpop.f32.mrb[0].mxu0
      %2428 = vmatprep.mubr.f32.mxu0 0.0
      %2429 = vmatmul.mubr.f32.gmra.mrb[0].mxu0 %v2181
      %v2430 = vpop.f32.mrb[0].mxu0
      %v2431 = vadd.f32 0.0, %v2430
      %v2432 = vpop.f32.mrb[0].mxu0
      %2433 = vmatprep.mubr.f32.mxu0 0.0
      %2434 = vmatmul.mubr.f32.gmra.mrb[0].mxu0 %v2184
      %v2435 = vpop.f32.mrb[0].mxu0
      %v2436 = vadd.f32 0.0, %v2435
      %v2437 = vpop.f32.mrb[0].mxu0
      %2438 = vmatprep.mubr.f32.mxu0 0.0
      %2439 = vmatmul.mubr.f32.gmra.mrb[0].mxu0 %v2187
      %v2440 = vpop.f32.mrb[0].mxu0
      %v2441 = vadd.f32 0.0, %v2440
      %v2442 = vpop.f32.mrb[0].mxu0
      %2443 = vmatprep.mubr.f32.mxu0 0.0
      %2444 = vmatmul.mubr.f32.gmra.mrb[0].mxu0 %v2190
      %v2445 = vpop.f32.mrb[0].mxu0
      %v2446 = vadd.f32 0.0, %v2445
      %v2447 = vpop.f32.mrb[0].mxu0
      %2448 = vmatprep.mubr.f32.mxu0 0.0
      %2449 = vmatmul.mubr.f32.gmra.mrb[0].mxu0 %v2193
      %v2450 = vpop.f32.mrb[0].mxu0
      %v2451 = vadd.f32 0.0, %v2450
      %v2452 = vpop.f32.mrb[0].mxu0
      %2453 = vmatprep.mubr.f32.mxu0 0.0
      %2454 = vmatmul.mubr.f32.gmra.mrb[0].mxu0 %v2196
      %v2455 = vpop.f32.mrb[0].mxu0
      %v2456 = vadd.f32 0.0, %v2455
      %v2457 = vpop.f32.mrb[0].mxu0
      %2458 = vmatprep.mubr.f32.mxu0 0.0
      %2459 = vmatmul.mubr.f32.gmra.mrb[0].mxu0 %v2199
      %v2460 = vpop.f32.mrb[0].mxu0
      %v2461 = vadd.f32 0.0, %v2460
      %v2462 = vpop.f32.mrb[0].mxu0
      %2463 = vmatprep.mubr.f32.mxu0 0.0
      %2464 = vmatmul.mubr.f32.gmra.mrb[0].mxu0 %v2202
      %v2465 = vpop.f32.mrb[0].mxu0
      %v2466 = vadd.f32 0.0, %v2465
      %v2467 = vpop.f32.mrb[0].mxu0
      %2468 = vmatprep.mubr.f32.mxu0 0.0
      %2469 = vmatmul.mubr.f32.gmra.mrb[0].mxu0 %v2205
      %v2470 = vpop.f32.mrb[0].mxu0
      %v2471 = vadd.f32 0.0, %v2470
      %v2472 = vpop.f32.mrb[0].mxu0
      %2473 = vmatprep.mubr.f32.mxu0 0.0
      %2474 = vmatmul.mubr.f32.gmra.mrb[0].mxu0 %v2208
      %v2475 = vpop.f32.mrb[0].mxu0
      %v2476 = vadd.f32 0.0, %v2475
      %v2477 = vpop.f32.mrb[0].mxu0
      %2478 = vmatprep.mubr.f32.mxu0 0.0
      %2479 = vmatmul.mubr.f32.gmra.mrb[0].mxu0 %v2211
      %v2480 = vpop.f32.mrb[0].mxu0
      %v2481 = vadd.f32 0.0, %v2480
      %v2482 = vpop.f32.mrb[0].mxu0
      %2483 = vmatprep.mubr.f32.mxu0 0.0
      %2484 = vmatmul.mubr.f32.gmra.mrb[0].mxu0 %v2214
      %v2485 = vpop.f32.mrb[0].mxu0
      %v2486 = vadd.f32 0.0, %v2485
      %v2487 = vpop.f32.mrb[0].mxu0
      %2488 = vdwg.mxu0
      %v2489 = vadd.f32 %v2009, %v2286
      %v2490 = vadd.f32 %v2010, %v2291
      %v2491 = vadd.f32 %v2011, %v2296
      %v2492 = vadd.f32 %v2012, %v2301
      %v2493 = vadd.f32 %v2013, %v2306
      %v2494 = vadd.f32 %v2014, %v2311
      %v2495 = vadd.f32 %v2015, %v2316
      %v2496 = vadd.f32 %v2016, %v2321
      %v2497 = vadd.f32 %v2017, %v2326
      %v2498 = vadd.f32 %v2018, %v2331
      %v2499 = vadd.f32 %v2019, %v2336
      %v2500 = vadd.f32 %v2020, %v2341
      %v2501 = vadd.f32 %v2021, %v2346
      %v2502 = vadd.f32 %v2022, %v2351
      %v2503 = vadd.f32 %v2023, %v2356
      %v2504 = vadd.f32 %v2024, %v2361
      %v2505 = vadd.f32 %v2025, %v2366
      %v2506 = vadd.f32 %v2026, %v2371
      %v2507 = vadd.f32 %v2027, %v2376
      %v2508 = vadd.f32 %v2028, %v2381
      %v2509 = vadd.f32 %v2029, %v2386
      %v2510 = vadd.f32 %v2030, %v2391
      %v2511 = vadd.f32 %v2031, %v2396
      %v2512 = vadd.f32 %v2032, %v2401
      %v2513 = vadd.f32 %v2033, %v2406
      %v2514 = vadd.f32 %v2034, %v2411
      %v2515 = vadd.f32 %v2035, %v2416
      %v2516 = vadd.f32 %v2036, %v2421
      %v2517 = vadd.f32 %v2037, %v2426
      %v2518 = vadd.f32 %v2038, %v2431
      %v2519 = vadd.f32 %v2039, %v2436
      %v2520 = vadd.f32 %v2040, %v2441
      %v2521 = vadd.f32 %v2041, %v2446
      %v2522 = vadd.f32 %v2042, %v2451
      %v2523 = vadd.f32 %v2043, %v2456
      %v2524 = vadd.f32 %v2044, %v2461
      %v2525 = vadd.f32 %v2045, %v2466
      %v2526 = vadd.f32 %v2046, %v2471
      %v2527 = vadd.f32 %v2047, %v2476
      %v2528 = vadd.f32 %v2048, %v2481
      %v2529 = vadd.f32 %v2049, %v2486
      %v2530 = vld [vmem:[%s200 + $0x25] sm:$0xff]
      %v2531 = vld [vmem:[%s200 + $0x2d] sm:$0xff]
      %v2532 = vld [vmem:[%s200 + $0x35] sm:$0xff]
      %v2533 = vld [vmem:[%s200 + $0x3d] sm:$0xff]
      %v2534 = vld [vmem:[%s200 + $0x45] sm:$0xff]
      %v2535 = vld [vmem:[%s200 + $0x4d] sm:$0xff]
      %v2536 = vld [vmem:[%s200 + $0x55] sm:$0xff]
      %v2537 = vld [vmem:[%s200 + $0x5d] sm:$0xff]
      %v2538 = vld [vmem:[%s200 + $0x65] sm:$0xff]
      %v2539 = vld [vmem:[%s200 + $0x6d] sm:$0xff]
      %v2540 = vld [vmem:[%s200 + $0x75] sm:$0xff]
      %v2541 = vld [vmem:[%s200 + $0x7d] sm:$0xff]
      %v2542 = vld [vmem:[%s200 + $0x85] sm:$0xff]
      %v2543 = vld [vmem:[%s200 + $0x8d] sm:$0xff]
      %v2544 = vld [vmem:[%s200 + $0x95] sm:$0xff]
      %v2545 = vld [vmem:[%s200 + $0x9d] sm:$0xff]
      %v2546 = vld [vmem:[%s200 + $0xa5] sm:$0xff]
      %v2547 = vld [vmem:[%s200 + $0xad] sm:$0xff]
      %v2548 = vld [vmem:[%s200 + $0xb5] sm:$0xff]
      %v2549 = vld [vmem:[%s200 + $0xbd] sm:$0xff]
      %v2550 = vld [vmem:[%s200 + $0xc5] sm:$0xff]
      %v2551 = vld [vmem:[%s200 + $0xcd] sm:$0xff]
      %v2552 = vld [vmem:[%s200 + $0xd5] sm:$0xff]
      %v2553 = vld [vmem:[%s200 + $0xdd] sm:$0xff]
      %v2554 = vld [vmem:[%s200 + $0xe5] sm:$0xff]
      %v2555 = vld [vmem:[%s200 + $0xed] sm:$0xff]
      %v2556 = vld [vmem:[%s200 + $0xf5] sm:$0xff]
      %v2557 = vld [vmem:[%s200 + $0xfd] sm:$0xff]
      %v2558 = vld [vmem:[%s200 + $0x105] sm:$0xff]
      %v2559 = vld [vmem:[%s200 + $0x10d] sm:$0xff]
      %v2560 = vld [vmem:[%s200 + $0x115] sm:$0xff]
      %v2561 = vld [vmem:[%s200 + $0x11d] sm:$0xff]
      %v2562 = vld [vmem:[%s200 + $0x125] sm:$0xff]
      %v2563 = vld [vmem:[%s200 + $0x12d] sm:$0xff]
      %v2564 = vld [vmem:[%s200 + $0x135] sm:$0xff]
      %v2565 = vld [vmem:[%s200 + $0x13d] sm:$0xff]
      %v2566 = vld [vmem:[%s200 + $0x145] sm:$0xff]
      %v2567 = vld [vmem:[%s200 + $0x14d] sm:$0xff]
      %v2568 = vld [vmem:[%s200 + $0x155] sm:$0xff]
      %v2569 = vld [vmem:[%s200 + $0x15d] sm:$0xff]
      %v2570 = vld [vmem:[%s200 + $0x165] sm:$0xf]
      %s2571 = scalar_lea.vmem %s1, 20
      %v2572 = vld [vmem:[%s2571] sm:$0xf]
      %v2574 = vsel %vm296, %v2530, 0
      %v2577 = vsel %vm296, %v2531, 0
      %v2580 = vsel %vm296, %v2532, 0
      %v2583 = vsel %vm296, %v2533, 0
      %v2586 = vsel %vm296, %v2534, 0
      %v2589 = vsel %vm296, %v2535, 0
      %v2592 = vsel %vm296, %v2536, 0
      %v2595 = vsel %vm296, %v2537, 0
      %v2598 = vsel %vm296, %v2538, 0
      %v2601 = vsel %vm296, %v2539, 0
      %v2604 = vsel %vm296, %v2540, 0
      %v2607 = vsel %vm296, %v2541, 0
      %v2610 = vsel %vm296, %v2542, 0
      %v2613 = vsel %vm296, %v2543, 0
      %v2616 = vsel %vm296, %v2544, 0
      %v2619 = vsel %vm296, %v2545, 0
      %v2622 = vsel %vm296, %v2546, 0
      %v2625 = vsel %vm296, %v2547, 0
      %v2628 = vsel %vm296, %v2548, 0
      %v2631 = vsel %vm296, %v2549, 0
      %v2634 = vsel %vm296, %v2550, 0
      %v2637 = vsel %vm296, %v2551, 0
      %v2640 = vsel %vm296, %v2552, 0
      %v2643 = vsel %vm296, %v2553, 0
      %v2646 = vsel %vm296, %v2554, 0
      %v2649 = vsel %vm296, %v2555, 0
      %v2652 = vsel %vm296, %v2556, 0
      %v2655 = vsel %vm296, %v2557, 0
      %v2658 = vsel %vm296, %v2558, 0
      %v2661 = vsel %vm296, %v2559, 0
      %v2664 = vsel %vm296, %v2560, 0
      %v2667 = vsel %vm296, %v2561, 0
      %v2670 = vsel %vm296, %v2562, 0
      %v2673 = vsel %vm296, %v2563, 0
      %v2676 = vsel %vm296, %v2564, 0
      %v2679 = vsel %vm296, %v2565, 0
      %v2682 = vsel %vm296, %v2566, 0
      %v2685 = vsel %vm296, %v2567, 0
      %v2688 = vsel %vm296, %v2568, 0
      %v2691 = vsel %vm296, %v2569, 0
      %v2694 = vsel %vm296, %v2570, 0
      %v2697 = vsel %vm420, %v2572, 0
      %2699 = vmatprep.subr.mxu0 0.0
      %2700 = vmatpush1.msra.mxu0 %v2697
      %2701 = vmatprep.subr.mxu0 0.0
      %2702 = vmatpush1.msra.mxu0 0.0
      %2703 = vmatprep.subr.mxu0 0.0
      %2704 = vmatpush1.msra.mxu0 0.0
      %2705 = vmatprep.subr.mxu0 0.0
      %2706 = vmatpush1.msra.mxu0 0.0
      %2707 = vmatprep.subr.mxu0 0.0
      %2708 = vmatpush1.msra.mxu0 0.0
      %2709 = vmatprep.subr.mxu0 0.0
      %2710 = vmatpush1.msra.mxu0 0.0
      %2711 = vmatprep.subr.mxu0 0.0
      %2712 = vmatpush1.msra.mxu0 0.0
      %2713 = vmatprep.subr.mxu0 0.0
      %2714 = vmatpush1.msra.mxu0 0.0
      %2715 = vmatprep.subr.mxu0 0.0
      %2716 = vmatpush1.msra.mxu0 0.0
      %2717 = vmatprep.subr.mxu0 0.0
      %2718 = vmatpush1.msra.mxu0 0.0
      %2719 = vmatprep.subr.mxu0 0.0
      %2720 = vmatpush1.msra.mxu0 0.0
      %2721 = vmatprep.subr.mxu0 0.0
      %2722 = vmatpush1.msra.mxu0 0.0
      %2723 = vmatprep.subr.mxu0 0.0
      %2724 = vmatpush1.msra.mxu0 0.0
      %2725 = vmatprep.subr.mxu0 0.0
      %2726 = vmatpush1.msra.mxu0 0.0
      %2727 = vmatprep.subr.mxu0 0.0
      %2728 = vmatpush1.msra.mxu0 0.0
      %2729 = vmatprep.subr.mxu0 0.0
      %2730 = vmatpush1.msra.mxu0 0.0
      %2731 = vmatprep.subr.mxu0 0.0
      %2732 = vmatpush1.msra.mxu0 0.0
      %2733 = vmatprep.subr.mxu0 0.0
      %2734 = vmatpush1.msra.mxu0 0.0
      %2735 = vmatprep.subr.mxu0 0.0
      %2736 = vmatpush1.msra.mxu0 0.0
      %2737 = vmatprep.subr.mxu0 0.0
      %2738 = vmatpush1.msra.mxu0 0.0
      %2739 = vmatprep.subr.mxu0 0.0
      %2740 = vmatpush1.msra.mxu0 0.0
      %2741 = vmatprep.subr.mxu0 0.0
      %2742 = vmatpush1.msra.mxu0 0.0
      %2743 = vmatprep.subr.mxu0 0.0
      %2744 = vmatpush1.msra.mxu0 0.0
      %2745 = vmatprep.subr.mxu0 0.0
      %2746 = vmatpush1.msra.mxu0 0.0
      %2747 = vmatprep.subr.mxu0 0.0
      %2748 = vmatpush1.msra.mxu0 0.0
      %2749 = vmatprep.subr.mxu0 0.0
      %2750 = vmatpush1.msra.mxu0 0.0
      %2751 = vmatprep.subr.mxu0 0.0
      %2752 = vmatpush1.msra.mxu0 0.0
      %2753 = vmatprep.subr.mxu0 0.0
      %2754 = vmatpush1.msra.mxu0 0.0
      %2755 = vmatprep.subr.mxu0 0.0
      %2756 = vmatpush1.msra.mxu0 0.0
      %2757 = vmatprep.subr.mxu0 0.0
      %2758 = vmatpush1.msra.mxu0 0.0
      %2759 = vmatprep.subr.mxu0 0.0
      %2760 = vmatpush1.msra.mxu0 0.0
      %2761 = vmatprep.subr.mxu0 0.0
      %2762 = vmatpush1.msra.mxu0 0.0
      %2763 = vmatprep.mubr.f32.mxu0 0.0
      %2764 = vmatmul.mubr.f32.gmra.mrb[0].mxu0 %v2574
      %v2765 = vpop.f32.mrb[0].mxu0
      %v2766 = vadd.f32 0.0, %v2765
      %v2767 = vpop.f32.mrb[0].mxu0
      %2768 = vmatprep.mubr.f32.mxu0 0.0
      %2769 = vmatmul.mubr.f32.gmra.mrb[0].mxu0 %v2577
      %v2770 = vpop.f32.mrb[0].mxu0
      %v2771 = vadd.f32 0.0, %v2770
      %v2772 = vpop.f32.mrb[0].mxu0
      %2773 = vmatprep.mubr.f32.mxu0 0.0
      %2774 = vmatmul.mubr.f32.gmra.mrb[0].mxu0 %v2580
      %v2775 = vpop.f32.mrb[0].mxu0
      %v2776 = vadd.f32 0.0, %v2775
      %v2777 = vpop.f32.mrb[0].mxu0
      %2778 = vmatprep.mubr.f32.mxu0 0.0
      %2779 = vmatmul.mubr.f32.gmra.mrb[0].mxu0 %v2583
      %v2780 = vpop.f32.mrb[0].mxu0
      %v2781 = vadd.f32 0.0, %v2780
      %v2782 = vpop.f32.mrb[0].mxu0
      %2783 = vmatprep.mubr.f32.mxu0 0.0
      %2784 = vmatmul.mubr.f32.gmra.mrb[0].mxu0 %v2586
      %v2785 = vpop.f32.mrb[0].mxu0
      %v2786 = vadd.f32 0.0, %v2785
      %v2787 = vpop.f32.mrb[0].mxu0
      %2788 = vmatprep.mubr.f32.mxu0 0.0
      %2789 = vmatmul.mubr.f32.gmra.mrb[0].mxu0 %v2589
      %v2790 = vpop.f32.mrb[0].mxu0
      %v2791 = vadd.f32 0.0, %v2790
      %v2792 = vpop.f32.mrb[0].mxu0
      %2793 = vmatprep.mubr.f32.mxu0 0.0
      %2794 = vmatmul.mubr.f32.gmra.mrb[0].mxu0 %v2592
      %v2795 = vpop.f32.mrb[0].mxu0
      %v2796 = vadd.f32 0.0, %v2795
      %v2797 = vpop.f32.mrb[0].mxu0
      %2798 = vmatprep.mubr.f32.mxu0 0.0
      %2799 = vmatmul.mubr.f32.gmra.mrb[0].mxu0 %v2595
      %v2800 = vpop.f32.mrb[0].mxu0
      %v2801 = vadd.f32 0.0, %v2800
      %v2802 = vpop.f32.mrb[0].mxu0
      %2803 = vmatprep.mubr.f32.mxu0 0.0
      %2804 = vmatmul.mubr.f32.gmra.mrb[0].mxu0 %v2598
      %v2805 = vpop.f32.mrb[0].mxu0
      %v2806 = vadd.f32 0.0, %v2805
      %v2807 = vpop.f32.mrb[0].mxu0
      %2808 = vmatprep.mubr.f32.mxu0 0.0
      %2809 = vmatmul.mubr.f32.gmra.mrb[0].mxu0 %v2601
      %v2810 = vpop.f32.mrb[0].mxu0
      %v2811 = vadd.f32 0.0, %v2810
      %v2812 = vpop.f32.mrb[0].mxu0
      %2813 = vmatprep.mubr.f32.mxu0 0.0
      %2814 = vmatmul.mubr.f32.gmra.mrb[0].mxu0 %v2604
      %v2815 = vpop.f32.mrb[0].mxu0
      %v2816 = vadd.f32 0.0, %v2815
      %v2817 = vpop.f32.mrb[0].mxu0
      %2818 = vmatprep.mubr.f32.mxu0 0.0
      %2819 = vmatmul.mubr.f32.gmra.mrb[0].mxu0 %v2607
      %v2820 = vpop.f32.mrb[0].mxu0
      %v2821 = vadd.f32 0.0, %v2820
      %v2822 = vpop.f32.mrb[0].mxu0
      %2823 = vmatprep.mubr.f32.mxu0 0.0
      %2824 = vmatmul.mubr.f32.gmra.mrb[0].mxu0 %v2610
      %v2825 = vpop.f32.mrb[0].mxu0
      %v2826 = vadd.f32 0.0, %v2825
      %v2827 = vpop.f32.mrb[0].mxu0
      %2828 = vmatprep.mubr.f32.mxu0 0.0
      %2829 = vmatmul.mubr.f32.gmra.mrb[0].mxu0 %v2613
      %v2830 = vpop.f32.mrb[0].mxu0
      %v2831 = vadd.f32 0.0, %v2830
      %v2832 = vpop.f32.mrb[0].mxu0
      %2833 = vmatprep.mubr.f32.mxu0 0.0
      %2834 = vmatmul.mubr.f32.gmra.mrb[0].mxu0 %v2616
      %v2835 = vpop.f32.mrb[0].mxu0
      %v2836 = vadd.f32 0.0, %v2835
      %v2837 = vpop.f32.mrb[0].mxu0
      %2838 = vmatprep.mubr.f32.mxu0 0.0
      %2839 = vmatmul.mubr.f32.gmra.mrb[0].mxu0 %v2619
      %v2840 = vpop.f32.mrb[0].mxu0
      %v2841 = vadd.f32 0.0, %v2840
      %v2842 = vpop.f32.mrb[0].mxu0
      %2843 = vmatprep.mubr.f32.mxu0 0.0
      %2844 = vmatmul.mubr.f32.gmra.mrb[0].mxu0 %v2622
      %v2845 = vpop.f32.mrb[0].mxu0
      %v2846 = vadd.f32 0.0, %v2845
      %v2847 = vpop.f32.mrb[0].mxu0
      %2848 = vmatprep.mubr.f32.mxu0 0.0
      %2849 = vmatmul.mubr.f32.gmra.mrb[0].mxu0 %v2625
      %v2850 = vpop.f32.mrb[0].mxu0
      %v2851 = vadd.f32 0.0, %v2850
      %v2852 = vpop.f32.mrb[0].mxu0
      %2853 = vmatprep.mubr.f32.mxu0 0.0
      %2854 = vmatmul.mubr.f32.gmra.mrb[0].mxu0 %v2628
      %v2855 = vpop.f32.mrb[0].mxu0
      %v2856 = vadd.f32 0.0, %v2855
      %v2857 = vpop.f32.mrb[0].mxu0
      %2858 = vmatprep.mubr.f32.mxu0 0.0
      %2859 = vmatmul.mubr.f32.gmra.mrb[0].mxu0 %v2631
      %v2860 = vpop.f32.mrb[0].mxu0
      %v2861 = vadd.f32 0.0, %v2860
      %v2862 = vpop.f32.mrb[0].mxu0
      %2863 = vmatprep.mubr.f32.mxu0 0.0
      %2864 = vmatmul.mubr.f32.gmra.mrb[0].mxu0 %v2634
      %v2865 = vpop.f32.mrb[0].mxu0
      %v2866 = vadd.f32 0.0, %v2865
      %v2867 = vpop.f32.mrb[0].mxu0
      %2868 = vmatprep.mubr.f32.mxu0 0.0
      %2869 = vmatmul.mubr.f32.gmra.mrb[0].mxu0 %v2637
      %v2870 = vpop.f32.mrb[0].mxu0
      %v2871 = vadd.f32 0.0, %v2870
      %v2872 = vpop.f32.mrb[0].mxu0
      %2873 = vmatprep.mubr.f32.mxu0 0.0
      %2874 = vmatmul.mubr.f32.gmra.mrb[0].mxu0 %v2640
      %v2875 = vpop.f32.mrb[0].mxu0
      %v2876 = vadd.f32 0.0, %v2875
      %v2877 = vpop.f32.mrb[0].mxu0
      %2878 = vmatprep.mubr.f32.mxu0 0.0
      %2879 = vmatmul.mubr.f32.gmra.mrb[0].mxu0 %v2643
      %v2880 = vpop.f32.mrb[0].mxu0
      %v2881 = vadd.f32 0.0, %v2880
      %v2882 = vpop.f32.mrb[0].mxu0
      %2883 = vmatprep.mubr.f32.mxu0 0.0
      %2884 = vmatmul.mubr.f32.gmra.mrb[0].mxu0 %v2646
      %v2885 = vpop.f32.mrb[0].mxu0
      %v2886 = vadd.f32 0.0, %v2885
      %v2887 = vpop.f32.mrb[0].mxu0
      %2888 = vmatprep.mubr.f32.mxu0 0.0
      %2889 = vmatmul.mubr.f32.gmra.mrb[0].mxu0 %v2649
      %v2890 = vpop.f32.mrb[0].mxu0
      %v2891 = vadd.f32 0.0, %v2890
      %v2892 = vpop.f32.mrb[0].mxu0
      %2893 = vmatprep.mubr.f32.mxu0 0.0
      %2894 = vmatmul.mubr.f32.gmra.mrb[0].mxu0 %v2652
      %v2895 = vpop.f32.mrb[0].mxu0
      %v2896 = vadd.f32 0.0, %v2895
      %v2897 = vpop.f32.mrb[0].mxu0
      %2898 = vmatprep.mubr.f32.mxu0 0.0
      %2899 = vmatmul.mubr.f32.gmra.mrb[0].mxu0 %v2655
      %v2900 = vpop.f32.mrb[0].mxu0
      %v2901 = vadd.f32 0.0, %v2900
      %v2902 = vpop.f32.mrb[0].mxu0
      %2903 = vmatprep.mubr.f32.mxu0 0.0
      %2904 = vmatmul.mubr.f32.gmra.mrb[0].mxu0 %v2658
      %v2905 = vpop.f32.mrb[0].mxu0
      %v2906 = vadd.f32 0.0, %v2905
      %v2907 = vpop.f32.mrb[0].mxu0
      %2908 = vmatprep.mubr.f32.mxu0 0.0
      %2909 = vmatmul.mubr.f32.gmra.mrb[0].mxu0 %v2661
      %v2910 = vpop.f32.mrb[0].mxu0
      %v2911 = vadd.f32 0.0, %v2910
      %v2912 = vpop.f32.mrb[0].mxu0
      %2913 = vmatprep.mubr.f32.mxu0 0.0
      %2914 = vmatmul.mubr.f32.gmra.mrb[0].mxu0 %v2664
      %v2915 = vpop.f32.mrb[0].mxu0
      %v2916 = vadd.f32 0.0, %v2915
      %v2917 = vpop.f32.mrb[0].mxu0
      %2918 = vmatprep.mubr.f32.mxu0 0.0
      %2919 = vmatmul.mubr.f32.gmra.mrb[0].mxu0 %v2667
      %v2920 = vpop.f32.mrb[0].mxu0
      %v2921 = vadd.f32 0.0, %v2920
      %v2922 = vpop.f32.mrb[0].mxu0
      %2923 = vmatprep.mubr.f32.mxu0 0.0
      %2924 = vmatmul.mubr.f32.gmra.mrb[0].mxu0 %v2670
      %v2925 = vpop.f32.mrb[0].mxu0
      %v2926 = vadd.f32 0.0, %v2925
      %v2927 = vpop.f32.mrb[0].mxu0
      %2928 = vmatprep.mubr.f32.mxu0 0.0
      %2929 = vmatmul.mubr.f32.gmra.mrb[0].mxu0 %v2673
      %v2930 = vpop.f32.mrb[0].mxu0
      %v2931 = vadd.f32 0.0, %v2930
      %v2932 = vpop.f32.mrb[0].mxu0
      %2933 = vmatprep.mubr.f32.mxu0 0.0
      %2934 = vmatmul.mubr.f32.gmra.mrb[0].mxu0 %v2676
      %v2935 = vpop.f32.mrb[0].mxu0
      %v2936 = vadd.f32 0.0, %v2935
      %v2937 = vpop.f32.mrb[0].mxu0
      %2938 = vmatprep.mubr.f32.mxu0 0.0
      %2939 = vmatmul.mubr.f32.gmra.mrb[0].mxu0 %v2679
      %v2940 = vpop.f32.mrb[0].mxu0
      %v2941 = vadd.f32 0.0, %v2940
      %v2942 = vpop.f32.mrb[0].mxu0
      %2943 = vmatprep.mubr.f32.mxu0 0.0
      %2944 = vmatmul.mubr.f32.gmra.mrb[0].mxu0 %v2682
      %v2945 = vpop.f32.mrb[0].mxu0
      %v2946 = vadd.f32 0.0, %v2945
      %v2947 = vpop.f32.mrb[0].mxu0
      %2948 = vmatprep.mubr.f32.mxu0 0.0
      %2949 = vmatmul.mubr.f32.gmra.mrb[0].mxu0 %v2685
      %v2950 = vpop.f32.mrb[0].mxu0
      %v2951 = vadd.f32 0.0, %v2950
      %v2952 = vpop.f32.mrb[0].mxu0
      %2953 = vmatprep.mubr.f32.mxu0 0.0
      %2954 = vmatmul.mubr.f32.gmra.mrb[0].mxu0 %v2688
      %v2955 = vpop.f32.mrb[0].mxu0
      %v2956 = vadd.f32 0.0, %v2955
      %v2957 = vpop.f32.mrb[0].mxu0
      %2958 = vmatprep.mubr.f32.mxu0 0.0
      %2959 = vmatmul.mubr.f32.gmra.mrb[0].mxu0 %v2691
      %v2960 = vpop.f32.mrb[0].mxu0
      %v2961 = vadd.f32 0.0, %v2960
      %v2962 = vpop.f32.mrb[0].mxu0
      %2963 = vmatprep.mubr.f32.mxu0 0.0
      %2964 = vmatmul.mubr.f32.gmra.mrb[0].mxu0 %v2694
      %v2965 = vpop.f32.mrb[0].mxu0
      %v2966 = vadd.f32 0.0, %v2965
      %v2967 = vpop.f32.mrb[0].mxu0
      %2968 = vdwg.mxu0
      %v2969 = vadd.f32 %v2489, %v2766
      %v2970 = vadd.f32 %v2490, %v2771
      %v2971 = vadd.f32 %v2491, %v2776
      %v2972 = vadd.f32 %v2492, %v2781
      %v2973 = vadd.f32 %v2493, %v2786
      %v2974 = vadd.f32 %v2494, %v2791
      %v2975 = vadd.f32 %v2495, %v2796
      %v2976 = vadd.f32 %v2496, %v2801
      %v2977 = vadd.f32 %v2497, %v2806
      %v2978 = vadd.f32 %v2498, %v2811
      %v2979 = vadd.f32 %v2499, %v2816
      %v2980 = vadd.f32 %v2500, %v2821
      %v2981 = vadd.f32 %v2501, %v2826
      %v2982 = vadd.f32 %v2502, %v2831
      %v2983 = vadd.f32 %v2503, %v2836
      %v2984 = vadd.f32 %v2504, %v2841
      %v2985 = vadd.f32 %v2505, %v2846
      %v2986 = vadd.f32 %v2506, %v2851
      %v2987 = vadd.f32 %v2507, %v2856
      %v2988 = vadd.f32 %v2508, %v2861
      %v2989 = vadd.f32 %v2509, %v2866
      %v2990 = vadd.f32 %v2510, %v2871
      %v2991 = vadd.f32 %v2511, %v2876
      %v2992 = vadd.f32 %v2512, %v2881
      %v2993 = vadd.f32 %v2513, %v2886
      %v2994 = vadd.f32 %v2514, %v2891
      %v2995 = vadd.f32 %v2515, %v2896
      %v2996 = vadd.f32 %v2516, %v2901
      %v2997 = vadd.f32 %v2517, %v2906
      %v2998 = vadd.f32 %v2518, %v2911
      %v2999 = vadd.f32 %v2519, %v2916
      %v3000 = vadd.f32 %v2520, %v2921
      %v3001 = vadd.f32 %v2521, %v2926
      %v3002 = vadd.f32 %v2522, %v2931
      %v3003 = vadd.f32 %v2523, %v2936
      %v3004 = vadd.f32 %v2524, %v2941
      %v3005 = vadd.f32 %v2525, %v2946
      %v3006 = vadd.f32 %v2526, %v2951
      %v3007 = vadd.f32 %v2527, %v2956
      %v3008 = vadd.f32 %v2528, %v2961
      %v3009 = vadd.f32 %v2529, %v2966
      %v3010 = vld [vmem:[%s200 + $0x35] sm:$0xff]
      %v3011 = vld [vmem:[%s200 + $0x3d] sm:$0xff]
      %v3012 = vld [vmem:[%s200 + $0x45] sm:$0xff]
      %v3013 = vld [vmem:[%s200 + $0x4d] sm:$0xff]
      %v3014 = vld [vmem:[%s200 + $0x55] sm:$0xff]
      %v3015 = vld [vmem:[%s200 + $0x5d] sm:$0xff]
      %v3016 = vld [vmem:[%s200 + $0x65] sm:$0xff]
      %v3017 = vld [vmem:[%s200 + $0x6d] sm:$0xff]
      %v3018 = vld [vmem:[%s200 + $0x75] sm:$0xff]
      %v3019 = vld [vmem:[%s200 + $0x7d] sm:$0xff]
      %v3020 = vld [vmem:[%s200 + $0x85] sm:$0xff]
      %v3021 = vld [vmem:[%s200 + $0x8d] sm:$0xff]
      %v3022 = vld [vmem:[%s200 + $0x95] sm:$0xff]
      %v3023 = vld [vmem:[%s200 + $0x9d] sm:$0xff]
      %v3024 = vld [vmem:[%s200 + $0xa5] sm:$0xff]
      %v3025 = vld [vmem:[%s200 + $0xad] sm:$0xff]
      %v3026 = vld [vmem:[%s200 + $0xb5] sm:$0xff]
      %v3027 = vld [vmem:[%s200 + $0xbd] sm:$0xff]
      %v3028 = vld [vmem:[%s200 + $0xc5] sm:$0xff]
      %v3029 = vld [vmem:[%s200 + $0xcd] sm:$0xff]
      %v3030 = vld [vmem:[%s200 + $0xd5] sm:$0xff]
      %v3031 = vld [vmem:[%s200 + $0xdd] sm:$0xff]
      %v3032 = vld [vmem:[%s200 + $0xe5] sm:$0xff]
      %v3033 = vld [vmem:[%s200 + $0xed] sm:$0xff]
      %v3034 = vld [vmem:[%s200 + $0xf5] sm:$0xff]
      %v3035 = vld [vmem:[%s200 + $0xfd] sm:$0xff]
      %v3036 = vld [vmem:[%s200 + $0x105] sm:$0xff]
      %v3037 = vld [vmem:[%s200 + $0x10d] sm:$0xff]
      %v3038 = vld [vmem:[%s200 + $0x115] sm:$0xff]
      %v3039 = vld [vmem:[%s200 + $0x11d] sm:$0xff]
      %v3040 = vld [vmem:[%s200 + $0x125] sm:$0xff]
      %v3041 = vld [vmem:[%s200 + $0x12d] sm:$0xff]
      %v3042 = vld [vmem:[%s200 + $0x135] sm:$0xff]
      %v3043 = vld [vmem:[%s200 + $0x13d] sm:$0xff]
      %v3044 = vld [vmem:[%s200 + $0x145] sm:$0xff]
      %v3045 = vld [vmem:[%s200 + $0x14d] sm:$0xff]
      %v3046 = vld [vmem:[%s200 + $0x155] sm:$0xff]
      %v3047 = vld [vmem:[%s200 + $0x15d] sm:$0xff]
      %v3048 = vld [vmem:[%s200 + $0x165] sm:$0xff]
      %v3049 = vld [vmem:[%s200 + $0x16d] sm:$0xff]
      %v3050 = vld [vmem:[%s200 + $0x175] sm:$0xf]
      %s3051 = scalar_lea.vmem %s1, 24
      %v3052 = vld [vmem:[%s3051] sm:$0xf]
      %v3054 = vsel %vm296, %v3010, 0
      %v3057 = vsel %vm296, %v3011, 0
      %v3060 = vsel %vm296, %v3012, 0
      %v3063 = vsel %vm296, %v3013, 0
      %v3066 = vsel %vm296, %v3014, 0
      %v3069 = vsel %vm296, %v3015, 0
      %v3072 = vsel %vm296, %v3016, 0
      %v3075 = vsel %vm296, %v3017, 0
      %v3078 = vsel %vm296, %v3018, 0
      %v3081 = vsel %vm296, %v3019, 0
      %v3084 = vsel %vm296, %v3020, 0
      %v3087 = vsel %vm296, %v3021, 0
      %v3090 = vsel %vm296, %v3022, 0
      %v3093 = vsel %vm296, %v3023, 0
      %v3096 = vsel %vm296, %v3024, 0
      %v3099 = vsel %vm296, %v3025, 0
      %v3102 = vsel %vm296, %v3026, 0
      %v3105 = vsel %vm296, %v3027, 0
      %v3108 = vsel %vm296, %v3028, 0
      %v3111 = vsel %vm296, %v3029, 0
      %v3114 = vsel %vm296, %v3030, 0
      %v3117 = vsel %vm296, %v3031, 0
      %v3120 = vsel %vm296, %v3032, 0
      %v3123 = vsel %vm296, %v3033, 0
      %v3126 = vsel %vm296, %v3034, 0
      %v3129 = vsel %vm296, %v3035, 0
      %v3132 = vsel %vm296, %v3036, 0
      %v3135 = vsel %vm296, %v3037, 0
      %v3138 = vsel %vm296, %v3038, 0
      %v3141 = vsel %vm296, %v3039, 0
      %v3144 = vsel %vm296, %v3040, 0
      %v3147 = vsel %vm296, %v3041, 0
      %v3150 = vsel %vm296, %v3042, 0
      %v3153 = vsel %vm296, %v3043, 0
      %v3156 = vsel %vm296, %v3044, 0
      %v3159 = vsel %vm296, %v3045, 0
      %v3162 = vsel %vm296, %v3046, 0
      %v3165 = vsel %vm296, %v3047, 0
      %v3168 = vsel %vm296, %v3048, 0
      %v3171 = vsel %vm296, %v3049, 0
      %v3174 = vsel %vm296, %v3050, 0
      %v3177 = vsel %vm420, %v3052, 0
      %3179 = vmatprep.subr.mxu0 0.0
      %3180 = vmatpush1.msra.mxu0 %v3177
      %3181 = vmatprep.subr.mxu0 0.0
      %3182 = vmatpush1.msra.mxu0 0.0
      %3183 = vmatprep.subr.mxu0 0.0
      %3184 = vmatpush1.msra.mxu0 0.0
      %3185 = vmatprep.subr.mxu0 0.0
      %3186 = vmatpush1.msra.mxu0 0.0
      %3187 = vmatprep.subr.mxu0 0.0
      %3188 = vmatpush1.msra.mxu0 0.0
      %3189 = vmatprep.subr.mxu0 0.0
      %3190 = vmatpush1.msra.mxu0 0.0
      %3191 = vmatprep.subr.mxu0 0.0
      %3192 = vmatpush1.msra.mxu0 0.0
      %3193 = vmatprep.subr.mxu0 0.0
      %3194 = vmatpush1.msra.mxu0 0.0
      %3195 = vmatprep.subr.mxu0 0.0
      %3196 = vmatpush1.msra.mxu0 0.0
      %3197 = vmatprep.subr.mxu0 0.0
      %3198 = vmatpush1.msra.mxu0 0.0
      %3199 = vmatprep.subr.mxu0 0.0
      %3200 = vmatpush1.msra.mxu0 0.0
      %3201 = vmatprep.subr.mxu0 0.0
      %3202 = vmatpush1.msra.mxu0 0.0
      %3203 = vmatprep.subr.mxu0 0.0
      %3204 = vmatpush1.msra.mxu0 0.0
      %3205 = vmatprep.subr.mxu0 0.0
      %3206 = vmatpush1.msra.mxu0 0.0
      %3207 = vmatprep.subr.mxu0 0.0
      %3208 = vmatpush1.msra.mxu0 0.0
      %3209 = vmatprep.subr.mxu0 0.0
      %3210 = vmatpush1.msra.mxu0 0.0
      %3211 = vmatprep.subr.mxu0 0.0
      %3212 = vmatpush1.msra.mxu0 0.0
      %3213 = vmatprep.subr.mxu0 0.0
      %3214 = vmatpush1.msra.mxu0 0.0
      %3215 = vmatprep.subr.mxu0 0.0
      %3216 = vmatpush1.msra.mxu0 0.0
      %3217 = vmatprep.subr.mxu0 0.0
      %3218 = vmatpush1.msra.mxu0 0.0
      %3219 = vmatprep.subr.mxu0 0.0
      %3220 = vmatpush1.msra.mxu0 0.0
      %3221 = vmatprep.subr.mxu0 0.0
      %3222 = vmatpush1.msra.mxu0 0.0
      %3223 = vmatprep.subr.mxu0 0.0
      %3224 = vmatpush1.msra.mxu0 0.0
      %3225 = vmatprep.subr.mxu0 0.0
      %3226 = vmatpush1.msra.mxu0 0.0
      %3227 = vmatprep.subr.mxu0 0.0
      %3228 = vmatpush1.msra.mxu0 0.0
      %3229 = vmatprep.subr.mxu0 0.0
      %3230 = vmatpush1.msra.mxu0 0.0
      %3231 = vmatprep.subr.mxu0 0.0
      %3232 = vmatpush1.msra.mxu0 0.0
      %3233 = vmatprep.subr.mxu0 0.0
      %3234 = vmatpush1.msra.mxu0 0.0
      %3235 = vmatprep.subr.mxu0 0.0
      %3236 = vmatpush1.msra.mxu0 0.0
      %3237 = vmatprep.subr.mxu0 0.0
      %3238 = vmatpush1.msra.mxu0 0.0
      %3239 = vmatprep.subr.mxu0 0.0
      %3240 = vmatpush1.msra.mxu0 0.0
      %3241 = vmatprep.subr.mxu0 0.0
      %3242 = vmatpush1.msra.mxu0 0.0
      %3243 = vmatprep.mubr.f32.mxu0 0.0
      %3244 = vmatmul.mubr.f32.gmra.mrb[0].mxu0 %v3054
      %v3245 = vpop.f32.mrb[0].mxu0
      %v3246 = vadd.f32 0.0, %v3245
      %v3247 = vpop.f32.mrb[0].mxu0
      %3248 = vmatprep.mubr.f32.mxu0 0.0
      %3249 = vmatmul.mubr.f32.gmra.mrb[0].mxu0 %v3057
      %v3250 = vpop.f32.mrb[0].mxu0
      %v3251 = vadd.f32 0.0, %v3250
      %v3252 = vpop.f32.mrb[0].mxu0
      %3253 = vmatprep.mubr.f32.mxu0 0.0
      %3254 = vmatmul.mubr.f32.gmra.mrb[0].mxu0 %v3060
      %v3255 = vpop.f32.mrb[0].mxu0
      %v3256 = vadd.f32 0.0, %v3255
      %v3257 = vpop.f32.mrb[0].mxu0
      %3258 = vmatprep.mubr.f32.mxu0 0.0
      %3259 = vmatmul.mubr.f32.gmra.mrb[0].mxu0 %v3063
      %v3260 = vpop.f32.mrb[0].mxu0
      %v3261 = vadd.f32 0.0, %v3260
      %v3262 = vpop.f32.mrb[0].mxu0
      %3263 = vmatprep.mubr.f32.mxu0 0.0
      %3264 = vmatmul.mubr.f32.gmra.mrb[0].mxu0 %v3066
      %v3265 = vpop.f32.mrb[0].mxu0
      %v3266 = vadd.f32 0.0, %v3265
      %v3267 = vpop.f32.mrb[0].mxu0
      %3268 = vmatprep.mubr.f32.mxu0 0.0
      %3269 = vmatmul.mubr.f32.gmra.mrb[0].mxu0 %v3069
      %v3270 = vpop.f32.mrb[0].mxu0
      %v3271 = vadd.f32 0.0, %v3270
      %v3272 = vpop.f32.mrb[0].mxu0
      %3273 = vmatprep.mubr.f32.mxu0 0.0
      %3274 = vmatmul.mubr.f32.gmra.mrb[0].mxu0 %v3072
      %v3275 = vpop.f32.mrb[0].mxu0
      %v3276 = vadd.f32 0.0, %v3275
      %v3277 = vpop.f32.mrb[0].mxu0
      %3278 = vmatprep.mubr.f32.mxu0 0.0
      %3279 = vmatmul.mubr.f32.gmra.mrb[0].mxu0 %v3075
      %v3280 = vpop.f32.mrb[0].mxu0
      %v3281 = vadd.f32 0.0, %v3280
      %v3282 = vpop.f32.mrb[0].mxu0
      %3283 = vmatprep.mubr.f32.mxu0 0.0
      %3284 = vmatmul.mubr.f32.gmra.mrb[0].mxu0 %v3078
      %v3285 = vpop.f32.mrb[0].mxu0
      %v3286 = vadd.f32 0.0, %v3285
      %v3287 = vpop.f32.mrb[0].mxu0
      %3288 = vmatprep.mubr.f32.mxu0 0.0
      %3289 = vmatmul.mubr.f32.gmra.mrb[0].mxu0 %v3081
      %v3290 = vpop.f32.mrb[0].mxu0
      %v3291 = vadd.f32 0.0, %v3290
      %v3292 = vpop.f32.mrb[0].mxu0
      %3293 = vmatprep.mubr.f32.mxu0 0.0
      %3294 = vmatmul.mubr.f32.gmra.mrb[0].mxu0 %v3084
      %v3295 = vpop.f32.mrb[0].mxu0
      %v3296 = vadd.f32 0.0, %v3295
      %v3297 = vpop.f32.mrb[0].mxu0
      %3298 = vmatprep.mubr.f32.mxu0 0.0
      %3299 = vmatmul.mubr.f32.gmra.mrb[0].mxu0 %v3087
      %v3300 = vpop.f32.mrb[0].mxu0
      %v3301 = vadd.f32 0.0, %v3300
      %v3302 = vpop.f32.mrb[0].mxu0
      %3303 = vmatprep.mubr.f32.mxu0 0.0
      %3304 = vmatmul.mubr.f32.gmra.mrb[0].mxu0 %v3090
      %v3305 = vpop.f32.mrb[0].mxu0
      %v3306 = vadd.f32 0.0, %v3305
      %v3307 = vpop.f32.mrb[0].mxu0
      %3308 = vmatprep.mubr.f32.mxu0 0.0
      %3309 = vmatmul.mubr.f32.gmra.mrb[0].mxu0 %v3093
      %v3310 = vpop.f32.mrb[0].mxu0
      %v3311 = vadd.f32 0.0, %v3310
      %v3312 = vpop.f32.mrb[0].mxu0
      %3313 = vmatprep.mubr.f32.mxu0 0.0
      %3314 = vmatmul.mubr.f32.gmra.mrb[0].mxu0 %v3096
      %v3315 = vpop.f32.mrb[0].mxu0
      %v3316 = vadd.f32 0.0, %v3315
      %v3317 = vpop.f32.mrb[0].mxu0
      %3318 = vmatprep.mubr.f32.mxu0 0.0
      %3319 = vmatmul.mubr.f32.gmra.mrb[0].mxu0 %v3099
      %v3320 = vpop.f32.mrb[0].mxu0
      %v3321 = vadd.f32 0.0, %v3320
      %v3322 = vpop.f32.mrb[0].mxu0
      %3323 = vmatprep.mubr.f32.mxu0 0.0
      %3324 = vmatmul.mubr.f32.gmra.mrb[0].mxu0 %v3102
      %v3325 = vpop.f32.mrb[0].mxu0
      %v3326 = vadd.f32 0.0, %v3325
      %v3327 = vpop.f32.mrb[0].mxu0
      %3328 = vmatprep.mubr.f32.mxu0 0.0
      %3329 = vmatmul.mubr.f32.gmra.mrb[0].mxu0 %v3105
      %v3330 = vpop.f32.mrb[0].mxu0
      %v3331 = vadd.f32 0.0, %v3330
      %v3332 = vpop.f32.mrb[0].mxu0
      %3333 = vmatprep.mubr.f32.mxu0 0.0
      %3334 = vmatmul.mubr.f32.gmra.mrb[0].mxu0 %v3108
      %v3335 = vpop.f32.mrb[0].mxu0
      %v3336 = vadd.f32 0.0, %v3335
      %v3337 = vpop.f32.mrb[0].mxu0
      %3338 = vmatprep.mubr.f32.mxu0 0.0
      %3339 = vmatmul.mubr.f32.gmra.mrb[0].mxu0 %v3111
      %v3340 = vpop.f32.mrb[0].mxu0
      %v3341 = vadd.f32 0.0, %v3340
      %v3342 = vpop.f32.mrb[0].mxu0
      %3343 = vmatprep.mubr.f32.mxu0 0.0
      %3344 = vmatmul.mubr.f32.gmra.mrb[0].mxu0 %v3114
      %v3345 = vpop.f32.mrb[0].mxu0
      %v3346 = vadd.f32 0.0, %v3345
      %v3347 = vpop.f32.mrb[0].mxu0
      %3348 = vmatprep.mubr.f32.mxu0 0.0
      %3349 = vmatmul.mubr.f32.gmra.mrb[0].mxu0 %v3117
      %v3350 = vpop.f32.mrb[0].mxu0
      %v3351 = vadd.f32 0.0, %v3350
      %v3352 = vpop.f32.mrb[0].mxu0
      %3353 = vmatprep.mubr.f32.mxu0 0.0
      %3354 = vmatmul.mubr.f32.gmra.mrb[0].mxu0 %v3120
      %v3355 = vpop.f32.mrb[0].mxu0
      %v3356 = vadd.f32 0.0, %v3355
      %v3357 = vpop.f32.mrb[0].mxu0
      %3358 = vmatprep.mubr.f32.mxu0 0.0
      %3359 = vmatmul.mubr.f32.gmra.mrb[0].mxu0 %v3123
      %v3360 = vpop.f32.mrb[0].mxu0
      %v3361 = vadd.f32 0.0, %v3360
      %v3362 = vpop.f32.mrb[0].mxu0
      %3363 = vmatprep.mubr.f32.mxu0 0.0
      %3364 = vmatmul.mubr.f32.gmra.mrb[0].mxu0 %v3126
      %v3365 = vpop.f32.mrb[0].mxu0
      %v3366 = vadd.f32 0.0, %v3365
      %v3367 = vpop.f32.mrb[0].mxu0
      %3368 = vmatprep.mubr.f32.mxu0 0.0
      %3369 = vmatmul.mubr.f32.gmra.mrb[0].mxu0 %v3129
      %v3370 = vpop.f32.mrb[0].mxu0
      %v3371 = vadd.f32 0.0, %v3370
      %v3372 = vpop.f32.mrb[0].mxu0
      %3373 = vmatprep.mubr.f32.mxu0 0.0
      %3374 = vmatmul.mubr.f32.gmra.mrb[0].mxu0 %v3132
      %v3375 = vpop.f32.mrb[0].mxu0
      %v3376 = vadd.f32 0.0, %v3375
      %v3377 = vpop.f32.mrb[0].mxu0
      %3378 = vmatprep.mubr.f32.mxu0 0.0
      %3379 = vmatmul.mubr.f32.gmra.mrb[0].mxu0 %v3135
      %v3380 = vpop.f32.mrb[0].mxu0
      %v3381 = vadd.f32 0.0, %v3380
      %v3382 = vpop.f32.mrb[0].mxu0
      %3383 = vmatprep.mubr.f32.mxu0 0.0
      %3384 = vmatmul.mubr.f32.gmra.mrb[0].mxu0 %v3138
      %v3385 = vpop.f32.mrb[0].mxu0
      %v3386 = vadd.f32 0.0, %v3385
      %v3387 = vpop.f32.mrb[0].mxu0
      %3388 = vmatprep.mubr.f32.mxu0 0.0
      %3389 = vmatmul.mubr.f32.gmra.mrb[0].mxu0 %v3141
      %v3390 = vpop.f32.mrb[0].mxu0
      %v3391 = vadd.f32 0.0, %v3390
      %v3392 = vpop.f32.mrb[0].mxu0
      %3393 = vmatprep.mubr.f32.mxu0 0.0
      %3394 = vmatmul.mubr.f32.gmra.mrb[0].mxu0 %v3144
      %v3395 = vpop.f32.mrb[0].mxu0
      %v3396 = vadd.f32 0.0, %v3395
      %v3397 = vpop.f32.mrb[0].mxu0
      %3398 = vmatprep.mubr.f32.mxu0 0.0
      %3399 = vmatmul.mubr.f32.gmra.mrb[0].mxu0 %v3147
      %v3400 = vpop.f32.mrb[0].mxu0
      %v3401 = vadd.f32 0.0, %v3400
      %v3402 = vpop.f32.mrb[0].mxu0
      %3403 = vmatprep.mubr.f32.mxu0 0.0
      %3404 = vmatmul.mubr.f32.gmra.mrb[0].mxu0 %v3150
      %v3405 = vpop.f32.mrb[0].mxu0
      %v3406 = vadd.f32 0.0, %v3405
      %v3407 = vpop.f32.mrb[0].mxu0
      %3408 = vmatprep.mubr.f32.mxu0 0.0
      %3409 = vmatmul.mubr.f32.gmra.mrb[0].mxu0 %v3153
      %v3410 = vpop.f32.mrb[0].mxu0
      %v3411 = vadd.f32 0.0, %v3410
      %v3412 = vpop.f32.mrb[0].mxu0
      %3413 = vmatprep.mubr.f32.mxu0 0.0
      %3414 = vmatmul.mubr.f32.gmra.mrb[0].mxu0 %v3156
      %v3415 = vpop.f32.mrb[0].mxu0
      %v3416 = vadd.f32 0.0, %v3415
      %v3417 = vpop.f32.mrb[0].mxu0
      %3418 = vmatprep.mubr.f32.mxu0 0.0
      %3419 = vmatmul.mubr.f32.gmra.mrb[0].mxu0 %v3159
      %v3420 = vpop.f32.mrb[0].mxu0
      %v3421 = vadd.f32 0.0, %v3420
      %v3422 = vpop.f32.mrb[0].mxu0
      %3423 = vmatprep.mubr.f32.mxu0 0.0
      %3424 = vmatmul.mubr.f32.gmra.mrb[0].mxu0 %v3162
      %v3425 = vpop.f32.mrb[0].mxu0
      %v3426 = vadd.f32 0.0, %v3425
      %v3427 = vpop.f32.mrb[0].mxu0
      %3428 = vmatprep.mubr.f32.mxu0 0.0
      %3429 = vmatmul.mubr.f32.gmra.mrb[0].mxu0 %v3165
      %v3430 = vpop.f32.mrb[0].mxu0
      %v3431 = vadd.f32 0.0, %v3430
      %v3432 = vpop.f32.mrb[0].mxu0
      %3433 = vmatprep.mubr.f32.mxu0 0.0
      %3434 = vmatmul.mubr.f32.gmra.mrb[0].mxu0 %v3168
      %v3435 = vpop.f32.mrb[0].mxu0
      %v3436 = vadd.f32 0.0, %v3435
      %v3437 = vpop.f32.mrb[0].mxu0
      %3438 = vmatprep.mubr.f32.mxu0 0.0
      %3439 = vmatmul.mubr.f32.gmra.mrb[0].mxu0 %v3171
      %v3440 = vpop.f32.mrb[0].mxu0
      %v3441 = vadd.f32 0.0, %v3440
      %v3442 = vpop.f32.mrb[0].mxu0
      %3443 = vmatprep.mubr.f32.mxu0 0.0
      %3444 = vmatmul.mubr.f32.gmra.mrb[0].mxu0 %v3174
      %v3445 = vpop.f32.mrb[0].mxu0
      %v3446 = vadd.f32 0.0, %v3445
      %v3447 = vpop.f32.mrb[0].mxu0
      %3448 = vdwg.mxu0
      %v3449 = vadd.f32 %v2969, %v3246
      %v3450 = vadd.f32 %v2970, %v3251
      %v3451 = vadd.f32 %v2971, %v3256
      %v3452 = vadd.f32 %v2972, %v3261
      %v3453 = vadd.f32 %v2973, %v3266
      %v3454 = vadd.f32 %v2974, %v3271
      %v3455 = vadd.f32 %v2975, %v3276
      %v3456 = vadd.f32 %v2976, %v3281
      %v3457 = vadd.f32 %v2977, %v3286
      %v3458 = vadd.f32 %v2978, %v3291
      %v3459 = vadd.f32 %v2979, %v3296
      %v3460 = vadd.f32 %v2980, %v3301
      %v3461 = vadd.f32 %v2981, %v3306
      %v3462 = vadd.f32 %v2982, %v3311
      %v3463 = vadd.f32 %v2983, %v3316
      %v3464 = vadd.f32 %v2984, %v3321
      %v3465 = vadd.f32 %v2985, %v3326
      %v3466 = vadd.f32 %v2986, %v3331
      %v3467 = vadd.f32 %v2987, %v3336
      %v3468 = vadd.f32 %v2988, %v3341
      %v3469 = vadd.f32 %v2989, %v3346
      %v3470 = vadd.f32 %v2990, %v3351
      %v3471 = vadd.f32 %v2991, %v3356
      %v3472 = vadd.f32 %v2992, %v3361
      %v3473 = vadd.f32 %v2993, %v3366
      %v3474 = vadd.f32 %v2994, %v3371
      %v3475 = vadd.f32 %v2995, %v3376
      %v3476 = vadd.f32 %v2996, %v3381
      %v3477 = vadd.f32 %v2997, %v3386
      %v3478 = vadd.f32 %v2998, %v3391
      %v3479 = vadd.f32 %v2999, %v3396
      %v3480 = vadd.f32 %v3000, %v3401
      %v3481 = vadd.f32 %v3001, %v3406
      %v3482 = vadd.f32 %v3002, %v3411
      %v3483 = vadd.f32 %v3003, %v3416
      %v3484 = vadd.f32 %v3004, %v3421
      %v3485 = vadd.f32 %v3005, %v3426
      %v3486 = vadd.f32 %v3006, %v3431
      %v3487 = vadd.f32 %v3007, %v3436
      %v3488 = vadd.f32 %v3008, %v3441
      %v3489 = vadd.f32 %v3009, %v3446
      %v3490 = vld [vmem:[%s200 + $0x36] sm:$0xff]
      %v3491 = vld [vmem:[%s200 + $0x3e] sm:$0xff]
      %v3492 = vld [vmem:[%s200 + $0x46] sm:$0xff]
      %v3493 = vld [vmem:[%s200 + $0x4e] sm:$0xff]
      %v3494 = vld [vmem:[%s200 + $0x56] sm:$0xff]
      %v3495 = vld [vmem:[%s200 + $0x5e] sm:$0xff]
      %v3496 = vld [vmem:[%s200 + $0x66] sm:$0xff]
      %v3497 = vld [vmem:[%s200 + $0x6e] sm:$0xff]
      %v3498 = vld [vmem:[%s200 + $0x76] sm:$0xff]
      %v3499 = vld [vmem:[%s200 + $0x7e] sm:$0xff]
      %v3500 = vld [vmem:[%s200 + $0x86] sm:$0xff]
      %v3501 = vld [vmem:[%s200 + $0x8e] sm:$0xff]
      %v3502 = vld [vmem:[%s200 + $0x96] sm:$0xff]
      %v3503 = vld [vmem:[%s200 + $0x9e] sm:$0xff]
      %v3504 = vld [vmem:[%s200 + $0xa6] sm:$0xff]
      %v3505 = vld [vmem:[%s200 + $0xae] sm:$0xff]
      %v3506 = vld [vmem:[%s200 + $0xb6] sm:$0xff]
      %v3507 = vld [vmem:[%s200 + $0xbe] sm:$0xff]
      %v3508 = vld [vmem:[%s200 + $0xc6] sm:$0xff]
      %v3509 = vld [vmem:[%s200 + $0xce] sm:$0xff]
      %v3510 = vld [vmem:[%s200 + $0xd6] sm:$0xff]
      %v3511 = vld [vmem:[%s200 + $0xde] sm:$0xff]
      %v3512 = vld [vmem:[%s200 + $0xe6] sm:$0xff]
      %v3513 = vld [vmem:[%s200 + $0xee] sm:$0xff]
      %v3514 = vld [vmem:[%s200 + $0xf6] sm:$0xff]
      %v3515 = vld [vmem:[%s200 + $0xfe] sm:$0xff]
      %v3516 = vld [vmem:[%s200 + $0x106] sm:$0xff]
      %v3517 = vld [vmem:[%s200 + $0x10e] sm:$0xff]
      %v3518 = vld [vmem:[%s200 + $0x116] sm:$0xff]
      %v3519 = vld [vmem:[%s200 + $0x11e] sm:$0xff]
      %v3520 = vld [vmem:[%s200 + $0x126] sm:$0xff]
      %v3521 = vld [vmem:[%s200 + $0x12e] sm:$0xff]
      %v3522 = vld [vmem:[%s200 + $0x136] sm:$0xff]
      %v3523 = vld [vmem:[%s200 + $0x13e] sm:$0xff]
      %v3524 = vld [vmem:[%s200 + $0x146] sm:$0xff]
      %v3525 = vld [vmem:[%s200 + $0x14e] sm:$0xff]
      %v3526 = vld [vmem:[%s200 + $0x156] sm:$0xff]
      %v3527 = vld [vmem:[%s200 + $0x15e] sm:$0xff]
      %v3528 = vld [vmem:[%s200 + $0x166] sm:$0xff]
      %v3529 = vld [vmem:[%s200 + $0x16e] sm:$0xff]
      %v3530 = vld [vmem:[%s200 + $0x176] sm:$0xf]
      %s3531 = scalar_lea.vmem %s1, 28
      %v3532 = vld [vmem:[%s3531] sm:$0xf]
      %v3534 = vsel %vm296, %v3490, 0
      %v3537 = vsel %vm296, %v3491, 0
      %v3540 = vsel %vm296, %v3492, 0
      %v3543 = vsel %vm296, %v3493, 0
      %v3546 = vsel %vm296, %v3494, 0
      %v3549 = vsel %vm296, %v3495, 0
      %v3552 = vsel %vm296, %v3496, 0
      %v3555 = vsel %vm296, %v3497, 0
      %v3558 = vsel %vm296, %v3498, 0
      %v3561 = vsel %vm296, %v3499, 0
      %v3564 = vsel %vm296, %v3500, 0
      %v3567 = vsel %vm296, %v3501, 0
      %v3570 = vsel %vm296, %v3502, 0
      %v3573 = vsel %vm296, %v3503, 0
      %v3576 = vsel %vm296, %v3504, 0
      %v3579 = vsel %vm296, %v3505, 0
      %v3582 = vsel %vm296, %v3506, 0
      %v3585 = vsel %vm296, %v3507, 0
      %v3588 = vsel %vm296, %v3508, 0
      %v3591 = vsel %vm296, %v3509, 0
      %v3594 = vsel %vm296, %v3510, 0
      %v3597 = vsel %vm296, %v3511, 0
      %v3600 = vsel %vm296, %v3512, 0
      %v3603 = vsel %vm296, %v3513, 0
      %v3606 = vsel %vm296, %v3514, 0
      %v3609 = vsel %vm296, %v3515, 0
      %v3612 = vsel %vm296, %v3516, 0
      %v3615 = vsel %vm296, %v3517, 0
      %v3618 = vsel %vm296, %v3518, 0
      %v3621 = vsel %vm296, %v3519, 0
      %v3624 = vsel %vm296, %v3520, 0
      %v3627 = vsel %vm296, %v3521, 0
      %v3630 = vsel %vm296, %v3522, 0
      %v3633 = vsel %vm296, %v3523, 0
      %v3636 = vsel %vm296, %v3524, 0
      %v3639 = vsel %vm296, %v3525, 0
      %v3642 = vsel %vm296, %v3526, 0
      %v3645 = vsel %vm296, %v3527, 0
      %v3648 = vsel %vm296, %v3528, 0
      %v3651 = vsel %vm296, %v3529, 0
      %v3654 = vsel %vm296, %v3530, 0
      %v3657 = vsel %vm420, %v3532, 0
      %3659 = vmatprep.subr.mxu0 0.0
      %3660 = vmatpush1.msra.mxu0 %v3657
      %3661 = vmatprep.subr.mxu0 0.0
      %3662 = vmatpush1.msra.mxu0 0.0
      %3663 = vmatprep.subr.mxu0 0.0
      %3664 = vmatpush1.msra.mxu0 0.0
      %3665 = vmatprep.subr.mxu0 0.0
      %3666 = vmatpush1.msra.mxu0 0.0
      %3667 = vmatprep.subr.mxu0 0.0
      %3668 = vmatpush1.msra.mxu0 0.0
      %3669 = vmatprep.subr.mxu0 0.0
      %3670 = vmatpush1.msra.mxu0 0.0
      %3671 = vmatprep.subr.mxu0 0.0
      %3672 = vmatpush1.msra.mxu0 0.0
      %3673 = vmatprep.subr.mxu0 0.0
      %3674 = vmatpush1.msra.mxu0 0.0
      %3675 = vmatprep.subr.mxu0 0.0
      %3676 = vmatpush1.msra.mxu0 0.0
      %3677 = vmatprep.subr.mxu0 0.0
      %3678 = vmatpush1.msra.mxu0 0.0
      %3679 = vmatprep.subr.mxu0 0.0
      %3680 = vmatpush1.msra.mxu0 0.0
      %3681 = vmatprep.subr.mxu0 0.0
      %3682 = vmatpush1.msra.mxu0 0.0
      %3683 = vmatprep.subr.mxu0 0.0
      %3684 = vmatpush1.msra.mxu0 0.0
      %3685 = vmatprep.subr.mxu0 0.0
      %3686 = vmatpush1.msra.mxu0 0.0
      %3687 = vmatprep.subr.mxu0 0.0
      %3688 = vmatpush1.msra.mxu0 0.0
      %3689 = vmatprep.subr.mxu0 0.0
      %3690 = vmatpush1.msra.mxu0 0.0
      %3691 = vmatprep.subr.mxu0 0.0
      %3692 = vmatpush1.msra.mxu0 0.0
      %3693 = vmatprep.subr.mxu0 0.0
      %3694 = vmatpush1.msra.mxu0 0.0
      %3695 = vmatprep.subr.mxu0 0.0
      %3696 = vmatpush1.msra.mxu0 0.0
      %3697 = vmatprep.subr.mxu0 0.0
      %3698 = vmatpush1.msra.mxu0 0.0
      %3699 = vmatprep.subr.mxu0 0.0
      %3700 = vmatpush1.msra.mxu0 0.0
      %3701 = vmatprep.subr.mxu0 0.0
      %3702 = vmatpush1.msra.mxu0 0.0
      %3703 = vmatprep.subr.mxu0 0.0
      %3704 = vmatpush1.msra.mxu0 0.0
      %3705 = vmatprep.subr.mxu0 0.0
      %3706 = vmatpush1.msra.mxu0 0.0
      %3707 = vmatprep.subr.mxu0 0.0
      %3708 = vmatpush1.msra.mxu0 0.0
      %3709 = vmatprep.subr.mxu0 0.0
      %3710 = vmatpush1.msra.mxu0 0.0
      %3711 = vmatprep.subr.mxu0 0.0
      %3712 = vmatpush1.msra.mxu0 0.0
      %3713 = vmatprep.subr.mxu0 0.0
      %3714 = vmatpush1.msra.mxu0 0.0
      %3715 = vmatprep.subr.mxu0 0.0
      %3716 = vmatpush1.msra.mxu0 0.0
      %3717 = vmatprep.subr.mxu0 0.0
      %3718 = vmatpush1.msra.mxu0 0.0
      %3719 = vmatprep.subr.mxu0 0.0
      %3720 = vmatpush1.msra.mxu0 0.0
      %3721 = vmatprep.subr.mxu0 0.0
      %3722 = vmatpush1.msra.mxu0 0.0
      %3723 = vmatprep.mubr.f32.mxu0 0.0
      %3724 = vmatmul.mubr.f32.gmra.mrb[0].mxu0 %v3534
      %v3725 = vpop.f32.mrb[0].mxu0
      %v3726 = vadd.f32 0.0, %v3725
      %v3727 = vpop.f32.mrb[0].mxu0
      %3728 = vmatprep.mubr.f32.mxu0 0.0
      %3729 = vmatmul.mubr.f32.gmra.mrb[0].mxu0 %v3537
      %v3730 = vpop.f32.mrb[0].mxu0
      %v3731 = vadd.f32 0.0, %v3730
      %v3732 = vpop.f32.mrb[0].mxu0
      %3733 = vmatprep.mubr.f32.mxu0 0.0
      %3734 = vmatmul.mubr.f32.gmra.mrb[0].mxu0 %v3540
      %v3735 = vpop.f32.mrb[0].mxu0
      %v3736 = vadd.f32 0.0, %v3735
      %v3737 = vpop.f32.mrb[0].mxu0
      %3738 = vmatprep.mubr.f32.mxu0 0.0
      %3739 = vmatmul.mubr.f32.gmra.mrb[0].mxu0 %v3543
      %v3740 = vpop.f32.mrb[0].mxu0
      %v3741 = vadd.f32 0.0, %v3740
      %v3742 = vpop.f32.mrb[0].mxu0
      %3743 = vmatprep.mubr.f32.mxu0 0.0
      %3744 = vmatmul.mubr.f32.gmra.mrb[0].mxu0 %v3546
      %v3745 = vpop.f32.mrb[0].mxu0
      %v3746 = vadd.f32 0.0, %v3745
      %v3747 = vpop.f32.mrb[0].mxu0
      %3748 = vmatprep.mubr.f32.mxu0 0.0
      %3749 = vmatmul.mubr.f32.gmra.mrb[0].mxu0 %v3549
      %v3750 = vpop.f32.mrb[0].mxu0
      %v3751 = vadd.f32 0.0, %v3750
      %v3752 = vpop.f32.mrb[0].mxu0
      %3753 = vmatprep.mubr.f32.mxu0 0.0
      %3754 = vmatmul.mubr.f32.gmra.mrb[0].mxu0 %v3552
      %v3755 = vpop.f32.mrb[0].mxu0
      %v3756 = vadd.f32 0.0, %v3755
      %v3757 = vpop.f32.mrb[0].mxu0
      %3758 = vmatprep.mubr.f32.mxu0 0.0
      %3759 = vmatmul.mubr.f32.gmra.mrb[0].mxu0 %v3555
      %v3760 = vpop.f32.mrb[0].mxu0
      %v3761 = vadd.f32 0.0, %v3760
      %v3762 = vpop.f32.mrb[0].mxu0
      %3763 = vmatprep.mubr.f32.mxu0 0.0
      %3764 = vmatmul.mubr.f32.gmra.mrb[0].mxu0 %v3558
      %v3765 = vpop.f32.mrb[0].mxu0
      %v3766 = vadd.f32 0.0, %v3765
      %v3767 = vpop.f32.mrb[0].mxu0
      %3768 = vmatprep.mubr.f32.mxu0 0.0
      %3769 = vmatmul.mubr.f32.gmra.mrb[0].mxu0 %v3561
      %v3770 = vpop.f32.mrb[0].mxu0
      %v3771 = vadd.f32 0.0, %v3770
      %v3772 = vpop.f32.mrb[0].mxu0
      %3773 = vmatprep.mubr.f32.mxu0 0.0
      %3774 = vmatmul.mubr.f32.gmra.mrb[0].mxu0 %v3564
      %v3775 = vpop.f32.mrb[0].mxu0
      %v3776 = vadd.f32 0.0, %v3775
      %v3777 = vpop.f32.mrb[0].mxu0
      %3778 = vmatprep.mubr.f32.mxu0 0.0
      %3779 = vmatmul.mubr.f32.gmra.mrb[0].mxu0 %v3567
      %v3780 = vpop.f32.mrb[0].mxu0
      %v3781 = vadd.f32 0.0, %v3780
      %v3782 = vpop.f32.mrb[0].mxu0
      %3783 = vmatprep.mubr.f32.mxu0 0.0
      %3784 = vmatmul.mubr.f32.gmra.mrb[0].mxu0 %v3570
      %v3785 = vpop.f32.mrb[0].mxu0
      %v3786 = vadd.f32 0.0, %v3785
      %v3787 = vpop.f32.mrb[0].mxu0
      %3788 = vmatprep.mubr.f32.mxu0 0.0
      %3789 = vmatmul.mubr.f32.gmra.mrb[0].mxu0 %v3573
      %v3790 = vpop.f32.mrb[0].mxu0
      %v3791 = vadd.f32 0.0, %v3790
      %v3792 = vpop.f32.mrb[0].mxu0
      %3793 = vmatprep.mubr.f32.mxu0 0.0
      %3794 = vmatmul.mubr.f32.gmra.mrb[0].mxu0 %v3576
      %v3795 = vpop.f32.mrb[0].mxu0
      %v3796 = vadd.f32 0.0, %v3795
      %v3797 = vpop.f32.mrb[0].mxu0
      %3798 = vmatprep.mubr.f32.mxu0 0.0
      %3799 = vmatmul.mubr.f32.gmra.mrb[0].mxu0 %v3579
      %v3800 = vpop.f32.mrb[0].mxu0
      %v3801 = vadd.f32 0.0, %v3800
      %v3802 = vpop.f32.mrb[0].mxu0
      %3803 = vmatprep.mubr.f32.mxu0 0.0
      %3804 = vmatmul.mubr.f32.gmra.mrb[0].mxu0 %v3582
      %v3805 = vpop.f32.mrb[0].mxu0
      %v3806 = vadd.f32 0.0, %v3805
      %v3807 = vpop.f32.mrb[0].mxu0
      %3808 = vmatprep.mubr.f32.mxu0 0.0
      %3809 = vmatmul.mubr.f32.gmra.mrb[0].mxu0 %v3585
      %v3810 = vpop.f32.mrb[0].mxu0
      %v3811 = vadd.f32 0.0, %v3810
      %v3812 = vpop.f32.mrb[0].mxu0
      %3813 = vmatprep.mubr.f32.mxu0 0.0
      %3814 = vmatmul.mubr.f32.gmra.mrb[0].mxu0 %v3588
      %v3815 = vpop.f32.mrb[0].mxu0
      %v3816 = vadd.f32 0.0, %v3815
      %v3817 = vpop.f32.mrb[0].mxu0
      %3818 = vmatprep.mubr.f32.mxu0 0.0
      %3819 = vmatmul.mubr.f32.gmra.mrb[0].mxu0 %v3591
      %v3820 = vpop.f32.mrb[0].mxu0
      %v3821 = vadd.f32 0.0, %v3820
      %v3822 = vpop.f32.mrb[0].mxu0
      %3823 = vmatprep.mubr.f32.mxu0 0.0
      %3824 = vmatmul.mubr.f32.gmra.mrb[0].mxu0 %v3594
      %v3825 = vpop.f32.mrb[0].mxu0
      %v3826 = vadd.f32 0.0, %v3825
      %v3827 = vpop.f32.mrb[0].mxu0
      %3828 = vmatprep.mubr.f32.mxu0 0.0
      %3829 = vmatmul.mubr.f32.gmra.mrb[0].mxu0 %v3597
      %v3830 = vpop.f32.mrb[0].mxu0
      %v3831 = vadd.f32 0.0, %v3830
      %v3832 = vpop.f32.mrb[0].mxu0
      %3833 = vmatprep.mubr.f32.mxu0 0.0
      %3834 = vmatmul.mubr.f32.gmra.mrb[0].mxu0 %v3600
      %v3835 = vpop.f32.mrb[0].mxu0
      %v3836 = vadd.f32 0.0, %v3835
      %v3837 = vpop.f32.mrb[0].mxu0
      %3838 = vmatprep.mubr.f32.mxu0 0.0
      %3839 = vmatmul.mubr.f32.gmra.mrb[0].mxu0 %v3603
      %v3840 = vpop.f32.mrb[0].mxu0
      %v3841 = vadd.f32 0.0, %v3840
      %v3842 = vpop.f32.mrb[0].mxu0
      %3843 = vmatprep.mubr.f32.mxu0 0.0
      %3844 = vmatmul.mubr.f32.gmra.mrb[0].mxu0 %v3606
      %v3845 = vpop.f32.mrb[0].mxu0
      %v3846 = vadd.f32 0.0, %v3845
      %v3847 = vpop.f32.mrb[0].mxu0
      %3848 = vmatprep.mubr.f32.mxu0 0.0
      %3849 = vmatmul.mubr.f32.gmra.mrb[0].mxu0 %v3609
      %v3850 = vpop.f32.mrb[0].mxu0
      %v3851 = vadd.f32 0.0, %v3850
      %v3852 = vpop.f32.mrb[0].mxu0
      %3853 = vmatprep.mubr.f32.mxu0 0.0
      %3854 = vmatmul.mubr.f32.gmra.mrb[0].mxu0 %v3612
      %v3855 = vpop.f32.mrb[0].mxu0
      %v3856 = vadd.f32 0.0, %v3855
      %v3857 = vpop.f32.mrb[0].mxu0
      %3858 = vmatprep.mubr.f32.mxu0 0.0
      %3859 = vmatmul.mubr.f32.gmra.mrb[0].mxu0 %v3615
      %v3860 = vpop.f32.mrb[0].mxu0
      %v3861 = vadd.f32 0.0, %v3860
      %v3862 = vpop.f32.mrb[0].mxu0
      %3863 = vmatprep.mubr.f32.mxu0 0.0
      %3864 = vmatmul.mubr.f32.gmra.mrb[0].mxu0 %v3618
      %v3865 = vpop.f32.mrb[0].mxu0
      %v3866 = vadd.f32 0.0, %v3865
      %v3867 = vpop.f32.mrb[0].mxu0
      %3868 = vmatprep.mubr.f32.mxu0 0.0
      %3869 = vmatmul.mubr.f32.gmra.mrb[0].mxu0 %v3621
      %v3870 = vpop.f32.mrb[0].mxu0
      %v3871 = vadd.f32 0.0, %v3870
      %v3872 = vpop.f32.mrb[0].mxu0
      %3873 = vmatprep.mubr.f32.mxu0 0.0
      %3874 = vmatmul.mubr.f32.gmra.mrb[0].mxu0 %v3624
      %v3875 = vpop.f32.mrb[0].mxu0
      %v3876 = vadd.f32 0.0, %v3875
      %v3877 = vpop.f32.mrb[0].mxu0
      %3878 = vmatprep.mubr.f32.mxu0 0.0
      %3879 = vmatmul.mubr.f32.gmra.mrb[0].mxu0 %v3627
      %v3880 = vpop.f32.mrb[0].mxu0
      %v3881 = vadd.f32 0.0, %v3880
      %v3882 = vpop.f32.mrb[0].mxu0
      %3883 = vmatprep.mubr.f32.mxu0 0.0
      %3884 = vmatmul.mubr.f32.gmra.mrb[0].mxu0 %v3630
      %v3885 = vpop.f32.mrb[0].mxu0
      %v3886 = vadd.f32 0.0, %v3885
      %v3887 = vpop.f32.mrb[0].mxu0
      %3888 = vmatprep.mubr.f32.mxu0 0.0
      %3889 = vmatmul.mubr.f32.gmra.mrb[0].mxu0 %v3633
      %v3890 = vpop.f32.mrb[0].mxu0
      %v3891 = vadd.f32 0.0, %v3890
      %v3892 = vpop.f32.mrb[0].mxu0
      %3893 = vmatprep.mubr.f32.mxu0 0.0
      %3894 = vmatmul.mubr.f32.gmra.mrb[0].mxu0 %v3636
      %v3895 = vpop.f32.mrb[0].mxu0
      %v3896 = vadd.f32 0.0, %v3895
      %v3897 = vpop.f32.mrb[0].mxu0
      %3898 = vmatprep.mubr.f32.mxu0 0.0
      %3899 = vmatmul.mubr.f32.gmra.mrb[0].mxu0 %v3639
      %v3900 = vpop.f32.mrb[0].mxu0
      %v3901 = vadd.f32 0.0, %v3900
      %v3902 = vpop.f32.mrb[0].mxu0
      %3903 = vmatprep.mubr.f32.mxu0 0.0
      %3904 = vmatmul.mubr.f32.gmra.mrb[0].mxu0 %v3642
      %v3905 = vpop.f32.mrb[0].mxu0
      %v3906 = vadd.f32 0.0, %v3905
      %v3907 = vpop.f32.mrb[0].mxu0
      %3908 = vmatprep.mubr.f32.mxu0 0.0
      %3909 = vmatmul.mubr.f32.gmra.mrb[0].mxu0 %v3645
      %v3910 = vpop.f32.mrb[0].mxu0
      %v3911 = vadd.f32 0.0, %v3910
      %v3912 = vpop.f32.mrb[0].mxu0
      %3913 = vmatprep.mubr.f32.mxu0 0.0
      %3914 = vmatmul.mubr.f32.gmra.mrb[0].mxu0 %v3648
      %v3915 = vpop.f32.mrb[0].mxu0
      %v3916 = vadd.f32 0.0, %v3915
      %v3917 = vpop.f32.mrb[0].mxu0
      %3918 = vmatprep.mubr.f32.mxu0 0.0
      %3919 = vmatmul.mubr.f32.gmra.mrb[0].mxu0 %v3651
      %v3920 = vpop.f32.mrb[0].mxu0
      %v3921 = vadd.f32 0.0, %v3920
      %v3922 = vpop.f32.mrb[0].mxu0
      %3923 = vmatprep.mubr.f32.mxu0 0.0
      %3924 = vmatmul.mubr.f32.gmra.mrb[0].mxu0 %v3654
      %v3925 = vpop.f32.mrb[0].mxu0
      %v3926 = vadd.f32 0.0, %v3925
      %v3927 = vpop.f32.mrb[0].mxu0
      %3928 = vdwg.mxu0
      %v3929 = vadd.f32 %v3449, %v3726
      %v3930 = vadd.f32 %v3450, %v3731
      %v3931 = vadd.f32 %v3451, %v3736
      %v3932 = vadd.f32 %v3452, %v3741
      %v3933 = vadd.f32 %v3453, %v3746
      %v3934 = vadd.f32 %v3454, %v3751
      %v3935 = vadd.f32 %v3455, %v3756
      %v3936 = vadd.f32 %v3456, %v3761
      %v3937 = vadd.f32 %v3457, %v3766
      %v3938 = vadd.f32 %v3458, %v3771
      %v3939 = vadd.f32 %v3459, %v3776
      %v3940 = vadd.f32 %v3460, %v3781
      %v3941 = vadd.f32 %v3461, %v3786
      %v3942 = vadd.f32 %v3462, %v3791
      %v3943 = vadd.f32 %v3463, %v3796
      %v3944 = vadd.f32 %v3464, %v3801
      %v3945 = vadd.f32 %v3465, %v3806
      %v3946 = vadd.f32 %v3466, %v3811
      %v3947 = vadd.f32 %v3467, %v3816
      %v3948 = vadd.f32 %v3468, %v3821
      %v3949 = vadd.f32 %v3469, %v3826
      %v3950 = vadd.f32 %v3470, %v3831
      %v3951 = vadd.f32 %v3471, %v3836
      %v3952 = vadd.f32 %v3472, %v3841
      %v3953 = vadd.f32 %v3473, %v3846
      %v3954 = vadd.f32 %v3474, %v3851
      %v3955 = vadd.f32 %v3475, %v3856
      %v3956 = vadd.f32 %v3476, %v3861
      %v3957 = vadd.f32 %v3477, %v3866
      %v3958 = vadd.f32 %v3478, %v3871
      %v3959 = vadd.f32 %v3479, %v3876
      %v3960 = vadd.f32 %v3480, %v3881
      %v3961 = vadd.f32 %v3481, %v3886
      %v3962 = vadd.f32 %v3482, %v3891
      %v3963 = vadd.f32 %v3483, %v3896
      %v3964 = vadd.f32 %v3484, %v3901
      %v3965 = vadd.f32 %v3485, %v3906
      %v3966 = vadd.f32 %v3486, %v3911
      %v3967 = vadd.f32 %v3487, %v3916
      %v3968 = vadd.f32 %v3488, %v3921
      %v3969 = vadd.f32 %v3489, %v3926
      %v3970 = vld [vmem:[%s200 + $0x37] sm:$0xff]
      %v3971 = vld [vmem:[%s200 + $0x3f] sm:$0xff]
      %v3972 = vld [vmem:[%s200 + $0x47] sm:$0xff]
      %v3973 = vld [vmem:[%s200 + $0x4f] sm:$0xff]
      %v3974 = vld [vmem:[%s200 + $0x57] sm:$0xff]
      %v3975 = vld [vmem:[%s200 + $0x5f] sm:$0xff]
      %v3976 = vld [vmem:[%s200 + $0x67] sm:$0xff]
      %v3977 = vld [vmem:[%s200 + $0x6f] sm:$0xff]
      %v3978 = vld [vmem:[%s200 + $0x77] sm:$0xff]
      %v3979 = vld [vmem:[%s200 + $0x7f] sm:$0xff]
      %v3980 = vld [vmem:[%s200 + $0x87] sm:$0xff]
      %v3981 = vld [vmem:[%s200 + $0x8f] sm:$0xff]
      %v3982 = vld [vmem:[%s200 + $0x97] sm:$0xff]
      %v3983 = vld [vmem:[%s200 + $0x9f] sm:$0xff]
      %v3984 = vld [vmem:[%s200 + $0xa7] sm:$0xff]
      %v3985 = vld [vmem:[%s200 + $0xaf] sm:$0xff]
      %v3986 = vld [vmem:[%s200 + $0xb7] sm:$0xff]
      %v3987 = vld [vmem:[%s200 + $0xbf] sm:$0xff]
      %v3988 = vld [vmem:[%s200 + $0xc7] sm:$0xff]
      %v3989 = vld [vmem:[%s200 + $0xcf] sm:$0xff]
      %v3990 = vld [vmem:[%s200 + $0xd7] sm:$0xff]
      %v3991 = vld [vmem:[%s200 + $0xdf] sm:$0xff]
      %v3992 = vld [vmem:[%s200 + $0xe7] sm:$0xff]
      %v3993 = vld [vmem:[%s200 + $0xef] sm:$0xff]
      %v3994 = vld [vmem:[%s200 + $0xf7] sm:$0xff]
      %v3995 = vld [vmem:[%s200 + $0xff] sm:$0xff]
      %v3996 = vld [vmem:[%s200 + $0x107] sm:$0xff]
      %v3997 = vld [vmem:[%s200 + $0x10f] sm:$0xff]
      %v3998 = vld [vmem:[%s200 + $0x117] sm:$0xff]
      %v3999 = vld [vmem:[%s200 + $0x11f] sm:$0xff]
      %v4000 = vld [vmem:[%s200 + $0x127] sm:$0xff]
      %v4001 = vld [vmem:[%s200 + $0x12f] sm:$0xff]
      %v4002 = vld [vmem:[%s200 + $0x137] sm:$0xff]
      %v4003 = vld [vmem:[%s200 + $0x13f] sm:$0xff]
      %v4004 = vld [vmem:[%s200 + $0x147] sm:$0xff]
      %v4005 = vld [vmem:[%s200 + $0x14f] sm:$0xff]
      %v4006 = vld [vmem:[%s200 + $0x157] sm:$0xff]
      %v4007 = vld [vmem:[%s200 + $0x15f] sm:$0xff]
      %v4008 = vld [vmem:[%s200 + $0x167] sm:$0xff]
      %v4009 = vld [vmem:[%s200 + $0x16f] sm:$0xff]
      %v4010 = vld [vmem:[%s200 + $0x177] sm:$0xf]
      %s4011 = scalar_lea.vmem %s1, 32
      %v4012 = vld [vmem:[%s4011] sm:$0xf]
      %v4014 = vsel %vm296, %v3970, 0
      %v4017 = vsel %vm296, %v3971, 0
      %v4020 = vsel %vm296, %v3972, 0
      %v4023 = vsel %vm296, %v3973, 0
      %v4026 = vsel %vm296, %v3974, 0
      %v4029 = vsel %vm296, %v3975, 0
      %v4032 = vsel %vm296, %v3976, 0
      %v4035 = vsel %vm296, %v3977, 0
      %v4038 = vsel %vm296, %v3978, 0
      %v4041 = vsel %vm296, %v3979, 0
      %v4044 = vsel %vm296, %v3980, 0
      %v4047 = vsel %vm296, %v3981, 0
      %v4050 = vsel %vm296, %v3982, 0
      %v4053 = vsel %vm296, %v3983, 0
      %v4056 = vsel %vm296, %v3984, 0
      %v4059 = vsel %vm296, %v3985, 0
      %v4062 = vsel %vm296, %v3986, 0
      %v4065 = vsel %vm296, %v3987, 0
      %v4068 = vsel %vm296, %v3988, 0
      %v4071 = vsel %vm296, %v3989, 0
      %v4074 = vsel %vm296, %v3990, 0
      %v4077 = vsel %vm296, %v3991, 0
      %v4080 = vsel %vm296, %v3992, 0
      %v4083 = vsel %vm296, %v3993, 0
      %v4086 = vsel %vm296, %v3994, 0
      %v4089 = vsel %vm296, %v3995, 0
      %v4092 = vsel %vm296, %v3996, 0
      %v4095 = vsel %vm296, %v3997, 0
      %v4098 = vsel %vm296, %v3998, 0
      %v4101 = vsel %vm296, %v3999, 0
      %v4104 = vsel %vm296, %v4000, 0
      %v4107 = vsel %vm296, %v4001, 0
      %v4110 = vsel %vm296, %v4002, 0
      %v4113 = vsel %vm296, %v4003, 0
      %v4116 = vsel %vm296, %v4004, 0
      %v4119 = vsel %vm296, %v4005, 0
      %v4122 = vsel %vm296, %v4006, 0
      %v4125 = vsel %vm296, %v4007, 0
      %v4128 = vsel %vm296, %v4008, 0
      %v4131 = vsel %vm296, %v4009, 0
      %v4134 = vsel %vm296, %v4010, 0
      %v4137 = vsel %vm420, %v4012, 0
      %4139 = vmatprep.subr.mxu0 0.0
      %4140 = vmatpush1.msra.mxu0 %v4137
      %4141 = vmatprep.subr.mxu0 0.0
      %4142 = vmatpush1.msra.mxu0 0.0
      %4143 = vmatprep.subr.mxu0 0.0
      %4144 = vmatpush1.msra.mxu0 0.0
      %4145 = vmatprep.subr.mxu0 0.0
      %4146 = vmatpush1.msra.mxu0 0.0
      %4147 = vmatprep.subr.mxu0 0.0
      %4148 = vmatpush1.msra.mxu0 0.0
      %4149 = vmatprep.subr.mxu0 0.0
      %4150 = vmatpush1.msra.mxu0 0.0
      %4151 = vmatprep.subr.mxu0 0.0
      %4152 = vmatpush1.msra.mxu0 0.0
      %4153 = vmatprep.subr.mxu0 0.0
      %4154 = vmatpush1.msra.mxu0 0.0
      %4155 = vmatprep.subr.mxu0 0.0
      %4156 = vmatpush1.msra.mxu0 0.0
      %4157 = vmatprep.subr.mxu0 0.0
      %4158 = vmatpush1.msra.mxu0 0.0
      %4159 = vmatprep.subr.mxu0 0.0
      %4160 = vmatpush1.msra.mxu0 0.0
      %4161 = vmatprep.subr.mxu0 0.0
      %4162 = vmatpush1.msra.mxu0 0.0
      %4163 = vmatprep.subr.mxu0 0.0
      %4164 = vmatpush1.msra.mxu0 0.0
      %4165 = vmatprep.subr.mxu0 0.0
      %4166 = vmatpush1.msra.mxu0 0.0
      %4167 = vmatprep.subr.mxu0 0.0
      %4168 = vmatpush1.msra.mxu0 0.0
      %4169 = vmatprep.subr.mxu0 0.0
      %4170 = vmatpush1.msra.mxu0 0.0
      %4171 = vmatprep.subr.mxu0 0.0
      %4172 = vmatpush1.msra.mxu0 0.0
      %4173 = vmatprep.subr.mxu0 0.0
      %4174 = vmatpush1.msra.mxu0 0.0
      %4175 = vmatprep.subr.mxu0 0.0
      %4176 = vmatpush1.msra.mxu0 0.0
      %4177 = vmatprep.subr.mxu0 0.0
      %4178 = vmatpush1.msra.mxu0 0.0
      %4179 = vmatprep.subr.mxu0 0.0
      %4180 = vmatpush1.msra.mxu0 0.0
      %4181 = vmatprep.subr.mxu0 0.0
      %4182 = vmatpush1.msra.mxu0 0.0
      %4183 = vmatprep.subr.mxu0 0.0
      %4184 = vmatpush1.msra.mxu0 0.0
      %4185 = vmatprep.subr.mxu0 0.0
      %4186 = vmatpush1.msra.mxu0 0.0
      %4187 = vmatprep.subr.mxu0 0.0
      %4188 = vmatpush1.msra.mxu0 0.0
      %4189 = vmatprep.subr.mxu0 0.0
      %4190 = vmatpush1.msra.mxu0 0.0
      %4191 = vmatprep.subr.mxu0 0.0
      %4192 = vmatpush1.msra.mxu0 0.0
      %4193 = vmatprep.subr.mxu0 0.0
      %4194 = vmatpush1.msra.mxu0 0.0
      %4195 = vmatprep.subr.mxu0 0.0
      %4196 = vmatpush1.msra.mxu0 0.0
      %4197 = vmatprep.subr.mxu0 0.0
      %4198 = vmatpush1.msra.mxu0 0.0
      %4199 = vmatprep.subr.mxu0 0.0
      %4200 = vmatpush1.msra.mxu0 0.0
      %4201 = vmatprep.subr.mxu0 0.0
      %4202 = vmatpush1.msra.mxu0 0.0
      %4203 = vmatprep.mubr.f32.mxu0 0.0
      %4204 = vmatmul.mubr.f32.gmra.mrb[0].mxu0 %v4014
      %v4205 = vpop.f32.mrb[0].mxu0
      %v4206 = vadd.f32 0.0, %v4205
      %v4207 = vpop.f32.mrb[0].mxu0
      %4208 = vmatprep.mubr.f32.mxu0 0.0
      %4209 = vmatmul.mubr.f32.gmra.mrb[0].mxu0 %v4017
      %v4210 = vpop.f32.mrb[0].mxu0
      %v4211 = vadd.f32 0.0, %v4210
      %v4212 = vpop.f32.mrb[0].mxu0
      %4213 = vmatprep.mubr.f32.mxu0 0.0
      %4214 = vmatmul.mubr.f32.gmra.mrb[0].mxu0 %v4020
      %v4215 = vpop.f32.mrb[0].mxu0
      %v4216 = vadd.f32 0.0, %v4215
      %v4217 = vpop.f32.mrb[0].mxu0
      %4218 = vmatprep.mubr.f32.mxu0 0.0
      %4219 = vmatmul.mubr.f32.gmra.mrb[0].mxu0 %v4023
      %v4220 = vpop.f32.mrb[0].mxu0
      %v4221 = vadd.f32 0.0, %v4220
      %v4222 = vpop.f32.mrb[0].mxu0
      %4223 = vmatprep.mubr.f32.mxu0 0.0
      %4224 = vmatmul.mubr.f32.gmra.mrb[0].mxu0 %v4026
      %v4225 = vpop.f32.mrb[0].mxu0
      %v4226 = vadd.f32 0.0, %v4225
      %v4227 = vpop.f32.mrb[0].mxu0
      %4228 = vmatprep.mubr.f32.mxu0 0.0
      %4229 = vmatmul.mubr.f32.gmra.mrb[0].mxu0 %v4029
      %v4230 = vpop.f32.mrb[0].mxu0
      %v4231 = vadd.f32 0.0, %v4230
      %v4232 = vpop.f32.mrb[0].mxu0
      %4233 = vmatprep.mubr.f32.mxu0 0.0
      %4234 = vmatmul.mubr.f32.gmra.mrb[0].mxu0 %v4032
      %v4235 = vpop.f32.mrb[0].mxu0
      %v4236 = vadd.f32 0.0, %v4235
      %v4237 = vpop.f32.mrb[0].mxu0
      %4238 = vmatprep.mubr.f32.mxu0 0.0
      %4239 = vmatmul.mubr.f32.gmra.mrb[0].mxu0 %v4035
      %v4240 = vpop.f32.mrb[0].mxu0
      %v4241 = vadd.f32 0.0, %v4240
      %v4242 = vpop.f32.mrb[0].mxu0
      %4243 = vmatprep.mubr.f32.mxu0 0.0
      %4244 = vmatmul.mubr.f32.gmra.mrb[0].mxu0 %v4038
      %v4245 = vpop.f32.mrb[0].mxu0
      %v4246 = vadd.f32 0.0, %v4245
      %v4247 = vpop.f32.mrb[0].mxu0
      %4248 = vmatprep.mubr.f32.mxu0 0.0
      %4249 = vmatmul.mubr.f32.gmra.mrb[0].mxu0 %v4041
      %v4250 = vpop.f32.mrb[0].mxu0
      %v4251 = vadd.f32 0.0, %v4250
      %v4252 = vpop.f32.mrb[0].mxu0
      %4253 = vmatprep.mubr.f32.mxu0 0.0
      %4254 = vmatmul.mubr.f32.gmra.mrb[0].mxu0 %v4044
      %v4255 = vpop.f32.mrb[0].mxu0
      %v4256 = vadd.f32 0.0, %v4255
      %v4257 = vpop.f32.mrb[0].mxu0
      %4258 = vmatprep.mubr.f32.mxu0 0.0
      %4259 = vmatmul.mubr.f32.gmra.mrb[0].mxu0 %v4047
      %v4260 = vpop.f32.mrb[0].mxu0
      %v4261 = vadd.f32 0.0, %v4260
      %v4262 = vpop.f32.mrb[0].mxu0
      %4263 = vmatprep.mubr.f32.mxu0 0.0
      %4264 = vmatmul.mubr.f32.gmra.mrb[0].mxu0 %v4050
      %v4265 = vpop.f32.mrb[0].mxu0
      %v4266 = vadd.f32 0.0, %v4265
      %v4267 = vpop.f32.mrb[0].mxu0
      %4268 = vmatprep.mubr.f32.mxu0 0.0
      %4269 = vmatmul.mubr.f32.gmra.mrb[0].mxu0 %v4053
      %v4270 = vpop.f32.mrb[0].mxu0
      %v4271 = vadd.f32 0.0, %v4270
      %v4272 = vpop.f32.mrb[0].mxu0
      %4273 = vmatprep.mubr.f32.mxu0 0.0
      %4274 = vmatmul.mubr.f32.gmra.mrb[0].mxu0 %v4056
      %v4275 = vpop.f32.mrb[0].mxu0
      %v4276 = vadd.f32 0.0, %v4275
      %v4277 = vpop.f32.mrb[0].mxu0
      %4278 = vmatprep.mubr.f32.mxu0 0.0
      %4279 = vmatmul.mubr.f32.gmra.mrb[0].mxu0 %v4059
      %v4280 = vpop.f32.mrb[0].mxu0
      %v4281 = vadd.f32 0.0, %v4280
      %v4282 = vpop.f32.mrb[0].mxu0
      %4283 = vmatprep.mubr.f32.mxu0 0.0
      %4284 = vmatmul.mubr.f32.gmra.mrb[0].mxu0 %v4062
      %v4285 = vpop.f32.mrb[0].mxu0
      %v4286 = vadd.f32 0.0, %v4285
      %v4287 = vpop.f32.mrb[0].mxu0
      %4288 = vmatprep.mubr.f32.mxu0 0.0
      %4289 = vmatmul.mubr.f32.gmra.mrb[0].mxu0 %v4065
      %v4290 = vpop.f32.mrb[0].mxu0
      %v4291 = vadd.f32 0.0, %v4290
      %v4292 = vpop.f32.mrb[0].mxu0
      %4293 = vmatprep.mubr.f32.mxu0 0.0
      %4294 = vmatmul.mubr.f32.gmra.mrb[0].mxu0 %v4068
      %v4295 = vpop.f32.mrb[0].mxu0
      %v4296 = vadd.f32 0.0, %v4295
      %v4297 = vpop.f32.mrb[0].mxu0
      %4298 = vmatprep.mubr.f32.mxu0 0.0
      %4299 = vmatmul.mubr.f32.gmra.mrb[0].mxu0 %v4071
      %v4300 = vpop.f32.mrb[0].mxu0
      %v4301 = vadd.f32 0.0, %v4300
      %v4302 = vpop.f32.mrb[0].mxu0
      %4303 = vmatprep.mubr.f32.mxu0 0.0
      %4304 = vmatmul.mubr.f32.gmra.mrb[0].mxu0 %v4074
      %v4305 = vpop.f32.mrb[0].mxu0
      %v4306 = vadd.f32 0.0, %v4305
      %v4307 = vpop.f32.mrb[0].mxu0
      %4308 = vmatprep.mubr.f32.mxu0 0.0
      %4309 = vmatmul.mubr.f32.gmra.mrb[0].mxu0 %v4077
      %v4310 = vpop.f32.mrb[0].mxu0
      %v4311 = vadd.f32 0.0, %v4310
      %v4312 = vpop.f32.mrb[0].mxu0
      %4313 = vmatprep.mubr.f32.mxu0 0.0
      %4314 = vmatmul.mubr.f32.gmra.mrb[0].mxu0 %v4080
      %v4315 = vpop.f32.mrb[0].mxu0
      %v4316 = vadd.f32 0.0, %v4315
      %v4317 = vpop.f32.mrb[0].mxu0
      %4318 = vmatprep.mubr.f32.mxu0 0.0
      %4319 = vmatmul.mubr.f32.gmra.mrb[0].mxu0 %v4083
      %v4320 = vpop.f32.mrb[0].mxu0
      %v4321 = vadd.f32 0.0, %v4320
      %v4322 = vpop.f32.mrb[0].mxu0
      %4323 = vmatprep.mubr.f32.mxu0 0.0
      %4324 = vmatmul.mubr.f32.gmra.mrb[0].mxu0 %v4086
      %v4325 = vpop.f32.mrb[0].mxu0
      %v4326 = vadd.f32 0.0, %v4325
      %v4327 = vpop.f32.mrb[0].mxu0
      %4328 = vmatprep.mubr.f32.mxu0 0.0
      %4329 = vmatmul.mubr.f32.gmra.mrb[0].mxu0 %v4089
      %v4330 = vpop.f32.mrb[0].mxu0
      %v4331 = vadd.f32 0.0, %v4330
      %v4332 = vpop.f32.mrb[0].mxu0
      %4333 = vmatprep.mubr.f32.mxu0 0.0
      %4334 = vmatmul.mubr.f32.gmra.mrb[0].mxu0 %v4092
      %v4335 = vpop.f32.mrb[0].mxu0
      %v4336 = vadd.f32 0.0, %v4335
      %v4337 = vpop.f32.mrb[0].mxu0
      %4338 = vmatprep.mubr.f32.mxu0 0.0
      %4339 = vmatmul.mubr.f32.gmra.mrb[0].mxu0 %v4095
      %v4340 = vpop.f32.mrb[0].mxu0
      %v4341 = vadd.f32 0.0, %v4340
      %v4342 = vpop.f32.mrb[0].mxu0
      %4343 = vmatprep.mubr.f32.mxu0 0.0
      %4344 = vmatmul.mubr.f32.gmra.mrb[0].mxu0 %v4098
      %v4345 = vpop.f32.mrb[0].mxu0
      %v4346 = vadd.f32 0.0, %v4345
      %v4347 = vpop.f32.mrb[0].mxu0
      %4348 = vmatprep.mubr.f32.mxu0 0.0
      %4349 = vmatmul.mubr.f32.gmra.mrb[0].mxu0 %v4101
      %v4350 = vpop.f32.mrb[0].mxu0
      %v4351 = vadd.f32 0.0, %v4350
      %v4352 = vpop.f32.mrb[0].mxu0
      %4353 = vmatprep.mubr.f32.mxu0 0.0
      %4354 = vmatmul.mubr.f32.gmra.mrb[0].mxu0 %v4104
      %v4355 = vpop.f32.mrb[0].mxu0
      %v4356 = vadd.f32 0.0, %v4355
      %v4357 = vpop.f32.mrb[0].mxu0
      %4358 = vmatprep.mubr.f32.mxu0 0.0
      %4359 = vmatmul.mubr.f32.gmra.mrb[0].mxu0 %v4107
      %v4360 = vpop.f32.mrb[0].mxu0
      %v4361 = vadd.f32 0.0, %v4360
      %v4362 = vpop.f32.mrb[0].mxu0
      %4363 = vmatprep.mubr.f32.mxu0 0.0
      %4364 = vmatmul.mubr.f32.gmra.mrb[0].mxu0 %v4110
      %v4365 = vpop.f32.mrb[0].mxu0
      %v4366 = vadd.f32 0.0, %v4365
      %v4367 = vpop.f32.mrb[0].mxu0
      %4368 = vmatprep.mubr.f32.mxu0 0.0
      %4369 = vmatmul.mubr.f32.gmra.mrb[0].mxu0 %v4113
      %v4370 = vpop.f32.mrb[0].mxu0
      %v4371 = vadd.f32 0.0, %v4370
      %v4372 = vpop.f32.mrb[0].mxu0
      %4373 = vmatprep.mubr.f32.mxu0 0.0
      %4374 = vmatmul.mubr.f32.gmra.mrb[0].mxu0 %v4116
      %v4375 = vpop.f32.mrb[0].mxu0
      %v4376 = vadd.f32 0.0, %v4375
      %v4377 = vpop.f32.mrb[0].mxu0
      %4378 = vmatprep.mubr.f32.mxu0 0.0
      %4379 = vmatmul.mubr.f32.gmra.mrb[0].mxu0 %v4119
      %v4380 = vpop.f32.mrb[0].mxu0
      %v4381 = vadd.f32 0.0, %v4380
      %v4382 = vpop.f32.mrb[0].mxu0
      %4383 = vmatprep.mubr.f32.mxu0 0.0
      %4384 = vmatmul.mubr.f32.gmra.mrb[0].mxu0 %v4122
      %v4385 = vpop.f32.mrb[0].mxu0
      %v4386 = vadd.f32 0.0, %v4385
      %v4387 = vpop.f32.mrb[0].mxu0
      %4388 = vmatprep.mubr.f32.mxu0 0.0
      %4389 = vmatmul.mubr.f32.gmra.mrb[0].mxu0 %v4125
      %v4390 = vpop.f32.mrb[0].mxu0
      %v4391 = vadd.f32 0.0, %v4390
      %v4392 = vpop.f32.mrb[0].mxu0
      %4393 = vmatprep.mubr.f32.mxu0 0.0
      %4394 = vmatmul.mubr.f32.gmra.mrb[0].mxu0 %v4128
      %v4395 = vpop.f32.mrb[0].mxu0
      %v4396 = vadd.f32 0.0, %v4395
      %v4397 = vpop.f32.mrb[0].mxu0
      %4398 = vmatprep.mubr.f32.mxu0 0.0
      %4399 = vmatmul.mubr.f32.gmra.mrb[0].mxu0 %v4131
      %v4400 = vpop.f32.mrb[0].mxu0
      %v4401 = vadd.f32 0.0, %v4400
      %v4402 = vpop.f32.mrb[0].mxu0
      %4403 = vmatprep.mubr.f32.mxu0 0.0
      %4404 = vmatmul.mubr.f32.gmra.mrb[0].mxu0 %v4134
      %v4405 = vpop.f32.mrb[0].mxu0
      %v4406 = vadd.f32 0.0, %v4405
      %v4407 = vpop.f32.mrb[0].mxu0
      %4408 = vdwg.mxu0
      %v4409 = vadd.f32 %v3929, %v4206
      %v4410 = vadd.f32 %v3930, %v4211
      %v4411 = vadd.f32 %v3931, %v4216
      %v4412 = vadd.f32 %v3932, %v4221
      %v4413 = vadd.f32 %v3933, %v4226
      %v4414 = vadd.f32 %v3934, %v4231
      %v4415 = vadd.f32 %v3935, %v4236
      %v4416 = vadd.f32 %v3936, %v4241
      %v4417 = vadd.f32 %v3937, %v4246
      %v4418 = vadd.f32 %v3938, %v4251
      %v4419 = vadd.f32 %v3939, %v4256
      %v4420 = vadd.f32 %v3940, %v4261
      %v4421 = vadd.f32 %v3941, %v4266
      %v4422 = vadd.f32 %v3942, %v4271
      %v4423 = vadd.f32 %v3943, %v4276
      %v4424 = vadd.f32 %v3944, %v4281
      %v4425 = vadd.f32 %v3945, %v4286
      %v4426 = vadd.f32 %v3946, %v4291
      %v4427 = vadd.f32 %v3947, %v4296
      %v4428 = vadd.f32 %v3948, %v4301
      %v4429 = vadd.f32 %v3949, %v4306
      %v4430 = vadd.f32 %v3950, %v4311
      %v4431 = vadd.f32 %v3951, %v4316
      %v4432 = vadd.f32 %v3952, %v4321
      %v4433 = vadd.f32 %v3953, %v4326
      %v4434 = vadd.f32 %v3954, %v4331
      %v4435 = vadd.f32 %v3955, %v4336
      %v4436 = vadd.f32 %v3956, %v4341
      %v4437 = vadd.f32 %v3957, %v4346
      %v4438 = vadd.f32 %v3958, %v4351
      %v4439 = vadd.f32 %v3959, %v4356
      %v4440 = vadd.f32 %v3960, %v4361
      %v4441 = vadd.f32 %v3961, %v4366
      %v4442 = vadd.f32 %v3962, %v4371
      %v4443 = vadd.f32 %v3963, %v4376
      %v4444 = vadd.f32 %v3964, %v4381
      %v4445 = vadd.f32 %v3965, %v4386
      %v4446 = vadd.f32 %v3966, %v4391
      %v4447 = vadd.f32 %v3967, %v4396
      %v4448 = vadd.f32 %v3968, %v4401
      %v4449 = vadd.f32 %v3969, %v4406
      %v4450 = vld [vmem:[%s2] sm:$0x1]
      %v4452 = vlaneseq
      %v4453 = vshrl.u32 %v4452, 7
      %v4454 = vsub.s32 0, %v4453
      %v4455 = vrot.slane %v4450, %v4454
      %v4457 = vadd.f32 %v4409, %v4455
      %v4458 = vadd.f32 %v4410, %v4455
      %v4459 = vadd.f32 %v4411, %v4455
      %v4460 = vadd.f32 %v4412, %v4455
      %v4461 = vadd.f32 %v4413, %v4455
      %v4462 = vadd.f32 %v4414, %v4455
      %v4463 = vadd.f32 %v4415, %v4455
      %v4464 = vadd.f32 %v4416, %v4455
      %v4465 = vadd.f32 %v4417, %v4455
      %v4466 = vadd.f32 %v4418, %v4455
      %v4467 = vadd.f32 %v4419, %v4455
      %v4468 = vadd.f32 %v4420, %v4455
      %v4469 = vadd.f32 %v4421, %v4455
      %v4470 = vadd.f32 %v4422, %v4455
      %v4471 = vadd.f32 %v4423, %v4455
      %v4472 = vadd.f32 %v4424, %v4455
      %v4473 = vadd.f32 %v4425, %v4455
      %v4474 = vadd.f32 %v4426, %v4455
      %v4475 = vadd.f32 %v4427, %v4455
      %v4476 = vadd.f32 %v4428, %v4455
      %v4477 = vadd.f32 %v4429, %v4455
      %v4478 = vadd.f32 %v4430, %v4455
      %v4479 = vadd.f32 %v4431, %v4455
      %v4480 = vadd.f32 %v4432, %v4455
      %v4481 = vadd.f32 %v4433, %v4455
      %v4482 = vadd.f32 %v4434, %v4455
      %v4483 = vadd.f32 %v4435, %v4455
      %v4484 = vadd.f32 %v4436, %v4455
      %v4485 = vadd.f32 %v4437, %v4455
      %v4486 = vadd.f32 %v4438, %v4455
      %v4487 = vadd.f32 %v4439, %v4455
      %v4488 = vadd.f32 %v4440, %v4455
      %v4489 = vadd.f32 %v4441, %v4455
      %v4490 = vadd.f32 %v4442, %v4455
      %v4491 = vadd.f32 %v4443, %v4455
      %v4492 = vadd.f32 %v4444, %v4455
      %v4493 = vadd.f32 %v4445, %v4455
      %v4494 = vadd.f32 %v4446, %v4455
      %v4495 = vadd.f32 %v4447, %v4455
      %v4496 = vadd.f32 %v4448, %v4455
      %v4497 = vadd.f32 %v4449, %v4455
      %vm4498 = vcmask 64512
      %4499 = vst.msk [vmem:[%s205] sm:$0xff] %vm4498, %v4457
      %4500 = vst.msk [vmem:[%s205 + $0x8] sm:$0xff] %vm4498, %v4458
      %4501 = vst.msk [vmem:[%s205 + $0x10] sm:$0xff] %vm4498, %v4459
      %4502 = vst.msk [vmem:[%s205 + $0x18] sm:$0xff] %vm4498, %v4460
      %4503 = vst.msk [vmem:[%s205 + $0x20] sm:$0xff] %vm4498, %v4461
      %4504 = vst.msk [vmem:[%s205 + $0x28] sm:$0xff] %vm4498, %v4462
      %4505 = vst.msk [vmem:[%s205 + $0x30] sm:$0xff] %vm4498, %v4463
      %4506 = vst.msk [vmem:[%s205 + $0x38] sm:$0xff] %vm4498, %v4464
      %4507 = vst.msk [vmem:[%s205 + $0x40] sm:$0xff] %vm4498, %v4465
      %4508 = vst.msk [vmem:[%s205 + $0x48] sm:$0xff] %vm4498, %v4466
      %4509 = vst.msk [vmem:[%s205 + $0x50] sm:$0xff] %vm4498, %v4467
      %4510 = vst.msk [vmem:[%s205 + $0x58] sm:$0xff] %vm4498, %v4468
      %4511 = vst.msk [vmem:[%s205 + $0x60] sm:$0xff] %vm4498, %v4469
      %4512 = vst.msk [vmem:[%s205 + $0x68] sm:$0xff] %vm4498, %v4470
      %4513 = vst.msk [vmem:[%s205 + $0x70] sm:$0xff] %vm4498, %v4471
      %4514 = vst.msk [vmem:[%s205 + $0x78] sm:$0xff] %vm4498, %v4472
      %4515 = vst.msk [vmem:[%s205 + $0x80] sm:$0xff] %vm4498, %v4473
      %4516 = vst.msk [vmem:[%s205 + $0x88] sm:$0xff] %vm4498, %v4474
      %4517 = vst.msk [vmem:[%s205 + $0x90] sm:$0xff] %vm4498, %v4475
      %4518 = vst.msk [vmem:[%s205 + $0x98] sm:$0xff] %vm4498, %v4476
      %4519 = vst.msk [vmem:[%s205 + $0xa0] sm:$0xff] %vm4498, %v4477
      %4520 = vst.msk [vmem:[%s205 + $0xa8] sm:$0xff] %vm4498, %v4478
      %4521 = vst.msk [vmem:[%s205 + $0xb0] sm:$0xff] %vm4498, %v4479
      %4522 = vst.msk [vmem:[%s205 + $0xb8] sm:$0xff] %vm4498, %v4480
      %4523 = vst.msk [vmem:[%s205 + $0xc0] sm:$0xff] %vm4498, %v4481
      %4524 = vst.msk [vmem:[%s205 + $0xc8] sm:$0xff] %vm4498, %v4482
      %4525 = vst.msk [vmem:[%s205 + $0xd0] sm:$0xff] %vm4498, %v4483
      %4526 = vst.msk [vmem:[%s205 + $0xd8] sm:$0xff] %vm4498, %v4484
      %4527 = vst.msk [vmem:[%s205 + $0xe0] sm:$0xff] %vm4498, %v4485
      %4528 = vst.msk [vmem:[%s205 + $0xe8] sm:$0xff] %vm4498, %v4486
      %4529 = vst.msk [vmem:[%s205 + $0xf0] sm:$0xff] %vm4498, %v4487
      %4530 = vst.msk [vmem:[%s205 + $0xf8] sm:$0xff] %vm4498, %v4488
      %4531 = vst.msk [vmem:[%s205 + $0x100] sm:$0xff] %vm4498, %v4489
      %4532 = vst.msk [vmem:[%s205 + $0x108] sm:$0xff] %vm4498, %v4490
      %4533 = vst.msk [vmem:[%s205 + $0x110] sm:$0xff] %vm4498, %v4491
      %4534 = vst.msk [vmem:[%s205 + $0x118] sm:$0xff] %vm4498, %v4492
      %4535 = vst.msk [vmem:[%s205 + $0x120] sm:$0xff] %vm4498, %v4493
      %4536 = vst.msk [vmem:[%s205 + $0x128] sm:$0xff] %vm4498, %v4494
      %4537 = vst.msk [vmem:[%s205 + $0x130] sm:$0xff] %vm4498, %v4495
      %4538 = vst.msk [vmem:[%s205 + $0x138] sm:$0xff] %vm4498, %v4496
      %vm4539 = vcmask 60416
      %4540 = vst.msk [vmem:[%s205 + $0x140] sm:$0xf] %vm4539, %v4497
      %v4541 = vmax.f32 %v4457, 0.0
      %v4542 = vmax.f32 %v4458, 0.0
      %v4543 = vmax.f32 %v4459, 0.0
      %v4544 = vmax.f32 %v4460, 0.0
      %v4545 = vmax.f32 %v4461, 0.0
      %v4546 = vmax.f32 %v4462, 0.0
      %v4547 = vmax.f32 %v4463, 0.0
      %v4548 = vmax.f32 %v4464, 0.0
      %v4549 = vmax.f32 %v4465, 0.0
      %v4550 = vmax.f32 %v4466, 0.0
      %v4551 = vmax.f32 %v4467, 0.0
      %v4552 = vmax.f32 %v4468, 0.0
      %v4553 = vmax.f32 %v4469, 0.0
      %v4554 = vmax.f32 %v4470, 0.0
      %v4555 = vmax.f32 %v4471, 0.0
      %v4556 = vmax.f32 %v4472, 0.0
      %v4557 = vmax.f32 %v4473, 0.0
      %v4558 = vmax.f32 %v4474, 0.0
      %v4559 = vmax.f32 %v4475, 0.0
      %v4560 = vmax.f32 %v4476, 0.0
      %v4561 = vmax.f32 %v4477, 0.0
      %v4562 = vmax.f32 %v4478, 0.0
      %v4563 = vmax.f32 %v4479, 0.0
      %v4564 = vmax.f32 %v4480, 0.0
      %v4565 = vmax.f32 %v4481, 0.0
      %v4566 = vmax.f32 %v4482, 0.0
      %v4567 = vmax.f32 %v4483, 0.0
      %v4568 = vmax.f32 %v4484, 0.0
      %v4569 = vmax.f32 %v4485, 0.0
      %v4570 = vmax.f32 %v4486, 0.0
      %v4571 = vmax.f32 %v4487, 0.0
      %v4572 = vmax.f32 %v4488, 0.0
      %v4573 = vmax.f32 %v4489, 0.0
      %v4574 = vmax.f32 %v4490, 0.0
      %v4575 = vmax.f32 %v4491, 0.0
      %v4576 = vmax.f32 %v4492, 0.0
      %v4577 = vmax.f32 %v4493, 0.0
      %v4578 = vmax.f32 %v4494, 0.0
      %v4579 = vmax.f32 %v4495, 0.0
      %v4580 = vmax.f32 %v4496, 0.0
      %v4581 = vmax.f32 %v4497, 0.0
      %4582 = vst.msk [vmem:[%s210] sm:$0xff] %vm4498, %v4541
      %4583 = vst.msk [vmem:[%s210 + $0x8] sm:$0xff] %vm4498, %v4542
      %4584 = vst.msk [vmem:[%s210 + $0x10] sm:$0xff] %vm4498, %v4543
      %4585 = vst.msk [vmem:[%s210 + $0x18] sm:$0xff] %vm4498, %v4544
      %4586 = vst.msk [vmem:[%s210 + $0x20] sm:$0xff] %vm4498, %v4545
      %4587 = vst.msk [vmem:[%s210 + $0x28] sm:$0xff] %vm4498, %v4546
      %4588 = vst.msk [vmem:[%s210 + $0x30] sm:$0xff] %vm4498, %v4547
      %4589 = vst.msk [vmem:[%s210 + $0x38] sm:$0xff] %vm4498, %v4548
      %4590 = vst.msk [vmem:[%s210 + $0x40] sm:$0xff] %vm4498, %v4549
      %4591 = vst.msk [vmem:[%s210 + $0x48] sm:$0xff] %vm4498, %v4550
      %4592 = vst.msk [vmem:[%s210 + $0x50] sm:$0xff] %vm4498, %v4551
      %4593 = vst.msk [vmem:[%s210 + $0x58] sm:$0xff] %vm4498, %v4552
      %4594 = vst.msk [vmem:[%s210 + $0x60] sm:$0xff] %vm4498, %v4553
      %4595 = vst.msk [vmem:[%s210 + $0x68] sm:$0xff] %vm4498, %v4554
      %4596 = vst.msk [vmem:[%s210 + $0x70] sm:$0xff] %vm4498, %v4555
      %4597 = vst.msk [vmem:[%s210 + $0x78] sm:$0xff] %vm4498, %v4556
      %4598 = vst.msk [vmem:[%s210 + $0x80] sm:$0xff] %vm4498, %v4557
      %4599 = vst.msk [vmem:[%s210 + $0x88] sm:$0xff] %vm4498, %v4558
      %4600 = vst.msk [vmem:[%s210 + $0x90] sm:$0xff] %vm4498, %v4559
      %4601 = vst.msk [vmem:[%s210 + $0x98] sm:$0xff] %vm4498, %v4560
      %4602 = vst.msk [vmem:[%s210 + $0xa0] sm:$0xff] %vm4498, %v4561
      %4603 = vst.msk [vmem:[%s210 + $0xa8] sm:$0xff] %vm4498, %v4562
      %4604 = vst.msk [vmem:[%s210 + $0xb0] sm:$0xff] %vm4498, %v4563
      %4605 = vst.msk [vmem:[%s210 + $0xb8] sm:$0xff] %vm4498, %v4564
      %4606 = vst.msk [vmem:[%s210 + $0xc0] sm:$0xff] %vm4498, %v4565
      %4607 = vst.msk [vmem:[%s210 + $0xc8] sm:$0xff] %vm4498, %v4566
      %4608 = vst.msk [vmem:[%s210 + $0xd0] sm:$0xff] %vm4498, %v4567
      %4609 = vst.msk [vmem:[%s210 + $0xd8] sm:$0xff] %vm4498, %v4568
      %4610 = vst.msk [vmem:[%s210 + $0xe0] sm:$0xff] %vm4498, %v4569
      %4611 = vst.msk [vmem:[%s210 + $0xe8] sm:$0xff] %vm4498, %v4570
      %4612 = vst.msk [vmem:[%s210 + $0xf0] sm:$0xff] %vm4498, %v4571
      %4613 = vst.msk [vmem:[%s210 + $0xf8] sm:$0xff] %vm4498, %v4572
      %4614 = vst.msk [vmem:[%s210 + $0x100] sm:$0xff] %vm4498, %v4573
      %4615 = vst.msk [vmem:[%s210 + $0x108] sm:$0xff] %vm4498, %v4574
      %4616 = vst.msk [vmem:[%s210 + $0x110] sm:$0xff] %vm4498, %v4575
      %4617 = vst.msk [vmem:[%s210 + $0x118] sm:$0xff] %vm4498, %v4576
      %4618 = vst.msk [vmem:[%s210 + $0x120] sm:$0xff] %vm4498, %v4577
      %4619 = vst.msk [vmem:[%s210 + $0x128] sm:$0xff] %vm4498, %v4578
      %4620 = vst.msk [vmem:[%s210 + $0x130] sm:$0xff] %vm4498, %v4579
      %4621 = vst.msk [vmem:[%s210 + $0x138] sm:$0xff] %vm4498, %v4580
      %4622 = vst.msk [vmem:[%s210 + $0x140] sm:$0xf] %vm4539, %v4581
      %p4623 = scmp.lt.s32.totalorder %s16, 1
      %s4624 = scalar_select %p4623, %s16, 1
      %s4625 = smul.addr %s4624, 41
      %s4626 = smul.addr %s4625, 8
      %s4627 = scalar_lea.vmem %s3, %s4626
      %p4628 = scmp.lt.s32.totalorder %s16, 1
      %s4629 = scalar_select %p4628, %s16, 1
      %s4630 = smul.addr %s4629, 41
      %s4631 = smul.addr %s4630, 8
      %s4632 = scalar_lea.vmem %s4, %s4631
      // Predicated region
      $region33: #{tpu_custom_call.1} parent=31 // pred_check
        %p4633 = pneg %p102
      $region34: #{tpu_custom_call.1} parent=31 // pred_check_branch
        %4635 = sbr.rel (%p4633) target = $region36
      $region35: #{tpu_custom_call.1} parent=31 // pred_region
        _
      $region36: #{tpu_custom_call.1} parent=31 // pred_fallthru
        _
      // Predicated region
      $region37: #{tpu_custom_call.1} parent=31 // pred_check
        %p4636 = pneg %p128
      $region38: #{tpu_custom_call.1} parent=31 // pred_check_branch
        %4638 = sbr.rel (%p4636) target = $region40
      $region39: #{tpu_custom_call.1} parent=31 // pred_region
        _
      $region40: #{tpu_custom_call.1} parent=31 // pred_fallthru
        _
    $region32: #{tpu_custom_call.1} parent=5 // pred_fallthru
      _
    %p4639 = scmp.le.s32.totalorder 2, %s11
    // Predicated region
    $region41: #{tpu_custom_call.1} parent=5 // pred_check
      %p4640 = pneg %p4639
    $region42: #{tpu_custom_call.1} parent=5 // pred_check_branch
      %4642 = sbr.rel (%p4640) target = $region44
    $region43: #{tpu_custom_call.1} parent=5 // pred_region
      %s4643 = ssub.s32 %s11, 2
      // Predicated region
      $region45: #{tpu_custom_call.1} parent=43 // pred_check
        %p4644 = pneg %p108
      $region46: #{tpu_custom_call.1} parent=43 // pred_check_branch
        %4646 = sbr.rel (%p4644) target = $region48
      $region47: #{tpu_custom_call.1} parent=43 // pred_region
        %p4647 = scmp.lt.s32.totalorder %s17, 1
        %s4648 = scalar_select %p4647, %s17, 1
        %s4649 = smul.addr %s4648, 41
        %s4650 = smul.addr %s4649, 8
        %s4651 = scalar_lea.vmem %s3, %s4650
      $region48: #{tpu_custom_call.1} parent=43 // pred_fallthru
        _
      // Predicated region
      $region49: #{tpu_custom_call.1} parent=43 // pred_check
        %p4652 = pneg %p134
      $region50: #{tpu_custom_call.1} parent=43 // pred_check_branch
        %4654 = sbr.rel (%p4652) target = $region52
      $region51: #{tpu_custom_call.1} parent=43 // pred_region
        %p4655 = scmp.lt.s32.totalorder %s17, 1
        %s4656 = scalar_select %p4655, %s17, 1
        %s4657 = smul.addr %s4656, 41
        %s4658 = smul.addr %s4657, 8
        %s4659 = scalar_lea.vmem %s4, %s4658
      $region52: #{tpu_custom_call.1} parent=43 // pred_fallthru
        _
    $region44: #{tpu_custom_call.1} parent=5 // pred_fallthru
      _
  $region6: #{tpu_custom_call.1} parent=0 // loop_footer
    %s15 = sadd.s32 1, %s11
  $region7: #{tpu_custom_call.1} parent=0 // loop_footer_branch
    %10 = sbr.rel target = $region3
  $region8: #{tpu_custom_call.1} parent=0 // loop_exit
    _

</llo_original>
